<compile_context>
chip_gen: v6e
topology: v6e:2x2x1
jax: 0.10.0
libtpu: 0.0.40
codegen_flags: <defaults>
</compile_context>

<pallas_src>
import math
from functools import partial

import jax
import jax.numpy as jnp
from jax.experimental import pallas as pl
from jax.experimental.pallas import tpu as pltpu

# --------------------------------------------------------------------------
# config
# --------------------------------------------------------------------------

CFG = dict(
    vocab_size=99,
    hidden_size=128,
    num_hidden_layers=2,
    num_attention_heads=4,
    intermediate_size=256,
    max_position_embeddings=32,
    type_vocab_size=2,
    initializer_range=0.02,
)

HEAD_PAD = 128  # lane-dense padded width for the fused bio(3)+cls(5) heads


# --------------------------------------------------------------------------
# fused whole-model kernel
# --------------------------------------------------------------------------

def _gelu_tanh(x):
    # TODO(synk): reference BERT uses the exact erf-based GELU; erf lowering
    # inside Mosaic is not guaranteed, so the tanh approximation (EUP) is used.
    c = math.sqrt(2.0 / math.pi)
    return 0.5 * x * (1.0 + jnp.tanh(c * (x + 0.044715 * x * x * x)))


def _bert_fused_kernel(num_heads,
                       emb_ref, mask_ref, emb_g_ref, emb_b_ref,
                       wqkv_ref, bqkv_ref, wo_ref, bo_ref,
                       ln1_g_ref, ln1_b_ref,
                       wi_ref, bi_ref, wo2_ref, bo2_ref,
                       ln2_g_ref, ln2_b_ref,
                       wh_ref, bh_ref,
                       seq_ref, logits_ref):
    """One grid step = one batch element.  All layers run in-VMEM."""
    S, H = emb_ref.shape                 # (seq, hidden) — batch dim is squeezed
    L = wqkv_ref.shape[0]
    D = H // num_heads

    def layernorm(x, g, b):
        # BERTLayerNorm, variance_epsilon = 1e-12
        u = jnp.mean(x, axis=-1, keepdims=True)
        var = jnp.mean(jnp.square(x - u), axis=-1, keepdims=True)
        return g * ((x - u) * jax.lax.rsqrt(var + 1e-12)) + b

    mask = mask_ref[...]                                         # (1, S) key bias
    x = layernorm(emb_ref[...], emb_g_ref[...], emb_b_ref[...])  # (S, H)

    for l in range(L):                                           # static unroll
        # --- self-attention: fused QKV projection (scale folded into Wq) ---
        qkv = jnp.dot(x, wqkv_ref[l],
                      preferred_element_type=jnp.float32) + bqkv_ref[l]  # (S, 3H)
        ctx = []
        for h in range(num_heads):
            q_h = qkv[:, h * D:(h + 1) * D]
            k_h = qkv[:, H + h * D:H + (h + 1) * D]
            v_h = qkv[:, 2 * H + h * D:2 * H + (h + 1) * D]
            s = jax.lax.dot_general(q_h, k_h, (((1,), (1,)), ((), ())),
                                    preferred_element_type=jnp.float32)  # (S, S)
            s = s + mask                                          # mask padded keys
            m = jnp.max(s, axis=-1, keepdims=True)
            p = jnp.exp(s - m)
            p = p * pl.reciprocal(jnp.sum(p, axis=-1, keepdims=True), approx=True)
            ctx.append(jnp.dot(p, v_h, preferred_element_type=jnp.float32))
        ctx = jnp.concatenate(ctx, axis=-1)                       # (S, H)

        attn = jnp.dot(ctx, wo_ref[l],
                       preferred_element_type=jnp.float32) + bo_ref[l]
        x = layernorm(attn + x, ln1_g_ref[l], ln1_b_ref[l])       # residual + LN

        # --- FFN with in-kernel GELU epilogue ---
        inter = jnp.dot(x, wi_ref[l],
                        preferred_element_type=jnp.float32) + bi_ref[l]
        inter = _gelu_tanh(inter)
        ffn = jnp.dot(inter, wo2_ref[l],
                      preferred_element_type=jnp.float32) + bo2_ref[l]
        x = layernorm(ffn + x, ln2_g_ref[l], ln2_b_ref[l])        # residual + LN

    # sequence_output + fused lane-dense bio/cls heads
    seq_ref[...] = x.astype(seq_ref.dtype)
    logits = jnp.dot(x, wh_ref[...],
                     preferred_element_type=jnp.float32) + bh_ref[...]
    logits_ref[...] = logits.astype(logits_ref.dtype)


def bert_joint_forward_pallas(params, input_ids, token_type_ids, attention_mask, cfg):
    """Runs the full BERT encoder + bio/cls heads in a single pallas_call.

    Returns (sequence_output [B,S,H], ae_logits [B,S,3], ac_logits [B,S,5]).
    """
    B, S = input_ids.shape
    H = cfg["hidden_size"]
    I = cfg["intermediate_size"]
    L = cfg["num_hidden_layers"]
    NH = cfg["num_attention_heads"]

    # BertEmbeddings gather (word + position + token-type) in glue.
    pos_ids = jnp.arange(S, dtype=jnp.int32)
    emb = (params["word_emb"][input_ids]
           + params["pos_emb"][pos_ids][None, :, :]
           + params["type_emb"][token_type_ids]).astype(jnp.float32)

    # extended attention mask: (1 - mask) * -10000, added to raw scores
    mask_bias = ((1.0 - attention_mask.astype(jnp.float32)) * -10000.0
                 ).reshape(B, 1, S)

    def full(shape):                      # whole tensor resident in VMEM
        return pl.BlockSpec(shape, lambda b: (0,) * len(shape))

    def per_batch(shape):                 # one batch element per grid step
        return pl.BlockSpec((pl.Squeezed(),) + shape,
                            lambda b: (b,) + (0,) * len(shape))

    seq_out, logits = pl.pallas_call(
        partial(_bert_fused_kernel, NH),
        out_shape=(jax.ShapeDtypeStruct((B, S, H), jnp.float32),
                   jax.ShapeDtypeStruct((B, S, HEAD_PAD), jnp.float32)),
        grid=(B,),
        in_specs=[
            per_batch((S, H)),            # summed embeddings
            per_batch((1, S)),            # additive mask bias
            full((1, H)), full((1, H)),   # embedding LayerNorm
            full((L, H, 3 * H)), full((L, 1, 3 * H)),   # fused QKV
            full((L, H, H)), full((L, 1, H)),           # attention output proj
            full((L, 1, H)), full((L, 1, H)),           # LN1
            full((L, H, I)), full((L, 1, I)),           # FFN in
            full((L, I, H)), full((L, 1, H)),           # FFN out
            full((L, 1, H)), full((L, 1, H)),           # LN2
            full((H, HEAD_PAD)), full((1, HEAD_PAD)),   # fused padded heads
        ],
        out_specs=(per_batch((S, H)), per_batch((S, HEAD_PAD))),
        compiler_params=pltpu.CompilerParams(
            dimension_semantics=("parallel",)),   # shard batch over v7x's 2 TCs
    )(emb, mask_bias,
      params["emb_ln_g"], params["emb_ln_b"],
      params["wqkv"], params["bqkv"], params["wo"], params["bo"],
      params["ln1_g"], params["ln1_b"],
      params["wi"], params["bi"], params["wo2"], params["bo2"],
      params["ln2_g"], params["ln2_b"],
      params["w_heads"], params["b_heads"])

    ae_logits = logits[..., 0:3]          # bio_affine
    ac_logits = logits[..., 3:8]          # cls_affine
    return seq_out, ae_logits, ac_logits


# --------------------------------------------------------------------------
# standalone cls_affine kernel (classify_inference on arbitrary sequence_input)
# --------------------------------------------------------------------------

def _cls_head_kernel(x_ref, w_ref, b_ref, o_ref):
    o_ref[...] = (jnp.dot(x_ref[...], w_ref[...],
                          preferred_element_type=jnp.float32)
                  + b_ref[...]).astype(o_ref.dtype)


def pallas_cls_head(sequence_input, w_heads, b_heads):
    B, S, H = sequence_input.shape
    M = B * S
    N = w_heads.shape[1]
    out = pl.pallas_call(
        _cls_head_kernel,
        out_shape=jax.ShapeDtypeStruct((M, N), jnp.float32),
        grid=(1,),
        in_specs=[pl.BlockSpec((M, H), lambda i: (0, 0)),
                  pl.BlockSpec((H, N), lambda i: (0, 0)),
                  pl.BlockSpec((1, N), lambda i: (0, 0))],
        out_specs=pl.BlockSpec((M, N), lambda i: (0, 0)),
    )(sequence_input.reshape(M, H).astype(jnp.float32), w_heads, b_heads)
    return out.reshape(B, S, N)


# --------------------------------------------------------------------------
# parameters
# --------------------------------------------------------------------------

def init_params(key, cfg):
    H = cfg["hidden_size"]
    I = cfg["intermediate_size"]
    L = cfg["num_hidden_layers"]
    NH = cfg["num_attention_heads"]
    D = H // NH
    std = cfg["initializer_range"]
    keys = iter(jax.random.split(key, 128))

    def nrm(shape):
        return (std * jax.random.normal(next(keys), shape)).astype(jnp.float32)

    def zeros(shape):
        return jnp.zeros(shape, jnp.float32)

    params = {
        "word_emb": nrm((cfg["vocab_size"], H)),
        "pos_emb": nrm((cfg["max_position_embeddings"], H)),
        "type_emb": nrm((cfg["type_vocab_size"], H)),
        # this module's init_weights normal-initializes BERTLayerNorm gamma/beta
        "emb_ln_g": nrm((1, H)),
        "emb_ln_b": nrm((1, H)),
    }

    scale = 1.0 / math.sqrt(D)            # attention scale folded into Wq / bq
    stacks = {k: [] for k in ("wqkv", "bqkv", "wo", "bo", "ln1_g", "ln1_b",
                              "wi", "bi", "wo2", "bo2", "ln2_g", "ln2_b")}
    for _ in range(L):
        wq, wk, wv = nrm((H, H)), nrm((H, H)), nrm((H, H))
        bq = zeros((H,))
        stacks["wqkv"].append(jnp.concatenate([wq * scale, wk, wv], axis=1))
        stacks["bqkv"].append(jnp.concatenate([bq * scale, zeros((H,)), zeros((H,))]
                                              ).reshape(1, 3 * H))
        stacks["wo"].append(nrm((H, H)));   stacks["bo"].append(zeros((1, H)))
        stacks["ln1_g"].append(nrm((1, H))); stacks["ln1_b"].append(nrm((1, H)))
        stacks["wi"].append(nrm((H, I)));   stacks["bi"].append(zeros((1, I)))
        stacks["wo2"].append(nrm((I, H)));  stacks["bo2"].append(zeros((1, H)))
        stacks["ln2_g"].append(nrm((1, H))); stacks["ln2_b"].append(nrm((1, H)))
    for k, v in stacks.items():
        params[k] = jnp.stack(v)           # leading layer dim

    # bio_affine (H->3) and cls_affine (H->5), fused + zero-padded to a
    # lane-dense (H, 128) matmul: cols 0:3 = BIO logits, 3:8 = class logits.
    w_bio, w_cls = nrm((H, 3)), nrm((H, 5))
    w_heads = jnp.zeros((H, HEAD_PAD), jnp.float32)
    w_heads = w_heads.at[:, 0:3].set(w_bio).at[:, 3:8].set(w_cls)
    params["w_heads"] = w_heads
    params["b_heads"] = jnp.zeros((1, HEAD_PAD), jnp.float32)
    return params


# --------------------------------------------------------------------------
# model forward (matches the PyTorch module's mode dispatch)
# --------------------------------------------------------------------------

def _masked_mean_ce(logits, labels, mask):
    """CrossEntropyLoss(reduction='none') + attention-mask weighted mean."""
    C = logits.shape[-1]
    flat_logits = logits.reshape(-1, C)
    flat_labels = labels.reshape(-1)
    flat_mask = mask.reshape(-1).astype(flat_logits.dtype)
    logz = jax.scipy.special.logsumexp(flat_logits, axis=-1)
    picked = jnp.take_along_axis(flat_logits, flat_labels[:, None], axis=-1)[:, 0]
    ce = logz - picked
    return jnp.sum(flat_mask * ce) / jnp.sum(flat_mask)


def forward(params, mode, attention_mask, input_ids=None, token_type_ids=None,
            bio_labels=None, polarity_positions=None, sequence_input=None,
            cfg=CFG):
    if mode == "train":
        assert input_ids is not None and token_type_ids is not None
        assert bio_labels is not None and polarity_positions is not None
        _, ae_logits, ac_logits = bert_joint_forward_pallas(
            params, input_ids, token_type_ids, attention_mask, cfg)
        ae_loss = _masked_mean_ce(ae_logits, bio_labels, attention_mask)
        # TODO(synk): use_crf=True (ConditionalRandomField forward/Viterbi) not translated.
        ac_loss = _masked_mean_ce(ac_logits, polarity_positions, attention_mask)
        return ae_loss + ac_loss
    elif mode == "extract_inference":
        assert input_ids is not None and token_type_ids is not None
        seq_out, ae_logits, _ = bert_joint_forward_pallas(
            params, input_ids, token_type_ids, attention_mask, cfg)
        return ae_logits, seq_out
    elif mode == "classify_inference":
        assert sequence_input is not None
        ac = pallas_cls_head(sequence_input, params["w_heads"], params["b_heads"])
        return ac[..., 3:8]
    else:
        raise ValueError(f"unknown mode: {mode}")


# --------------------------------------------------------------------------
# main
# --------------------------------------------------------------------------

if __name__ == "__main__":
    key = jax.random.PRNGKey(0)
    pkey, dkey = jax.random.split(key)
    params = init_params(pkey, CFG)

    B, S = 2, 16
    k1, k2, k3 = jax.random.split(dkey, 3)
    input_ids = jax.random.randint(k1, (B, S), 0, CFG["vocab_size"], dtype=jnp.int32)
    token_type_ids = jnp.zeros((B, S), jnp.int32).at[:, S // 2:].set(1)
    attention_mask = jnp.ones((B, S), jnp.int32).at[1, S - 4:].set(0)

    # extract_inference: (ae_logits, sequence_output)
    ae_logits, seq_out = forward(params, "extract_inference", attention_mask,
                                 input_ids=input_ids, token_type_ids=token_type_ids)
    jax.block_until_ready((ae_logits, seq_out))
    assert ae_logits.shape == (B, S, 3) and ae_logits.dtype == jnp.float32
    assert seq_out.shape == (B, S, CFG["hidden_size"])
    assert bool(jnp.all(jnp.isfinite(ae_logits))) and bool(jnp.all(jnp.isfinite(seq_out)))

    # classify_inference on the produced sequence output
    ac_logits = forward(params, "classify_inference", attention_mask,
                        sequence_input=seq_out)
    jax.block_until_ready(ac_logits)
    assert ac_logits.shape == (B, S, 5)
    assert bool(jnp.all(jnp.isfinite(ac_logits)))

    # train: masked joint cross-entropy loss (scalar)
    bio_labels = jax.random.randint(k2, (B, S), 0, 3, dtype=jnp.int32)
    polarity_positions = jax.random.randint(k3, (B, S), 0, 5, dtype=jnp.int32)
    loss = forward(params, "train", attention_mask, input_ids=input_ids,
                   token_type_ids=token_type_ids, bio_labels=bio_labels,
                   polarity_positions=polarity_positions)
    loss = jax.block_until_ready(loss)
    assert loss.shape == () and bool(jnp.isfinite(loss))

    print("KERNEL_OK")
</pallas_src>

<mosaic_0001>
module attributes {stable_mosaic.version = 11 : i64} {
  func.func @_bert_fused_kernel(%arg0: i32, %arg1: memref<1x16x128xf32, #tpu.memory_space<vmem>>, %arg2: memref<1x1x16xf32, #tpu.memory_space<vmem>>, %arg3: memref<1x128xf32, #tpu.memory_space<vmem>>, %arg4: memref<1x128xf32, #tpu.memory_space<vmem>>, %arg5: memref<2x128x384xf32, #tpu.memory_space<vmem>>, %arg6: memref<2x1x384xf32, #tpu.memory_space<vmem>>, %arg7: memref<2x128x128xf32, #tpu.memory_space<vmem>>, %arg8: memref<2x1x128xf32, #tpu.memory_space<vmem>>, %arg9: memref<2x1x128xf32, #tpu.memory_space<vmem>>, %arg10: memref<2x1x128xf32, #tpu.memory_space<vmem>>, %arg11: memref<2x128x256xf32, #tpu.memory_space<vmem>>, %arg12: memref<2x1x256xf32, #tpu.memory_space<vmem>>, %arg13: memref<2x256x128xf32, #tpu.memory_space<vmem>>, %arg14: memref<2x1x128xf32, #tpu.memory_space<vmem>>, %arg15: memref<2x1x128xf32, #tpu.memory_space<vmem>>, %arg16: memref<2x1x128xf32, #tpu.memory_space<vmem>>, %arg17: memref<128x128xf32, #tpu.memory_space<vmem>>, %arg18: memref<1x128xf32, #tpu.memory_space<vmem>>, %arg19: memref<1x16x128xf32, #tpu.memory_space<vmem>>, %arg20: memref<1x16x128xf32, #tpu.memory_space<vmem>>) attributes {dimension_semantics = [#tpu.dimension_semantics<parallel>], iteration_bounds = array<i64: 2>, scalar_prefetch = 0 : i64, scratch_operands = 0 : i64, tpu.core_type = #tpu.core_type<tc>, window_params = [{transform_indices = @transform_0, window_bounds = array<i64: 1, 16, 128>}, {transform_indices = @transform_1, window_bounds = array<i64: 1, 1, 16>}, {pipeline_mode = #tpu.pipeline_mode<synchronous>, transform_indices = @transform_2, window_bounds = array<i64: 1, 128>}, {pipeline_mode = #tpu.pipeline_mode<synchronous>, transform_indices = @transform_3, window_bounds = array<i64: 1, 128>}, {pipeline_mode = #tpu.pipeline_mode<synchronous>, transform_indices = @transform_4, window_bounds = array<i64: 2, 128, 384>}, {pipeline_mode = #tpu.pipeline_mode<synchronous>, transform_indices = @transform_5, window_bounds = array<i64: 2, 1, 384>}, {pipeline_mode = #tpu.pipeline_mode<synchronous>, transform_indices = @transform_6, window_bounds = array<i64: 2, 128, 128>}, {pipeline_mode = #tpu.pipeline_mode<synchronous>, transform_indices = @transform_7, window_bounds = array<i64: 2, 1, 128>}, {pipeline_mode = #tpu.pipeline_mode<synchronous>, transform_indices = @transform_8, window_bounds = array<i64: 2, 1, 128>}, {pipeline_mode = #tpu.pipeline_mode<synchronous>, transform_indices = @transform_9, window_bounds = array<i64: 2, 1, 128>}, {pipeline_mode = #tpu.pipeline_mode<synchronous>, transform_indices = @transform_10, window_bounds = array<i64: 2, 128, 256>}, {pipeline_mode = #tpu.pipeline_mode<synchronous>, transform_indices = @transform_11, window_bounds = array<i64: 2, 1, 256>}, {pipeline_mode = #tpu.pipeline_mode<synchronous>, transform_indices = @transform_12, window_bounds = array<i64: 2, 256, 128>}, {pipeline_mode = #tpu.pipeline_mode<synchronous>, transform_indices = @transform_13, window_bounds = array<i64: 2, 1, 128>}, {pipeline_mode = #tpu.pipeline_mode<synchronous>, transform_indices = @transform_14, window_bounds = array<i64: 2, 1, 128>}, {pipeline_mode = #tpu.pipeline_mode<synchronous>, transform_indices = @transform_15, window_bounds = array<i64: 2, 1, 128>}, {pipeline_mode = #tpu.pipeline_mode<synchronous>, transform_indices = @transform_16, window_bounds = array<i64: 128, 128>}, {pipeline_mode = #tpu.pipeline_mode<synchronous>, transform_indices = @transform_17, window_bounds = array<i64: 1, 128>}, {transform_indices = @transform_18, window_bounds = array<i64: 1, 16, 128>}, {transform_indices = @transform_19, window_bounds = array<i64: 1, 16, 128>}]} {
    %c0 = arith.constant 0 : index
    %c0_0 = arith.constant 0 : index
    %c0_1 = arith.constant 0 : index
    %0 = vector.load %arg2[%c0, %c0_0, %c0_1] : memref<1x1x16xf32, #tpu.memory_space<vmem>>, vector<1x1x16xf32>
    %1 = vector.shape_cast %0 : vector<1x1x16xf32> to vector<1x16xf32>
    %c0_2 = arith.constant 0 : index
    %c0_3 = arith.constant 0 : index
    %c0_4 = arith.constant 0 : index
    %2 = vector.load %arg1[%c0_2, %c0_3, %c0_4] : memref<1x16x128xf32, #tpu.memory_space<vmem>>, vector<1x16x128xf32>
    %3 = vector.shape_cast %2 : vector<1x16x128xf32> to vector<16x128xf32>
    %c0_5 = arith.constant 0 : index
    %c0_6 = arith.constant 0 : index
    %4 = vector.load %arg3[%c0_5, %c0_6] : memref<1x128xf32, #tpu.memory_space<vmem>>, vector<1x128xf32>
    %c0_7 = arith.constant 0 : index
    %c0_8 = arith.constant 0 : index
    %5 = vector.load %arg4[%c0_7, %c0_8] : memref<1x128xf32, #tpu.memory_space<vmem>>, vector<1x128xf32>
    %cst = arith.constant dense<0.000000e+00> : vector<16xf32>
    %6 = vector.multi_reduction <add>, %3, %cst [1] : vector<16x128xf32> to vector<16xf32>
    %7 = vector.shape_cast %6 : vector<16xf32> to vector<16x1xf32>
    %cst_9 = arith.constant 1.280000e+02 : f32
    %8 = vector.broadcast %cst_9 : f32 to vector<16x1xf32>
    %9 = arith.divf %7, %8 : vector<16x1xf32>
    %10 = vector.broadcast %9 : vector<16x1xf32> to vector<16x128xf32>
    %11 = arith.subf %3, %10 : vector<16x128xf32>
    %12 = arith.mulf %11, %11 : vector<16x128xf32>
    %cst_10 = arith.constant dense<0.000000e+00> : vector<16xf32>
    %13 = vector.multi_reduction <add>, %12, %cst_10 [1] : vector<16x128xf32> to vector<16xf32>
    %14 = vector.shape_cast %13 : vector<16xf32> to vector<16x1xf32>
    %cst_11 = arith.constant 1.280000e+02 : f32
    %15 = vector.broadcast %cst_11 : f32 to vector<16x1xf32>
    %16 = arith.divf %14, %15 : vector<16x1xf32>
    %17 = vector.broadcast %9 : vector<16x1xf32> to vector<16x128xf32>
    %18 = arith.subf %3, %17 : vector<16x128xf32>
    %cst_12 = arith.constant 9.99999996E-13 : f32
    %19 = vector.broadcast %cst_12 : f32 to vector<16x1xf32>
    %20 = arith.addf %16, %19 : vector<16x1xf32>
    %21 = math.rsqrt %20 : vector<16x1xf32>
    %22 = vector.broadcast %21 : vector<16x1xf32> to vector<16x128xf32>
    %23 = arith.mulf %18, %22 : vector<16x128xf32>
    %24 = vector.broadcast %4 : vector<1x128xf32> to vector<16x128xf32>
    %25 = arith.mulf %24, %23 : vector<16x128xf32>
    %26 = vector.broadcast %5 : vector<1x128xf32> to vector<16x128xf32>
    %27 = arith.addf %25, %26 : vector<16x128xf32>
    %c0_13 = arith.constant 0 : index
    %c0_14 = arith.constant 0 : index
    %c0_15 = arith.constant 0 : index
    %28 = vector.load %arg5[%c0_13, %c0_14, %c0_15] : memref<2x128x384xf32, #tpu.memory_space<vmem>>, vector<1x128x384xf32>
    %29 = vector.shape_cast %28 : vector<1x128x384xf32> to vector<128x384xf32>
    %cst_16 = arith.constant dense<0.000000e+00> : vector<16x384xf32>
    %30 = tpu.matmul %27, %29, %cst_16 {dimension_numbers = #tpu.dot_dimension_numbers<[1], [0], [0], [1], [0, 0, 1, 1], [], []>} : vector<16x128xf32>, vector<128x384xf32>, vector<16x384xf32> -> vector<16x384xf32>
    %c0_17 = arith.constant 0 : index
    %c0_18 = arith.constant 0 : index
    %c0_19 = arith.constant 0 : index
    %31 = vector.load %arg6[%c0_17, %c0_18, %c0_19] : memref<2x1x384xf32, #tpu.memory_space<vmem>>, vector<1x1x384xf32>
    %32 = vector.shape_cast %31 : vector<1x1x384xf32> to vector<1x384xf32>
    %33 = vector.broadcast %32 : vector<1x384xf32> to vector<16x384xf32>
    %34 = arith.addf %30, %33 : vector<16x384xf32>
    %35 = vector.extract_strided_slice %34 {offsets = [0, 0], sizes = [16, 32], strides = [1, 1]} : vector<16x384xf32> to vector<16x32xf32>
    %36 = vector.extract_strided_slice %34 {offsets = [0, 128], sizes = [16, 32], strides = [1, 1]} : vector<16x384xf32> to vector<16x32xf32>
    %37 = vector.extract_strided_slice %34 {offsets = [0, 256], sizes = [16, 32], strides = [1, 1]} : vector<16x384xf32> to vector<16x32xf32>
    %cst_20 = arith.constant dense<0.000000e+00> : vector<16x16xf32>
    %38 = tpu.matmul %35, %36, %cst_20 {dimension_numbers = #tpu.dot_dimension_numbers<[1], [1], [0], [0], [0, 0, 1, 0], [], []>} : vector<16x32xf32>, vector<16x32xf32>, vector<16x16xf32> -> vector<16x16xf32>
    %39 = vector.broadcast %1 : vector<1x16xf32> to vector<16x16xf32>
    %40 = arith.addf %38, %39 : vector<16x16xf32>
    %cst_21 = arith.constant dense<0xFF800000> : vector<16xf32>
    %41 = vector.multi_reduction <maximumf>, %40, %cst_21 [1] : vector<16x16xf32> to vector<16xf32>
    %42 = vector.shape_cast %41 : vector<16xf32> to vector<16x1xf32>
    %43 = vector.broadcast %42 : vector<16x1xf32> to vector<16x16xf32>
    %44 = arith.subf %40, %43 : vector<16x16xf32>
    %45 = math.exp %44 : vector<16x16xf32>
    %cst_22 = arith.constant dense<0.000000e+00> : vector<16xf32>
    %46 = vector.multi_reduction <add>, %45, %cst_22 [1] : vector<16x16xf32> to vector<16xf32>
    %47 = vector.shape_cast %46 : vector<16xf32> to vector<16x1xf32>
    %48 = tpu.reciprocal %47 {approx = true} : vector<16x1xf32> -> vector<16x1xf32>
    %49 = vector.broadcast %48 : vector<16x1xf32> to vector<16x16xf32>
    %50 = arith.mulf %45, %49 : vector<16x16xf32>
    %cst_23 = arith.constant dense<0.000000e+00> : vector<16x32xf32>
    %51 = tpu.matmul %50, %37, %cst_23 {dimension_numbers = #tpu.dot_dimension_numbers<[1], [0], [0], [1], [0, 0, 1, 1], [], []>} : vector<16x16xf32>, vector<16x32xf32>, vector<16x32xf32> -> vector<16x32xf32>
    %52 = vector.extract_strided_slice %34 {offsets = [0, 32], sizes = [16, 32], strides = [1, 1]} : vector<16x384xf32> to vector<16x32xf32>
    %53 = vector.extract_strided_slice %34 {offsets = [0, 160], sizes = [16, 32], strides = [1, 1]} : vector<16x384xf32> to vector<16x32xf32>
    %54 = vector.extract_strided_slice %34 {offsets = [0, 288], sizes = [16, 32], strides = [1, 1]} : vector<16x384xf32> to vector<16x32xf32>
    %cst_24 = arith.constant dense<0.000000e+00> : vector<16x16xf32>
    %55 = tpu.matmul %52, %53, %cst_24 {dimension_numbers = #tpu.dot_dimension_numbers<[1], [1], [0], [0], [0, 0, 1, 0], [], []>} : vector<16x32xf32>, vector<16x32xf32>, vector<16x16xf32> -> vector<16x16xf32>
    %56 = vector.broadcast %1 : vector<1x16xf32> to vector<16x16xf32>
    %57 = arith.addf %55, %56 : vector<16x16xf32>
    %cst_25 = arith.constant dense<0xFF800000> : vector<16xf32>
    %58 = vector.multi_reduction <maximumf>, %57, %cst_25 [1] : vector<16x16xf32> to vector<16xf32>
    %59 = vector.shape_cast %58 : vector<16xf32> to vector<16x1xf32>
    %60 = vector.broadcast %59 : vector<16x1xf32> to vector<16x16xf32>
    %61 = arith.subf %57, %60 : vector<16x16xf32>
    %62 = math.exp %61 : vector<16x16xf32>
    %cst_26 = arith.constant dense<0.000000e+00> : vector<16xf32>
    %63 = vector.multi_reduction <add>, %62, %cst_26 [1] : vector<16x16xf32> to vector<16xf32>
    %64 = vector.shape_cast %63 : vector<16xf32> to vector<16x1xf32>
    %65 = tpu.reciprocal %64 {approx = true} : vector<16x1xf32> -> vector<16x1xf32>
    %66 = vector.broadcast %65 : vector<16x1xf32> to vector<16x16xf32>
    %67 = arith.mulf %62, %66 : vector<16x16xf32>
    %cst_27 = arith.constant dense<0.000000e+00> : vector<16x32xf32>
    %68 = tpu.matmul %67, %54, %cst_27 {dimension_numbers = #tpu.dot_dimension_numbers<[1], [0], [0], [1], [0, 0, 1, 1], [], []>} : vector<16x16xf32>, vector<16x32xf32>, vector<16x32xf32> -> vector<16x32xf32>
    %69 = vector.extract_strided_slice %34 {offsets = [0, 64], sizes = [16, 32], strides = [1, 1]} : vector<16x384xf32> to vector<16x32xf32>
    %70 = vector.extract_strided_slice %34 {offsets = [0, 192], sizes = [16, 32], strides = [1, 1]} : vector<16x384xf32> to vector<16x32xf32>
    %71 = vector.extract_strided_slice %34 {offsets = [0, 320], sizes = [16, 32], strides = [1, 1]} : vector<16x384xf32> to vector<16x32xf32>
    %cst_28 = arith.constant dense<0.000000e+00> : vector<16x16xf32>
    %72 = tpu.matmul %69, %70, %cst_28 {dimension_numbers = #tpu.dot_dimension_numbers<[1], [1], [0], [0], [0, 0, 1, 0], [], []>} : vector<16x32xf32>, vector<16x32xf32>, vector<16x16xf32> -> vector<16x16xf32>
    %73 = vector.broadcast %1 : vector<1x16xf32> to vector<16x16xf32>
    %74 = arith.addf %72, %73 : vector<16x16xf32>
    %cst_29 = arith.constant dense<0xFF800000> : vector<16xf32>
    %75 = vector.multi_reduction <maximumf>, %74, %cst_29 [1] : vector<16x16xf32> to vector<16xf32>
    %76 = vector.shape_cast %75 : vector<16xf32> to vector<16x1xf32>
    %77 = vector.broadcast %76 : vector<16x1xf32> to vector<16x16xf32>
    %78 = arith.subf %74, %77 : vector<16x16xf32>
    %79 = math.exp %78 : vector<16x16xf32>
    %cst_30 = arith.constant dense<0.000000e+00> : vector<16xf32>
    %80 = vector.multi_reduction <add>, %79, %cst_30 [1] : vector<16x16xf32> to vector<16xf32>
    %81 = vector.shape_cast %80 : vector<16xf32> to vector<16x1xf32>
    %82 = tpu.reciprocal %81 {approx = true} : vector<16x1xf32> -> vector<16x1xf32>
    %83 = vector.broadcast %82 : vector<16x1xf32> to vector<16x16xf32>
    %84 = arith.mulf %79, %83 : vector<16x16xf32>
    %cst_31 = arith.constant dense<0.000000e+00> : vector<16x32xf32>
    %85 = tpu.matmul %84, %71, %cst_31 {dimension_numbers = #tpu.dot_dimension_numbers<[1], [0], [0], [1], [0, 0, 1, 1], [], []>} : vector<16x16xf32>, vector<16x32xf32>, vector<16x32xf32> -> vector<16x32xf32>
    %86 = vector.extract_strided_slice %34 {offsets = [0, 96], sizes = [16, 32], strides = [1, 1]} : vector<16x384xf32> to vector<16x32xf32>
    %87 = vector.extract_strided_slice %34 {offsets = [0, 224], sizes = [16, 32], strides = [1, 1]} : vector<16x384xf32> to vector<16x32xf32>
    %88 = vector.extract_strided_slice %34 {offsets = [0, 352], sizes = [16, 32], strides = [1, 1]} : vector<16x384xf32> to vector<16x32xf32>
    %cst_32 = arith.constant dense<0.000000e+00> : vector<16x16xf32>
    %89 = tpu.matmul %86, %87, %cst_32 {dimension_numbers = #tpu.dot_dimension_numbers<[1], [1], [0], [0], [0, 0, 1, 0], [], []>} : vector<16x32xf32>, vector<16x32xf32>, vector<16x16xf32> -> vector<16x16xf32>
    %90 = vector.broadcast %1 : vector<1x16xf32> to vector<16x16xf32>
    %91 = arith.addf %89, %90 : vector<16x16xf32>
    %cst_33 = arith.constant dense<0xFF800000> : vector<16xf32>
    %92 = vector.multi_reduction <maximumf>, %91, %cst_33 [1] : vector<16x16xf32> to vector<16xf32>
    %93 = vector.shape_cast %92 : vector<16xf32> to vector<16x1xf32>
    %94 = vector.broadcast %93 : vector<16x1xf32> to vector<16x16xf32>
    %95 = arith.subf %91, %94 : vector<16x16xf32>
    %96 = math.exp %95 : vector<16x16xf32>
    %cst_34 = arith.constant dense<0.000000e+00> : vector<16xf32>
    %97 = vector.multi_reduction <add>, %96, %cst_34 [1] : vector<16x16xf32> to vector<16xf32>
    %98 = vector.shape_cast %97 : vector<16xf32> to vector<16x1xf32>
    %99 = tpu.reciprocal %98 {approx = true} : vector<16x1xf32> -> vector<16x1xf32>
    %100 = vector.broadcast %99 : vector<16x1xf32> to vector<16x16xf32>
    %101 = arith.mulf %96, %100 : vector<16x16xf32>
    %cst_35 = arith.constant dense<0.000000e+00> : vector<16x32xf32>
    %102 = tpu.matmul %101, %88, %cst_35 {dimension_numbers = #tpu.dot_dimension_numbers<[1], [0], [0], [1], [0, 0, 1, 1], [], []>} : vector<16x16xf32>, vector<16x32xf32>, vector<16x32xf32> -> vector<16x32xf32>
    %103 = tpu.concatenate %51, %68, %85, %102 in 1 : vector<16x32xf32>, vector<16x32xf32>, vector<16x32xf32>, vector<16x32xf32> -> vector<16x128xf32>
    %c0_36 = arith.constant 0 : index
    %c0_37 = arith.constant 0 : index
    %c0_38 = arith.constant 0 : index
    %104 = vector.load %arg7[%c0_36, %c0_37, %c0_38] : memref<2x128x128xf32, #tpu.memory_space<vmem>>, vector<1x128x128xf32>
    %105 = vector.shape_cast %104 : vector<1x128x128xf32> to vector<128x128xf32>
    %cst_39 = arith.constant dense<0.000000e+00> : vector<16x128xf32>
    %106 = tpu.matmul %103, %105, %cst_39 {dimension_numbers = #tpu.dot_dimension_numbers<[1], [0], [0], [1], [0, 0, 1, 1], [], []>} : vector<16x128xf32>, vector<128x128xf32>, vector<16x128xf32> -> vector<16x128xf32>
    %c0_40 = arith.constant 0 : index
    %c0_41 = arith.constant 0 : index
    %c0_42 = arith.constant 0 : index
    %107 = vector.load %arg8[%c0_40, %c0_41, %c0_42] : memref<2x1x128xf32, #tpu.memory_space<vmem>>, vector<1x1x128xf32>
    %108 = vector.shape_cast %107 : vector<1x1x128xf32> to vector<1x128xf32>
    %109 = vector.broadcast %108 : vector<1x128xf32> to vector<16x128xf32>
    %110 = arith.addf %106, %109 : vector<16x128xf32>
    %111 = arith.addf %110, %27 : vector<16x128xf32>
    %c0_43 = arith.constant 0 : index
    %c0_44 = arith.constant 0 : index
    %c0_45 = arith.constant 0 : index
    %112 = vector.load %arg9[%c0_43, %c0_44, %c0_45] : memref<2x1x128xf32, #tpu.memory_space<vmem>>, vector<1x1x128xf32>
    %113 = vector.shape_cast %112 : vector<1x1x128xf32> to vector<1x128xf32>
    %c0_46 = arith.constant 0 : index
    %c0_47 = arith.constant 0 : index
    %c0_48 = arith.constant 0 : index
    %114 = vector.load %arg10[%c0_46, %c0_47, %c0_48] : memref<2x1x128xf32, #tpu.memory_space<vmem>>, vector<1x1x128xf32>
    %115 = vector.shape_cast %114 : vector<1x1x128xf32> to vector<1x128xf32>
    %cst_49 = arith.constant dense<0.000000e+00> : vector<16xf32>
    %116 = vector.multi_reduction <add>, %111, %cst_49 [1] : vector<16x128xf32> to vector<16xf32>
    %117 = vector.shape_cast %116 : vector<16xf32> to vector<16x1xf32>
    %cst_50 = arith.constant 1.280000e+02 : f32
    %118 = vector.broadcast %cst_50 : f32 to vector<16x1xf32>
    %119 = arith.divf %117, %118 : vector<16x1xf32>
    %120 = vector.broadcast %119 : vector<16x1xf32> to vector<16x128xf32>
    %121 = arith.subf %111, %120 : vector<16x128xf32>
    %122 = arith.mulf %121, %121 : vector<16x128xf32>
    %cst_51 = arith.constant dense<0.000000e+00> : vector<16xf32>
    %123 = vector.multi_reduction <add>, %122, %cst_51 [1] : vector<16x128xf32> to vector<16xf32>
    %124 = vector.shape_cast %123 : vector<16xf32> to vector<16x1xf32>
    %cst_52 = arith.constant 1.280000e+02 : f32
    %125 = vector.broadcast %cst_52 : f32 to vector<16x1xf32>
    %126 = arith.divf %124, %125 : vector<16x1xf32>
    %127 = vector.broadcast %119 : vector<16x1xf32> to vector<16x128xf32>
    %128 = arith.subf %111, %127 : vector<16x128xf32>
    %cst_53 = arith.constant 9.99999996E-13 : f32
    %129 = vector.broadcast %cst_53 : f32 to vector<16x1xf32>
    %130 = arith.addf %126, %129 : vector<16x1xf32>
    %131 = math.rsqrt %130 : vector<16x1xf32>
    %132 = vector.broadcast %131 : vector<16x1xf32> to vector<16x128xf32>
    %133 = arith.mulf %128, %132 : vector<16x128xf32>
    %134 = vector.broadcast %113 : vector<1x128xf32> to vector<16x128xf32>
    %135 = arith.mulf %134, %133 : vector<16x128xf32>
    %136 = vector.broadcast %115 : vector<1x128xf32> to vector<16x128xf32>
    %137 = arith.addf %135, %136 : vector<16x128xf32>
    %c0_54 = arith.constant 0 : index
    %c0_55 = arith.constant 0 : index
    %c0_56 = arith.constant 0 : index
    %138 = vector.load %arg11[%c0_54, %c0_55, %c0_56] : memref<2x128x256xf32, #tpu.memory_space<vmem>>, vector<1x128x256xf32>
    %139 = vector.shape_cast %138 : vector<1x128x256xf32> to vector<128x256xf32>
    %cst_57 = arith.constant dense<0.000000e+00> : vector<16x256xf32>
    %140 = tpu.matmul %137, %139, %cst_57 {dimension_numbers = #tpu.dot_dimension_numbers<[1], [0], [0], [1], [0, 0, 1, 1], [], []>} : vector<16x128xf32>, vector<128x256xf32>, vector<16x256xf32> -> vector<16x256xf32>
    %c0_58 = arith.constant 0 : index
    %c0_59 = arith.constant 0 : index
    %c0_60 = arith.constant 0 : index
    %141 = vector.load %arg12[%c0_58, %c0_59, %c0_60] : memref<2x1x256xf32, #tpu.memory_space<vmem>>, vector<1x1x256xf32>
    %142 = vector.shape_cast %141 : vector<1x1x256xf32> to vector<1x256xf32>
    %143 = vector.broadcast %142 : vector<1x256xf32> to vector<16x256xf32>
    %144 = arith.addf %140, %143 : vector<16x256xf32>
    %cst_61 = arith.constant 5.000000e-01 : f32
    %145 = vector.broadcast %cst_61 : f32 to vector<16x256xf32>
    %146 = arith.mulf %145, %144 : vector<16x256xf32>
    %cst_62 = arith.constant 4.471500e-02 : f32
    %147 = vector.broadcast %cst_62 : f32 to vector<16x256xf32>
    %148 = arith.mulf %147, %144 : vector<16x256xf32>
    %149 = arith.mulf %148, %144 : vector<16x256xf32>
    %150 = arith.mulf %149, %144 : vector<16x256xf32>
    %151 = arith.addf %144, %150 : vector<16x256xf32>
    %cst_63 = arith.constant 0.797884583 : f32
    %152 = vector.broadcast %cst_63 : f32 to vector<16x256xf32>
    %153 = arith.mulf %152, %151 : vector<16x256xf32>
    %154 = math.tanh %153 : vector<16x256xf32>
    %cst_64 = arith.constant 1.000000e+00 : f32
    %155 = vector.broadcast %cst_64 : f32 to vector<16x256xf32>
    %156 = arith.addf %155, %154 : vector<16x256xf32>
    %157 = arith.mulf %146, %156 : vector<16x256xf32>
    %c0_65 = arith.constant 0 : index
    %c0_66 = arith.constant 0 : index
    %c0_67 = arith.constant 0 : index
    %158 = vector.load %arg13[%c0_65, %c0_66, %c0_67] : memref<2x256x128xf32, #tpu.memory_space<vmem>>, vector<1x256x128xf32>
    %159 = vector.shape_cast %158 : vector<1x256x128xf32> to vector<256x128xf32>
    %cst_68 = arith.constant dense<0.000000e+00> : vector<16x128xf32>
    %160 = tpu.matmul %157, %159, %cst_68 {dimension_numbers = #tpu.dot_dimension_numbers<[1], [0], [0], [1], [0, 0, 1, 1], [], []>} : vector<16x256xf32>, vector<256x128xf32>, vector<16x128xf32> -> vector<16x128xf32>
    %c0_69 = arith.constant 0 : index
    %c0_70 = arith.constant 0 : index
    %c0_71 = arith.constant 0 : index
    %161 = vector.load %arg14[%c0_69, %c0_70, %c0_71] : memref<2x1x128xf32, #tpu.memory_space<vmem>>, vector<1x1x128xf32>
    %162 = vector.shape_cast %161 : vector<1x1x128xf32> to vector<1x128xf32>
    %163 = vector.broadcast %162 : vector<1x128xf32> to vector<16x128xf32>
    %164 = arith.addf %160, %163 : vector<16x128xf32>
    %165 = arith.addf %164, %137 : vector<16x128xf32>
    %c0_72 = arith.constant 0 : index
    %c0_73 = arith.constant 0 : index
    %c0_74 = arith.constant 0 : index
    %166 = vector.load %arg15[%c0_72, %c0_73, %c0_74] : memref<2x1x128xf32, #tpu.memory_space<vmem>>, vector<1x1x128xf32>
    %167 = vector.shape_cast %166 : vector<1x1x128xf32> to vector<1x128xf32>
    %c0_75 = arith.constant 0 : index
    %c0_76 = arith.constant 0 : index
    %c0_77 = arith.constant 0 : index
    %168 = vector.load %arg16[%c0_75, %c0_76, %c0_77] : memref<2x1x128xf32, #tpu.memory_space<vmem>>, vector<1x1x128xf32>
    %169 = vector.shape_cast %168 : vector<1x1x128xf32> to vector<1x128xf32>
    %cst_78 = arith.constant dense<0.000000e+00> : vector<16xf32>
    %170 = vector.multi_reduction <add>, %165, %cst_78 [1] : vector<16x128xf32> to vector<16xf32>
    %171 = vector.shape_cast %170 : vector<16xf32> to vector<16x1xf32>
    %cst_79 = arith.constant 1.280000e+02 : f32
    %172 = vector.broadcast %cst_79 : f32 to vector<16x1xf32>
    %173 = arith.divf %171, %172 : vector<16x1xf32>
    %174 = vector.broadcast %173 : vector<16x1xf32> to vector<16x128xf32>
    %175 = arith.subf %165, %174 : vector<16x128xf32>
    %176 = arith.mulf %175, %175 : vector<16x128xf32>
    %cst_80 = arith.constant dense<0.000000e+00> : vector<16xf32>
    %177 = vector.multi_reduction <add>, %176, %cst_80 [1] : vector<16x128xf32> to vector<16xf32>
    %178 = vector.shape_cast %177 : vector<16xf32> to vector<16x1xf32>
    %cst_81 = arith.constant 1.280000e+02 : f32
    %179 = vector.broadcast %cst_81 : f32 to vector<16x1xf32>
    %180 = arith.divf %178, %179 : vector<16x1xf32>
    %181 = vector.broadcast %173 : vector<16x1xf32> to vector<16x128xf32>
    %182 = arith.subf %165, %181 : vector<16x128xf32>
    %cst_82 = arith.constant 9.99999996E-13 : f32
    %183 = vector.broadcast %cst_82 : f32 to vector<16x1xf32>
    %184 = arith.addf %180, %183 : vector<16x1xf32>
    %185 = math.rsqrt %184 : vector<16x1xf32>
    %186 = vector.broadcast %185 : vector<16x1xf32> to vector<16x128xf32>
    %187 = arith.mulf %182, %186 : vector<16x128xf32>
    %188 = vector.broadcast %167 : vector<1x128xf32> to vector<16x128xf32>
    %189 = arith.mulf %188, %187 : vector<16x128xf32>
    %190 = vector.broadcast %169 : vector<1x128xf32> to vector<16x128xf32>
    %191 = arith.addf %189, %190 : vector<16x128xf32>
    %c1 = arith.constant 1 : index
    %c0_83 = arith.constant 0 : index
    %c0_84 = arith.constant 0 : index
    %192 = vector.load %arg5[%c1, %c0_83, %c0_84] : memref<2x128x384xf32, #tpu.memory_space<vmem>>, vector<1x128x384xf32>
    %193 = vector.shape_cast %192 : vector<1x128x384xf32> to vector<128x384xf32>
    %cst_85 = arith.constant dense<0.000000e+00> : vector<16x384xf32>
    %194 = tpu.matmul %191, %193, %cst_85 {dimension_numbers = #tpu.dot_dimension_numbers<[1], [0], [0], [1], [0, 0, 1, 1], [], []>} : vector<16x128xf32>, vector<128x384xf32>, vector<16x384xf32> -> vector<16x384xf32>
    %c1_86 = arith.constant 1 : index
    %c0_87 = arith.constant 0 : index
    %c0_88 = arith.constant 0 : index
    %195 = vector.load %arg6[%c1_86, %c0_87, %c0_88] : memref<2x1x384xf32, #tpu.memory_space<vmem>>, vector<1x1x384xf32>
    %196 = vector.shape_cast %195 : vector<1x1x384xf32> to vector<1x384xf32>
    %197 = vector.broadcast %196 : vector<1x384xf32> to vector<16x384xf32>
    %198 = arith.addf %194, %197 : vector<16x384xf32>
    %199 = vector.extract_strided_slice %198 {offsets = [0, 0], sizes = [16, 32], strides = [1, 1]} : vector<16x384xf32> to vector<16x32xf32>
    %200 = vector.extract_strided_slice %198 {offsets = [0, 128], sizes = [16, 32], strides = [1, 1]} : vector<16x384xf32> to vector<16x32xf32>
    %201 = vector.extract_strided_slice %198 {offsets = [0, 256], sizes = [16, 32], strides = [1, 1]} : vector<16x384xf32> to vector<16x32xf32>
    %cst_89 = arith.constant dense<0.000000e+00> : vector<16x16xf32>
    %202 = tpu.matmul %199, %200, %cst_89 {dimension_numbers = #tpu.dot_dimension_numbers<[1], [1], [0], [0], [0, 0, 1, 0], [], []>} : vector<16x32xf32>, vector<16x32xf32>, vector<16x16xf32> -> vector<16x16xf32>
    %203 = vector.broadcast %1 : vector<1x16xf32> to vector<16x16xf32>
    %204 = arith.addf %202, %203 : vector<16x16xf32>
    %cst_90 = arith.constant dense<0xFF800000> : vector<16xf32>
    %205 = vector.multi_reduction <maximumf>, %204, %cst_90 [1] : vector<16x16xf32> to vector<16xf32>
    %206 = vector.shape_cast %205 : vector<16xf32> to vector<16x1xf32>
    %207 = vector.broadcast %206 : vector<16x1xf32> to vector<16x16xf32>
    %208 = arith.subf %204, %207 : vector<16x16xf32>
    %209 = math.exp %208 : vector<16x16xf32>
    %cst_91 = arith.constant dense<0.000000e+00> : vector<16xf32>
    %210 = vector.multi_reduction <add>, %209, %cst_91 [1] : vector<16x16xf32> to vector<16xf32>
    %211 = vector.shape_cast %210 : vector<16xf32> to vector<16x1xf32>
    %212 = tpu.reciprocal %211 {approx = true} : vector<16x1xf32> -> vector<16x1xf32>
    %213 = vector.broadcast %212 : vector<16x1xf32> to vector<16x16xf32>
    %214 = arith.mulf %209, %213 : vector<16x16xf32>
    %cst_92 = arith.constant dense<0.000000e+00> : vector<16x32xf32>
    %215 = tpu.matmul %214, %201, %cst_92 {dimension_numbers = #tpu.dot_dimension_numbers<[1], [0], [0], [1], [0, 0, 1, 1], [], []>} : vector<16x16xf32>, vector<16x32xf32>, vector<16x32xf32> -> vector<16x32xf32>
    %216 = vector.extract_strided_slice %198 {offsets = [0, 32], sizes = [16, 32], strides = [1, 1]} : vector<16x384xf32> to vector<16x32xf32>
    %217 = vector.extract_strided_slice %198 {offsets = [0, 160], sizes = [16, 32], strides = [1, 1]} : vector<16x384xf32> to vector<16x32xf32>
    %218 = vector.extract_strided_slice %198 {offsets = [0, 288], sizes = [16, 32], strides = [1, 1]} : vector<16x384xf32> to vector<16x32xf32>
    %cst_93 = arith.constant dense<0.000000e+00> : vector<16x16xf32>
    %219 = tpu.matmul %216, %217, %cst_93 {dimension_numbers = #tpu.dot_dimension_numbers<[1], [1], [0], [0], [0, 0, 1, 0], [], []>} : vector<16x32xf32>, vector<16x32xf32>, vector<16x16xf32> -> vector<16x16xf32>
    %220 = vector.broadcast %1 : vector<1x16xf32> to vector<16x16xf32>
    %221 = arith.addf %219, %220 : vector<16x16xf32>
    %cst_94 = arith.constant dense<0xFF800000> : vector<16xf32>
    %222 = vector.multi_reduction <maximumf>, %221, %cst_94 [1] : vector<16x16xf32> to vector<16xf32>
    %223 = vector.shape_cast %222 : vector<16xf32> to vector<16x1xf32>
    %224 = vector.broadcast %223 : vector<16x1xf32> to vector<16x16xf32>
    %225 = arith.subf %221, %224 : vector<16x16xf32>
    %226 = math.exp %225 : vector<16x16xf32>
    %cst_95 = arith.constant dense<0.000000e+00> : vector<16xf32>
    %227 = vector.multi_reduction <add>, %226, %cst_95 [1] : vector<16x16xf32> to vector<16xf32>
    %228 = vector.shape_cast %227 : vector<16xf32> to vector<16x1xf32>
    %229 = tpu.reciprocal %228 {approx = true} : vector<16x1xf32> -> vector<16x1xf32>
    %230 = vector.broadcast %229 : vector<16x1xf32> to vector<16x16xf32>
    %231 = arith.mulf %226, %230 : vector<16x16xf32>
    %cst_96 = arith.constant dense<0.000000e+00> : vector<16x32xf32>
    %232 = tpu.matmul %231, %218, %cst_96 {dimension_numbers = #tpu.dot_dimension_numbers<[1], [0], [0], [1], [0, 0, 1, 1], [], []>} : vector<16x16xf32>, vector<16x32xf32>, vector<16x32xf32> -> vector<16x32xf32>
    %233 = vector.extract_strided_slice %198 {offsets = [0, 64], sizes = [16, 32], strides = [1, 1]} : vector<16x384xf32> to vector<16x32xf32>
    %234 = vector.extract_strided_slice %198 {offsets = [0, 192], sizes = [16, 32], strides = [1, 1]} : vector<16x384xf32> to vector<16x32xf32>
    %235 = vector.extract_strided_slice %198 {offsets = [0, 320], sizes = [16, 32], strides = [1, 1]} : vector<16x384xf32> to vector<16x32xf32>
    %cst_97 = arith.constant dense<0.000000e+00> : vector<16x16xf32>
    %236 = tpu.matmul %233, %234, %cst_97 {dimension_numbers = #tpu.dot_dimension_numbers<[1], [1], [0], [0], [0, 0, 1, 0], [], []>} : vector<16x32xf32>, vector<16x32xf32>, vector<16x16xf32> -> vector<16x16xf32>
    %237 = vector.broadcast %1 : vector<1x16xf32> to vector<16x16xf32>
    %238 = arith.addf %236, %237 : vector<16x16xf32>
    %cst_98 = arith.constant dense<0xFF800000> : vector<16xf32>
    %239 = vector.multi_reduction <maximumf>, %238, %cst_98 [1] : vector<16x16xf32> to vector<16xf32>
    %240 = vector.shape_cast %239 : vector<16xf32> to vector<16x1xf32>
    %241 = vector.broadcast %240 : vector<16x1xf32> to vector<16x16xf32>
    %242 = arith.subf %238, %241 : vector<16x16xf32>
    %243 = math.exp %242 : vector<16x16xf32>
    %cst_99 = arith.constant dense<0.000000e+00> : vector<16xf32>
    %244 = vector.multi_reduction <add>, %243, %cst_99 [1] : vector<16x16xf32> to vector<16xf32>
    %245 = vector.shape_cast %244 : vector<16xf32> to vector<16x1xf32>
    %246 = tpu.reciprocal %245 {approx = true} : vector<16x1xf32> -> vector<16x1xf32>
    %247 = vector.broadcast %246 : vector<16x1xf32> to vector<16x16xf32>
    %248 = arith.mulf %243, %247 : vector<16x16xf32>
    %cst_100 = arith.constant dense<0.000000e+00> : vector<16x32xf32>
    %249 = tpu.matmul %248, %235, %cst_100 {dimension_numbers = #tpu.dot_dimension_numbers<[1], [0], [0], [1], [0, 0, 1, 1], [], []>} : vector<16x16xf32>, vector<16x32xf32>, vector<16x32xf32> -> vector<16x32xf32>
    %250 = vector.extract_strided_slice %198 {offsets = [0, 96], sizes = [16, 32], strides = [1, 1]} : vector<16x384xf32> to vector<16x32xf32>
    %251 = vector.extract_strided_slice %198 {offsets = [0, 224], sizes = [16, 32], strides = [1, 1]} : vector<16x384xf32> to vector<16x32xf32>
    %252 = vector.extract_strided_slice %198 {offsets = [0, 352], sizes = [16, 32], strides = [1, 1]} : vector<16x384xf32> to vector<16x32xf32>
    %cst_101 = arith.constant dense<0.000000e+00> : vector<16x16xf32>
    %253 = tpu.matmul %250, %251, %cst_101 {dimension_numbers = #tpu.dot_dimension_numbers<[1], [1], [0], [0], [0, 0, 1, 0], [], []>} : vector<16x32xf32>, vector<16x32xf32>, vector<16x16xf32> -> vector<16x16xf32>
    %254 = vector.broadcast %1 : vector<1x16xf32> to vector<16x16xf32>
    %255 = arith.addf %253, %254 : vector<16x16xf32>
    %cst_102 = arith.constant dense<0xFF800000> : vector<16xf32>
    %256 = vector.multi_reduction <maximumf>, %255, %cst_102 [1] : vector<16x16xf32> to vector<16xf32>
    %257 = vector.shape_cast %256 : vector<16xf32> to vector<16x1xf32>
    %258 = vector.broadcast %257 : vector<16x1xf32> to vector<16x16xf32>
    %259 = arith.subf %255, %258 : vector<16x16xf32>
    %260 = math.exp %259 : vector<16x16xf32>
    %cst_103 = arith.constant dense<0.000000e+00> : vector<16xf32>
    %261 = vector.multi_reduction <add>, %260, %cst_103 [1] : vector<16x16xf32> to vector<16xf32>
    %262 = vector.shape_cast %261 : vector<16xf32> to vector<16x1xf32>
    %263 = tpu.reciprocal %262 {approx = true} : vector<16x1xf32> -> vector<16x1xf32>
    %264 = vector.broadcast %263 : vector<16x1xf32> to vector<16x16xf32>
    %265 = arith.mulf %260, %264 : vector<16x16xf32>
    %cst_104 = arith.constant dense<0.000000e+00> : vector<16x32xf32>
    %266 = tpu.matmul %265, %252, %cst_104 {dimension_numbers = #tpu.dot_dimension_numbers<[1], [0], [0], [1], [0, 0, 1, 1], [], []>} : vector<16x16xf32>, vector<16x32xf32>, vector<16x32xf32> -> vector<16x32xf32>
    %267 = tpu.concatenate %215, %232, %249, %266 in 1 : vector<16x32xf32>, vector<16x32xf32>, vector<16x32xf32>, vector<16x32xf32> -> vector<16x128xf32>
    %c1_105 = arith.constant 1 : index
    %c0_106 = arith.constant 0 : index
    %c0_107 = arith.constant 0 : index
    %268 = vector.load %arg7[%c1_105, %c0_106, %c0_107] : memref<2x128x128xf32, #tpu.memory_space<vmem>>, vector<1x128x128xf32>
    %269 = vector.shape_cast %268 : vector<1x128x128xf32> to vector<128x128xf32>
    %cst_108 = arith.constant dense<0.000000e+00> : vector<16x128xf32>
    %270 = tpu.matmul %267, %269, %cst_108 {dimension_numbers = #tpu.dot_dimension_numbers<[1], [0], [0], [1], [0, 0, 1, 1], [], []>} : vector<16x128xf32>, vector<128x128xf32>, vector<16x128xf32> -> vector<16x128xf32>
    %c1_109 = arith.constant 1 : index
    %c0_110 = arith.constant 0 : index
    %c0_111 = arith.constant 0 : index
    %271 = vector.load %arg8[%c1_109, %c0_110, %c0_111] : memref<2x1x128xf32, #tpu.memory_space<vmem>>, vector<1x1x128xf32>
    %272 = vector.shape_cast %271 : vector<1x1x128xf32> to vector<1x128xf32>
    %273 = vector.broadcast %272 : vector<1x128xf32> to vector<16x128xf32>
    %274 = arith.addf %270, %273 : vector<16x128xf32>
    %275 = arith.addf %274, %191 : vector<16x128xf32>
    %c1_112 = arith.constant 1 : index
    %c0_113 = arith.constant 0 : index
    %c0_114 = arith.constant 0 : index
    %276 = vector.load %arg9[%c1_112, %c0_113, %c0_114] : memref<2x1x128xf32, #tpu.memory_space<vmem>>, vector<1x1x128xf32>
    %277 = vector.shape_cast %276 : vector<1x1x128xf32> to vector<1x128xf32>
    %c1_115 = arith.constant 1 : index
    %c0_116 = arith.constant 0 : index
    %c0_117 = arith.constant 0 : index
    %278 = vector.load %arg10[%c1_115, %c0_116, %c0_117] : memref<2x1x128xf32, #tpu.memory_space<vmem>>, vector<1x1x128xf32>
    %279 = vector.shape_cast %278 : vector<1x1x128xf32> to vector<1x128xf32>
    %cst_118 = arith.constant dense<0.000000e+00> : vector<16xf32>
    %280 = vector.multi_reduction <add>, %275, %cst_118 [1] : vector<16x128xf32> to vector<16xf32>
    %281 = vector.shape_cast %280 : vector<16xf32> to vector<16x1xf32>
    %cst_119 = arith.constant 1.280000e+02 : f32
    %282 = vector.broadcast %cst_119 : f32 to vector<16x1xf32>
    %283 = arith.divf %281, %282 : vector<16x1xf32>
    %284 = vector.broadcast %283 : vector<16x1xf32> to vector<16x128xf32>
    %285 = arith.subf %275, %284 : vector<16x128xf32>
    %286 = arith.mulf %285, %285 : vector<16x128xf32>
    %cst_120 = arith.constant dense<0.000000e+00> : vector<16xf32>
    %287 = vector.multi_reduction <add>, %286, %cst_120 [1] : vector<16x128xf32> to vector<16xf32>
    %288 = vector.shape_cast %287 : vector<16xf32> to vector<16x1xf32>
    %cst_121 = arith.constant 1.280000e+02 : f32
    %289 = vector.broadcast %cst_121 : f32 to vector<16x1xf32>
    %290 = arith.divf %288, %289 : vector<16x1xf32>
    %291 = vector.broadcast %283 : vector<16x1xf32> to vector<16x128xf32>
    %292 = arith.subf %275, %291 : vector<16x128xf32>
    %cst_122 = arith.constant 9.99999996E-13 : f32
    %293 = vector.broadcast %cst_122 : f32 to vector<16x1xf32>
    %294 = arith.addf %290, %293 : vector<16x1xf32>
    %295 = math.rsqrt %294 : vector<16x1xf32>
    %296 = vector.broadcast %295 : vector<16x1xf32> to vector<16x128xf32>
    %297 = arith.mulf %292, %296 : vector<16x128xf32>
    %298 = vector.broadcast %277 : vector<1x128xf32> to vector<16x128xf32>
    %299 = arith.mulf %298, %297 : vector<16x128xf32>
    %300 = vector.broadcast %279 : vector<1x128xf32> to vector<16x128xf32>
    %301 = arith.addf %299, %300 : vector<16x128xf32>
    %c1_123 = arith.constant 1 : index
    %c0_124 = arith.constant 0 : index
    %c0_125 = arith.constant 0 : index
    %302 = vector.load %arg11[%c1_123, %c0_124, %c0_125] : memref<2x128x256xf32, #tpu.memory_space<vmem>>, vector<1x128x256xf32>
    %303 = vector.shape_cast %302 : vector<1x128x256xf32> to vector<128x256xf32>
    %cst_126 = arith.constant dense<0.000000e+00> : vector<16x256xf32>
    %304 = tpu.matmul %301, %303, %cst_126 {dimension_numbers = #tpu.dot_dimension_numbers<[1], [0], [0], [1], [0, 0, 1, 1], [], []>} : vector<16x128xf32>, vector<128x256xf32>, vector<16x256xf32> -> vector<16x256xf32>
    %c1_127 = arith.constant 1 : index
    %c0_128 = arith.constant 0 : index
    %c0_129 = arith.constant 0 : index
    %305 = vector.load %arg12[%c1_127, %c0_128, %c0_129] : memref<2x1x256xf32, #tpu.memory_space<vmem>>, vector<1x1x256xf32>
    %306 = vector.shape_cast %305 : vector<1x1x256xf32> to vector<1x256xf32>
    %307 = vector.broadcast %306 : vector<1x256xf32> to vector<16x256xf32>
    %308 = arith.addf %304, %307 : vector<16x256xf32>
    %cst_130 = arith.constant 5.000000e-01 : f32
    %309 = vector.broadcast %cst_130 : f32 to vector<16x256xf32>
    %310 = arith.mulf %309, %308 : vector<16x256xf32>
    %cst_131 = arith.constant 4.471500e-02 : f32
    %311 = vector.broadcast %cst_131 : f32 to vector<16x256xf32>
    %312 = arith.mulf %311, %308 : vector<16x256xf32>
    %313 = arith.mulf %312, %308 : vector<16x256xf32>
    %314 = arith.mulf %313, %308 : vector<16x256xf32>
    %315 = arith.addf %308, %314 : vector<16x256xf32>
    %cst_132 = arith.constant 0.797884583 : f32
    %316 = vector.broadcast %cst_132 : f32 to vector<16x256xf32>
    %317 = arith.mulf %316, %315 : vector<16x256xf32>
    %318 = math.tanh %317 : vector<16x256xf32>
    %cst_133 = arith.constant 1.000000e+00 : f32
    %319 = vector.broadcast %cst_133 : f32 to vector<16x256xf32>
    %320 = arith.addf %319, %318 : vector<16x256xf32>
    %321 = arith.mulf %310, %320 : vector<16x256xf32>
    %c1_134 = arith.constant 1 : index
    %c0_135 = arith.constant 0 : index
    %c0_136 = arith.constant 0 : index
    %322 = vector.load %arg13[%c1_134, %c0_135, %c0_136] : memref<2x256x128xf32, #tpu.memory_space<vmem>>, vector<1x256x128xf32>
    %323 = vector.shape_cast %322 : vector<1x256x128xf32> to vector<256x128xf32>
    %cst_137 = arith.constant dense<0.000000e+00> : vector<16x128xf32>
    %324 = tpu.matmul %321, %323, %cst_137 {dimension_numbers = #tpu.dot_dimension_numbers<[1], [0], [0], [1], [0, 0, 1, 1], [], []>} : vector<16x256xf32>, vector<256x128xf32>, vector<16x128xf32> -> vector<16x128xf32>
    %c1_138 = arith.constant 1 : index
    %c0_139 = arith.constant 0 : index
    %c0_140 = arith.constant 0 : index
    %325 = vector.load %arg14[%c1_138, %c0_139, %c0_140] : memref<2x1x128xf32, #tpu.memory_space<vmem>>, vector<1x1x128xf32>
    %326 = vector.shape_cast %325 : vector<1x1x128xf32> to vector<1x128xf32>
    %327 = vector.broadcast %326 : vector<1x128xf32> to vector<16x128xf32>
    %328 = arith.addf %324, %327 : vector<16x128xf32>
    %329 = arith.addf %328, %301 : vector<16x128xf32>
    %c1_141 = arith.constant 1 : index
    %c0_142 = arith.constant 0 : index
    %c0_143 = arith.constant 0 : index
    %330 = vector.load %arg15[%c1_141, %c0_142, %c0_143] : memref<2x1x128xf32, #tpu.memory_space<vmem>>, vector<1x1x128xf32>
    %331 = vector.shape_cast %330 : vector<1x1x128xf32> to vector<1x128xf32>
    %c1_144 = arith.constant 1 : index
    %c0_145 = arith.constant 0 : index
    %c0_146 = arith.constant 0 : index
    %332 = vector.load %arg16[%c1_144, %c0_145, %c0_146] : memref<2x1x128xf32, #tpu.memory_space<vmem>>, vector<1x1x128xf32>
    %333 = vector.shape_cast %332 : vector<1x1x128xf32> to vector<1x128xf32>
    %cst_147 = arith.constant dense<0.000000e+00> : vector<16xf32>
    %334 = vector.multi_reduction <add>, %329, %cst_147 [1] : vector<16x128xf32> to vector<16xf32>
    %335 = vector.shape_cast %334 : vector<16xf32> to vector<16x1xf32>
    %cst_148 = arith.constant 1.280000e+02 : f32
    %336 = vector.broadcast %cst_148 : f32 to vector<16x1xf32>
    %337 = arith.divf %335, %336 : vector<16x1xf32>
    %338 = vector.broadcast %337 : vector<16x1xf32> to vector<16x128xf32>
    %339 = arith.subf %329, %338 : vector<16x128xf32>
    %340 = arith.mulf %339, %339 : vector<16x128xf32>
    %cst_149 = arith.constant dense<0.000000e+00> : vector<16xf32>
    %341 = vector.multi_reduction <add>, %340, %cst_149 [1] : vector<16x128xf32> to vector<16xf32>
    %342 = vector.shape_cast %341 : vector<16xf32> to vector<16x1xf32>
    %cst_150 = arith.constant 1.280000e+02 : f32
    %343 = vector.broadcast %cst_150 : f32 to vector<16x1xf32>
    %344 = arith.divf %342, %343 : vector<16x1xf32>
    %345 = vector.broadcast %337 : vector<16x1xf32> to vector<16x128xf32>
    %346 = arith.subf %329, %345 : vector<16x128xf32>
    %cst_151 = arith.constant 9.99999996E-13 : f32
    %347 = vector.broadcast %cst_151 : f32 to vector<16x1xf32>
    %348 = arith.addf %344, %347 : vector<16x1xf32>
    %349 = math.rsqrt %348 : vector<16x1xf32>
    %350 = vector.broadcast %349 : vector<16x1xf32> to vector<16x128xf32>
    %351 = arith.mulf %346, %350 : vector<16x128xf32>
    %352 = vector.broadcast %331 : vector<1x128xf32> to vector<16x128xf32>
    %353 = arith.mulf %352, %351 : vector<16x128xf32>
    %354 = vector.broadcast %333 : vector<1x128xf32> to vector<16x128xf32>
    %355 = arith.addf %353, %354 : vector<16x128xf32>
    %c0_152 = arith.constant 0 : index
    %c0_153 = arith.constant 0 : index
    %c0_154 = arith.constant 0 : index
    %356 = vector.load %arg19[%c0_152, %c0_153, %c0_154] : memref<1x16x128xf32, #tpu.memory_space<vmem>>, vector<1x16x128xf32>
    %357 = vector.shape_cast %356 : vector<1x16x128xf32> to vector<16x128xf32>
    %358 = vector.shape_cast %355 : vector<16x128xf32> to vector<1x16x128xf32>
    tpu.vector_store %arg19[%c0_152, %c0_153, %c0_154], %358 {strides = array<i32>} : memref<1x16x128xf32, #tpu.memory_space<vmem>>, vector<1x16x128xf32>,
    %c0_155 = arith.constant 0 : index
    %c0_156 = arith.constant 0 : index
    %359 = vector.load %arg17[%c0_155, %c0_156] : memref<128x128xf32, #tpu.memory_space<vmem>>, vector<128x128xf32>
    %cst_157 = arith.constant dense<0.000000e+00> : vector<16x128xf32>
    %360 = tpu.matmul %355, %359, %cst_157 {dimension_numbers = #tpu.dot_dimension_numbers<[1], [0], [0], [1], [0, 0, 1, 1], [], []>} : vector<16x128xf32>, vector<128x128xf32>, vector<16x128xf32> -> vector<16x128xf32>
    %c0_158 = arith.constant 0 : index
    %c0_159 = arith.constant 0 : index
    %361 = vector.load %arg18[%c0_158, %c0_159] : memref<1x128xf32, #tpu.memory_space<vmem>>, vector<1x128xf32>
    %362 = vector.broadcast %361 : vector<1x128xf32> to vector<16x128xf32>
    %363 = arith.addf %360, %362 : vector<16x128xf32>
    %c0_160 = arith.constant 0 : index
    %c0_161 = arith.constant 0 : index
    %c0_162 = arith.constant 0 : index
    %364 = vector.load %arg20[%c0_160, %c0_161, %c0_162] : memref<1x16x128xf32, #tpu.memory_space<vmem>>, vector<1x16x128xf32>
    %365 = vector.shape_cast %364 : vector<1x16x128xf32> to vector<16x128xf32>
    %366 = vector.shape_cast %363 : vector<16x128xf32> to vector<1x16x128xf32>
    tpu.vector_store %arg20[%c0_160, %c0_161, %c0_162], %366 {strides = array<i32>} : memref<1x16x128xf32, #tpu.memory_space<vmem>>, vector<1x16x128xf32>,
    return
  }
  func.func @transform_0(%arg0: i32) -> (i32, i32, i32) {
    %c0_i32 = arith.constant 0 : i32
    %c0_i32_0 = arith.constant 0 : i32
    %c0_i32_1 = arith.constant 0 : i32
    return %arg0, %c0_i32, %c0_i32_0 : i32, i32, i32
  }
  func.func @transform_1(%arg0: i32) -> (i32, i32, i32) {
    %c0_i32 = arith.constant 0 : i32
    %c0_i32_0 = arith.constant 0 : i32
    %c0_i32_1 = arith.constant 0 : i32
    return %arg0, %c0_i32, %c0_i32_0 : i32, i32, i32
  }
  func.func @transform_2(%arg0: i32) -> (i32, i32) {
    %c0_i32 = arith.constant 0 : i32
    %c0_i32_0 = arith.constant 0 : i32
    %c0_i32_1 = arith.constant 0 : i32
    return %c0_i32, %c0_i32_0 : i32, i32
  }
  func.func @transform_3(%arg0: i32) -> (i32, i32) {
    %c0_i32 = arith.constant 0 : i32
    %c0_i32_0 = arith.constant 0 : i32
    %c0_i32_1 = arith.constant 0 : i32
    return %c0_i32, %c0_i32_0 : i32, i32
  }
  func.func @transform_4(%arg0: i32) -> (i32, i32, i32) {
    %c0_i32 = arith.constant 0 : i32
    %c0_i32_0 = arith.constant 0 : i32
    %c0_i32_1 = arith.constant 0 : i32
    %c0_i32_2 = arith.constant 0 : i32
    return %c0_i32, %c0_i32_0, %c0_i32_1 : i32, i32, i32
  }
  func.func @transform_5(%arg0: i32) -> (i32, i32, i32) {
    %c0_i32 = arith.constant 0 : i32
    %c0_i32_0 = arith.constant 0 : i32
    %c0_i32_1 = arith.constant 0 : i32
    %c0_i32_2 = arith.constant 0 : i32
    return %c0_i32, %c0_i32_0, %c0_i32_1 : i32, i32, i32
  }
  func.func @transform_6(%arg0: i32) -> (i32, i32, i32) {
    %c0_i32 = arith.constant 0 : i32
    %c0_i32_0 = arith.constant 0 : i32
    %c0_i32_1 = arith.constant 0 : i32
    %c0_i32_2 = arith.constant 0 : i32
    return %c0_i32, %c0_i32_0, %c0_i32_1 : i32, i32, i32
  }
  func.func @transform_7(%arg0: i32) -> (i32, i32, i32) {
    %c0_i32 = arith.constant 0 : i32
    %c0_i32_0 = arith.constant 0 : i32
    %c0_i32_1 = arith.constant 0 : i32
    %c0_i32_2 = arith.constant 0 : i32
    return %c0_i32, %c0_i32_0, %c0_i32_1 : i32, i32, i32
  }
  func.func @transform_8(%arg0: i32) -> (i32, i32, i32) {
    %c0_i32 = arith.constant 0 : i32
    %c0_i32_0 = arith.constant 0 : i32
    %c0_i32_1 = arith.constant 0 : i32
    %c0_i32_2 = arith.constant 0 : i32
    return %c0_i32, %c0_i32_0, %c0_i32_1 : i32, i32, i32
  }
  func.func @transform_9(%arg0: i32) -> (i32, i32, i32) {
    %c0_i32 = arith.constant 0 : i32
    %c0_i32_0 = arith.constant 0 : i32
    %c0_i32_1 = arith.constant 0 : i32
    %c0_i32_2 = arith.constant 0 : i32
    return %c0_i32, %c0_i32_0, %c0_i32_1 : i32, i32, i32
  }
  func.func @transform_10(%arg0: i32) -> (i32, i32, i32) {
    %c0_i32 = arith.constant 0 : i32
    %c0_i32_0 = arith.constant 0 : i32
    %c0_i32_1 = arith.constant 0 : i32
    %c0_i32_2 = arith.constant 0 : i32
    return %c0_i32, %c0_i32_0, %c0_i32_1 : i32, i32, i32
  }
  func.func @transform_11(%arg0: i32) -> (i32, i32, i32) {
    %c0_i32 = arith.constant 0 : i32
    %c0_i32_0 = arith.constant 0 : i32
    %c0_i32_1 = arith.constant 0 : i32
    %c0_i32_2 = arith.constant 0 : i32
    return %c0_i32, %c0_i32_0, %c0_i32_1 : i32, i32, i32
  }
  func.func @transform_12(%arg0: i32) -> (i32, i32, i32) {
    %c0_i32 = arith.constant 0 : i32
    %c0_i32_0 = arith.constant 0 : i32
    %c0_i32_1 = arith.constant 0 : i32
    %c0_i32_2 = arith.constant 0 : i32
    return %c0_i32, %c0_i32_0, %c0_i32_1 : i32, i32, i32
  }
  func.func @transform_13(%arg0: i32) -> (i32, i32, i32) {
    %c0_i32 = arith.constant 0 : i32
    %c0_i32_0 = arith.constant 0 : i32
    %c0_i32_1 = arith.constant 0 : i32
    %c0_i32_2 = arith.constant 0 : i32
    return %c0_i32, %c0_i32_0, %c0_i32_1 : i32, i32, i32
  }
  func.func @transform_14(%arg0: i32) -> (i32, i32, i32) {
    %c0_i32 = arith.constant 0 : i32
    %c0_i32_0 = arith.constant 0 : i32
    %c0_i32_1 = arith.constant 0 : i32
    %c0_i32_2 = arith.constant 0 : i32
    return %c0_i32, %c0_i32_0, %c0_i32_1 : i32, i32, i32
  }
  func.func @transform_15(%arg0: i32) -> (i32, i32, i32) {
    %c0_i32 = arith.constant 0 : i32
    %c0_i32_0 = arith.constant 0 : i32
    %c0_i32_1 = arith.constant 0 : i32
    %c0_i32_2 = arith.constant 0 : i32
    return %c0_i32, %c0_i32_0, %c0_i32_1 : i32, i32, i32
  }
  func.func @transform_16(%arg0: i32) -> (i32, i32) {
    %c0_i32 = arith.constant 0 : i32
    %c0_i32_0 = arith.constant 0 : i32
    %c0_i32_1 = arith.constant 0 : i32
    return %c0_i32, %c0_i32_0 : i32, i32
  }
  func.func @transform_17(%arg0: i32) -> (i32, i32) {
    %c0_i32 = arith.constant 0 : i32
    %c0_i32_0 = arith.constant 0 : i32
    %c0_i32_1 = arith.constant 0 : i32
    return %c0_i32, %c0_i32_0 : i32, i32
  }
  func.func @transform_18(%arg0: i32) -> (i32, i32, i32) {
    %c0_i32 = arith.constant 0 : i32
    %c0_i32_0 = arith.constant 0 : i32
    %c0_i32_1 = arith.constant 0 : i32
    return %arg0, %c0_i32, %c0_i32_0 : i32, i32, i32
  }
  func.func @transform_19(%arg0: i32) -> (i32, i32, i32) {
    %c0_i32 = arith.constant 0 : i32
    %c0_i32_0 = arith.constant 0 : i32
    %c0_i32_1 = arith.constant 0 : i32
    return %arg0, %c0_i32, %c0_i32_0 : i32, i32, i32
  }
}

</mosaic_0001>

<llo_original>
// kernel: tpu_custom_call.1
$region0: #{tpu_custom_call.1}
  #allocation0 [shape = 'u32[]', space=smem, size = 0x4, offset = 0x4, fixed_abs, tag = 'smem constant byte address 0x4 - core index']
  #allocation1 [shape = 'u32[144,128]{1,0:T(1,128)}', space=vmem, size = 0x12000, scoped, tag = 'internal scratch']
  %s0 = inlined_call_operand.hbm [shape: f32[2,16,128], index: 0, kind: input, shape index: {}]
  %s1 = inlined_call_operand.hbm [shape: f32[2,1,16], index: 1, kind: input, shape index: {}]
  %s2 = inlined_call_operand.hbm [shape: f32[1,128], index: 2, kind: input, shape index: {}]
  %s3 = inlined_call_operand.hbm [shape: f32[1,128], index: 3, kind: input, shape index: {}]
  %s4 = inlined_call_operand.hbm [shape: f32[2,128,384], index: 4, kind: input, shape index: {}]
  %s5 = inlined_call_operand.vmem [shape: f32[2,1,384], index: 5, kind: input, shape index: {}]
  %s6 = inlined_call_operand.hbm [shape: f32[2,128,128], index: 6, kind: input, shape index: {}]
  %s7 = inlined_call_operand.vmem [shape: f32[2,1,128], index: 7, kind: input, shape index: {}]
  %s8 = inlined_call_operand.vmem [shape: f32[2,1,128], index: 8, kind: input, shape index: {}]
  %s9 = inlined_call_operand.vmem [shape: f32[2,1,128], index: 9, kind: input, shape index: {}]
  %s10 = inlined_call_operand.hbm [shape: f32[2,128,256], index: 10, kind: input, shape index: {}]
  %s11 = inlined_call_operand.vmem [shape: f32[2,1,256], index: 11, kind: input, shape index: {}]
  %s12 = inlined_call_operand.hbm [shape: f32[2,256,128], index: 12, kind: input, shape index: {}]
  %s13 = inlined_call_operand.vmem [shape: f32[2,1,128], index: 13, kind: input, shape index: {}]
  %s14 = inlined_call_operand.vmem [shape: f32[2,1,128], index: 14, kind: input, shape index: {}]
  %s15 = inlined_call_operand.vmem [shape: f32[2,1,128], index: 15, kind: input, shape index: {}]
  %s16 = inlined_call_operand.hbm [shape: f32[128,128], index: 16, kind: input, shape index: {}]
  %s17 = inlined_call_operand.vmem [shape: f32[1,128], index: 17, kind: input, shape index: {}]
  %s18 = inlined_call_operand.hbm [shape: f32[2,16,128], index: 18, kind: output, shape index: {0}]
  %s19 = inlined_call_operand.hbm [shape: f32[2,16,128], index: 19, kind: output, shape index: {1}]
  %20 = xla_tuple %s18, %s19
  %s21 = sld [smem:[#allocation0]]
  $region149: #{tpu_custom_call.1} parent=0
    _
  %s23 = ssub.s32 1, %s21
  %s24 = scalar_select 0, %s23, %s21
  $region1: #{tpu_custom_call.1} parent=0
    #allocation2 [shape = 'u8[16384]{0}', space=vmem, size = 0x4000, scoped, tag = 'input window, operand 0']
    #allocation3 [shape = 's32[2]{0}', space=sflag, size = 0x8, scoped, tag = 'scoped memory for tpu_custom_call.1']
    #allocation4 [shape = 's32[2]{0}', space=sflag, size = 0x8, scoped, tag = 'scoped memory for tpu_custom_call.1']
    #allocation5 [shape = 'u8[1024]{0}', space=vmem, size = 0x400, scoped, tag = 'input window, operand 1']
    #allocation6 [shape = 's32[2]{0}', space=sflag, size = 0x8, scoped, tag = 'scoped memory for tpu_custom_call.1']
    #allocation7 [shape = 'u8[512]{0}', space=vmem, size = 0x400, scoped, tag = 'input window, operand 2, single buffered']
    #allocation8 [shape = 'u8[512]{0}', space=vmem, size = 0x400, scoped, tag = 'input window, operand 3, single buffered']
    #allocation9 [shape = 's32[1]{0}', space=sflag, size = 0x4, scoped, tag = 'scoped memory for tpu_custom_call.1']
    #allocation10 [shape = 'u8[393216]{0}', space=vmem, size = 0x60000, scoped, tag = 'input window, operand 4, single buffered']
    #allocation11 [shape = 'u8[131072]{0}', space=vmem, size = 0x20000, scoped, tag = 'input window, operand 6, single buffered']
    #allocation12 [shape = 's32[1]{0}', space=sflag, size = 0x4, scoped, tag = 'scoped memory for tpu_custom_call.1']
    #allocation13 [shape = 'u8[262144]{0}', space=vmem, size = 0x40000, scoped, tag = 'input window, operand 10, single buffered']
    #allocation14 [shape = 'u8[262144]{0}', space=vmem, size = 0x40000, scoped, tag = 'input window, operand 12, single buffered']
    #allocation15 [shape = 's32[1]{0}', space=sflag, size = 0x4, scoped, tag = 'scoped memory for tpu_custom_call.1']
    #allocation16 [shape = 'u8[65536]{0}', space=vmem, size = 0x10000, scoped, tag = 'input window, operand 16, single buffered']
    #allocation17 [shape = 'u8[16384]{0}', space=vmem, size = 0x4000, scoped, tag = 'output window, operand 0']
    #allocation18 [shape = 'u8[16384]{0}', space=vmem, size = 0x4000, scoped, tag = 'output window, operand 1']
    #allocation19 [shape = 's32[2]{0}', space=sflag, size = 0x8, scoped, tag = 'scoped memory for tpu_custom_call.1']
    %25 = vsyncpa [#allocation3], 0
    %s26 = scalar_lea.sflag [#allocation3], 1
    %27 = vsyncpa %s26, 0
    %28 = vsyncpa [#allocation6], 0
    %s29 = scalar_lea.sflag [#allocation6], 1
    %30 = vsyncpa %s29, 0
    %31 = vsyncpa [#allocation9], 0
    %32 = vsyncpa [#allocation12], 0
    %33 = vsyncpa [#allocation15], 0
    %34 = vsyncpa [#allocation4], 0
    %s35 = scalar_lea.sflag [#allocation4], 1
    %36 = vsyncpa %s35, 0
    %37 = vsyncpa [#allocation19], 0
    %s38 = scalar_lea.sflag [#allocation19], 1
    %39 = vsyncpa %s38, 0
    loop: start=0, step=1, limit=4
    $region2: #{tpu_custom_call.1} parent=1 // loop_pre_header
      _
    $region3: #{tpu_custom_call.1} parent=1 // loop_header
      %s41 = sphi 0, %s45
      %p42 = scmp.ge.s32.totalorder %s41, 4
      %s51 = sphi 0, %s53
      %s54 = sphi 0, %s51
      %s55 = sphi 0, %s54
      %s71 = sphi 0, %s55
      %s77 = sphi 0, %s79
      %s80 = sphi 0, %s77
      %s81 = sphi 0, %s80
      %s97 = sphi 0, %s81
      %s101 = sphi 0, %s101
      %s103 = sphi 0, %s101
      %s104 = sphi 0, %s103
      %s118 = sphi 0, %s104
      %s122 = sphi 0, %s122
      %s124 = sphi 0, %s122
      %s125 = sphi 0, %s124
      %s139 = sphi 0, %s125
      %s143 = sphi 0, %s143
      %s145 = sphi 0, %s143
      %s146 = sphi 0, %s145
      %s160 = sphi 0, %s146
      %s164 = sphi 0, %s164
      %s166 = sphi 0, %s164
      %s167 = sphi 0, %s166
      %s181 = sphi 0, %s167
      %s185 = sphi 0, %s185
      %s187 = sphi 0, %s185
      %s188 = sphi 0, %s187
      %s202 = sphi 0, %s188
      %s206 = sphi 0, %s206
      %s208 = sphi 0, %s206
      %s209 = sphi 0, %s208
      %s223 = sphi 0, %s209
      %s227 = sphi 0, %s227
      %s229 = sphi 0, %s227
      %s230 = sphi 0, %s229
      %s244 = sphi 0, %s230
      %s248 = sphi 0, %s248
      %s250 = sphi 0, %s248
      %s251 = sphi 0, %s250
      %s265 = sphi 0, %s251
      %s269 = sphi 0, %s269
      %s271 = sphi 0, %s269
      %s272 = sphi 0, %s271
      %s286 = sphi 0, %s272
      %s290 = sphi 0, %s290
      %s292 = sphi 0, %s290
      %s293 = sphi 0, %s292
      %s307 = sphi 0, %s293
      %s311 = sphi 0, %s311
      %s313 = sphi 0, %s311
      %s314 = sphi 0, %s313
      %s328 = sphi 0, %s314
      %s332 = sphi 0, %s332
      %s334 = sphi 0, %s332
      %s335 = sphi 0, %s334
      %s349 = sphi 0, %s335
      %s353 = sphi 0, %s353
      %s355 = sphi 0, %s353
      %s356 = sphi 0, %s355
      %s370 = sphi 0, %s356
      %s374 = sphi 0, %s374
      %s376 = sphi 0, %s374
      %s377 = sphi 0, %s376
      %s391 = sphi 0, %s377
      %s395 = sphi 0, %s395
      %s397 = sphi 0, %s395
      %s398 = sphi 0, %s397
      %s412 = sphi 0, %s398
      %s416 = sphi 0, %s416
      %s418 = sphi 0, %s416
      %s419 = sphi 0, %s418
      %s433 = sphi 0, %s419
      %s439 = sphi 0, %s441
      %s442 = sphi 0, %s439
      %s443 = sphi 0, %s442
      %s459 = sphi 0, %s443
      %s465 = sphi 0, %s467
      %s468 = sphi 0, %s465
      %s469 = sphi 0, %s468
      %s485 = sphi 0, %s469
    $region4: #{tpu_custom_call.1} parent=1 // loop_header_branch
      %44 = sbr.rel (%p42) target = $region8
    $region5: #{tpu_custom_call.1} parent=1 // loop_body
      %s46 = ssub.s32 %s41, 1
      %s47 = ssub.s32 %s41, 2
      %s48 = sadd.s32 %s41, 1
      %s49 = ssub.s32 %s41, %s48
      %p50 = scmp.eq.s32.totalorder %s49, 0
      %s52 = sadd.s32 %s51, 1
      %s53 = scalar_select %p50, %s51, %s52
      %p56 = pneg %p50
      %p57 = scmp.eq.s32.totalorder %s41, 1
      %p58 = por %p56, %p57
      %p59 = scmp.ne.s32.totalorder %s51, %s54
      %p60 = scmp.eq.s32.totalorder %s41, 0
      %p61 = por %p59, %p60
      %p62 = scmp.ne.s32.totalorder %s51, %s54
      %p63 = scmp.eq.s32.totalorder %s46, 1
      %p64 = por %p62, %p63
      %p65 = scmp.ne.s32.totalorder %s54, %s55
      %p66 = scmp.eq.s32.totalorder %s46, 0
      %p67 = por %p65, %p66
      %p68 = scmp.ne.s32.totalorder %s54, %s55
      %p69 = scmp.eq.s32.totalorder %s47, 1
      %p70 = por %p68, %p69
      %p72 = scmp.ne.s32.totalorder %s55, %s71
      %p73 = scmp.eq.s32.totalorder %s47, 0
      %p74 = por %p72, %p73
      %s75 = ssub.s32 %s41, %s48
      %p76 = scmp.eq.s32.totalorder %s75, 0
      %s78 = sadd.s32 %s77, 1
      %s79 = scalar_select %p76, %s77, %s78
      %p82 = pneg %p76
      %p83 = scmp.eq.s32.totalorder %s41, 1
      %p84 = por %p82, %p83
      %p85 = scmp.ne.s32.totalorder %s77, %s80
      %p86 = scmp.eq.s32.totalorder %s41, 0
      %p87 = por %p85, %p86
      %p88 = scmp.ne.s32.totalorder %s77, %s80
      %p89 = scmp.eq.s32.totalorder %s46, 1
      %p90 = por %p88, %p89
      %p91 = scmp.ne.s32.totalorder %s80, %s81
      %p92 = scmp.eq.s32.totalorder %s46, 0
      %p93 = por %p91, %p92
      %p94 = scmp.ne.s32.totalorder %s80, %s81
      %p95 = scmp.eq.s32.totalorder %s47, 1
      %p96 = por %p94, %p95
      %p98 = scmp.ne.s32.totalorder %s81, %s97
      %p99 = scmp.eq.s32.totalorder %s47, 0
      %p100 = por %p98, %p99
      %s102 = sadd.s32 %s101, 1
      %p105 = scmp.eq.s32.totalorder %s41, 1
      %p106 = scmp.ne.s32.totalorder %s101, %s103
      %p107 = scmp.eq.s32.totalorder %s41, 0
      %p108 = por %p106, %p107
      %p109 = scmp.ne.s32.totalorder %s101, %s103
      %p110 = scmp.eq.s32.totalorder %s46, 1
      %p111 = por %p109, %p110
      %p112 = scmp.ne.s32.totalorder %s103, %s104
      %p113 = scmp.eq.s32.totalorder %s46, 0
      %p114 = por %p112, %p113
      %p115 = scmp.ne.s32.totalorder %s103, %s104
      %p116 = scmp.eq.s32.totalorder %s47, 1
      %p117 = por %p115, %p116
      %p119 = scmp.ne.s32.totalorder %s104, %s118
      %p120 = scmp.eq.s32.totalorder %s47, 0
      %p121 = por %p119, %p120
      %s123 = sadd.s32 %s122, 1
      %p126 = scmp.eq.s32.totalorder %s41, 1
      %p127 = scmp.ne.s32.totalorder %s122, %s124
      %p128 = scmp.eq.s32.totalorder %s41, 0
      %p129 = por %p127, %p128
      %p130 = scmp.ne.s32.totalorder %s122, %s124
      %p131 = scmp.eq.s32.totalorder %s46, 1
      %p132 = por %p130, %p131
      %p133 = scmp.ne.s32.totalorder %s124, %s125
      %p134 = scmp.eq.s32.totalorder %s46, 0
      %p135 = por %p133, %p134
      %p136 = scmp.ne.s32.totalorder %s124, %s125
      %p137 = scmp.eq.s32.totalorder %s47, 1
      %p138 = por %p136, %p137
      %p140 = scmp.ne.s32.totalorder %s125, %s139
      %p141 = scmp.eq.s32.totalorder %s47, 0
      %p142 = por %p140, %p141
      %s144 = sadd.s32 %s143, 1
      %p147 = scmp.eq.s32.totalorder %s41, 1
      %p148 = scmp.ne.s32.totalorder %s143, %s145
      %p149 = scmp.eq.s32.totalorder %s41, 0
      %p150 = por %p148, %p149
      %p151 = scmp.ne.s32.totalorder %s143, %s145
      %p152 = scmp.eq.s32.totalorder %s46, 1
      %p153 = por %p151, %p152
      %p154 = scmp.ne.s32.totalorder %s145, %s146
      %p155 = scmp.eq.s32.totalorder %s46, 0
      %p156 = por %p154, %p155
      %p157 = scmp.ne.s32.totalorder %s145, %s146
      %p158 = scmp.eq.s32.totalorder %s47, 1
      %p159 = por %p157, %p158
      %p161 = scmp.ne.s32.totalorder %s146, %s160
      %p162 = scmp.eq.s32.totalorder %s47, 0
      %p163 = por %p161, %p162
      %s165 = sadd.s32 %s164, 1
      %p168 = scmp.eq.s32.totalorder %s41, 1
      %p169 = scmp.ne.s32.totalorder %s164, %s166
      %p170 = scmp.eq.s32.totalorder %s41, 0
      %p171 = por %p169, %p170
      %p172 = scmp.ne.s32.totalorder %s164, %s166
      %p173 = scmp.eq.s32.totalorder %s46, 1
      %p174 = por %p172, %p173
      %p175 = scmp.ne.s32.totalorder %s166, %s167
      %p176 = scmp.eq.s32.totalorder %s46, 0
      %p177 = por %p175, %p176
      %p178 = scmp.ne.s32.totalorder %s166, %s167
      %p179 = scmp.eq.s32.totalorder %s47, 1
      %p180 = por %p178, %p179
      %p182 = scmp.ne.s32.totalorder %s167, %s181
      %p183 = scmp.eq.s32.totalorder %s47, 0
      %p184 = por %p182, %p183
      %s186 = sadd.s32 %s185, 1
      %p189 = scmp.eq.s32.totalorder %s41, 1
      %p190 = scmp.ne.s32.totalorder %s185, %s187
      %p191 = scmp.eq.s32.totalorder %s41, 0
      %p192 = por %p190, %p191
      %p193 = scmp.ne.s32.totalorder %s185, %s187
      %p194 = scmp.eq.s32.totalorder %s46, 1
      %p195 = por %p193, %p194
      %p196 = scmp.ne.s32.totalorder %s187, %s188
      %p197 = scmp.eq.s32.totalorder %s46, 0
      %p198 = por %p196, %p197
      %p199 = scmp.ne.s32.totalorder %s187, %s188
      %p200 = scmp.eq.s32.totalorder %s47, 1
      %p201 = por %p199, %p200
      %p203 = scmp.ne.s32.totalorder %s188, %s202
      %p204 = scmp.eq.s32.totalorder %s47, 0
      %p205 = por %p203, %p204
      %s207 = sadd.s32 %s206, 1
      %p210 = scmp.eq.s32.totalorder %s41, 1
      %p211 = scmp.ne.s32.totalorder %s206, %s208
      %p212 = scmp.eq.s32.totalorder %s41, 0
      %p213 = por %p211, %p212
      %p214 = scmp.ne.s32.totalorder %s206, %s208
      %p215 = scmp.eq.s32.totalorder %s46, 1
      %p216 = por %p214, %p215
      %p217 = scmp.ne.s32.totalorder %s208, %s209
      %p218 = scmp.eq.s32.totalorder %s46, 0
      %p219 = por %p217, %p218
      %p220 = scmp.ne.s32.totalorder %s208, %s209
      %p221 = scmp.eq.s32.totalorder %s47, 1
      %p222 = por %p220, %p221
      %p224 = scmp.ne.s32.totalorder %s209, %s223
      %p225 = scmp.eq.s32.totalorder %s47, 0
      %p226 = por %p224, %p225
      %s228 = sadd.s32 %s227, 1
      %p231 = scmp.eq.s32.totalorder %s41, 1
      %p232 = scmp.ne.s32.totalorder %s227, %s229
      %p233 = scmp.eq.s32.totalorder %s41, 0
      %p234 = por %p232, %p233
      %p235 = scmp.ne.s32.totalorder %s227, %s229
      %p236 = scmp.eq.s32.totalorder %s46, 1
      %p237 = por %p235, %p236
      %p238 = scmp.ne.s32.totalorder %s229, %s230
      %p239 = scmp.eq.s32.totalorder %s46, 0
      %p240 = por %p238, %p239
      %p241 = scmp.ne.s32.totalorder %s229, %s230
      %p242 = scmp.eq.s32.totalorder %s47, 1
      %p243 = por %p241, %p242
      %p245 = scmp.ne.s32.totalorder %s230, %s244
      %p246 = scmp.eq.s32.totalorder %s47, 0
      %p247 = por %p245, %p246
      %s249 = sadd.s32 %s248, 1
      %p252 = scmp.eq.s32.totalorder %s41, 1
      %p253 = scmp.ne.s32.totalorder %s248, %s250
      %p254 = scmp.eq.s32.totalorder %s41, 0
      %p255 = por %p253, %p254
      %p256 = scmp.ne.s32.totalorder %s248, %s250
      %p257 = scmp.eq.s32.totalorder %s46, 1
      %p258 = por %p256, %p257
      %p259 = scmp.ne.s32.totalorder %s250, %s251
      %p260 = scmp.eq.s32.totalorder %s46, 0
      %p261 = por %p259, %p260
      %p262 = scmp.ne.s32.totalorder %s250, %s251
      %p263 = scmp.eq.s32.totalorder %s47, 1
      %p264 = por %p262, %p263
      %p266 = scmp.ne.s32.totalorder %s251, %s265
      %p267 = scmp.eq.s32.totalorder %s47, 0
      %p268 = por %p266, %p267
      %s270 = sadd.s32 %s269, 1
      %p273 = scmp.eq.s32.totalorder %s41, 1
      %p274 = scmp.ne.s32.totalorder %s269, %s271
      %p275 = scmp.eq.s32.totalorder %s41, 0
      %p276 = por %p274, %p275
      %p277 = scmp.ne.s32.totalorder %s269, %s271
      %p278 = scmp.eq.s32.totalorder %s46, 1
      %p279 = por %p277, %p278
      %p280 = scmp.ne.s32.totalorder %s271, %s272
      %p281 = scmp.eq.s32.totalorder %s46, 0
      %p282 = por %p280, %p281
      %p283 = scmp.ne.s32.totalorder %s271, %s272
      %p284 = scmp.eq.s32.totalorder %s47, 1
      %p285 = por %p283, %p284
      %p287 = scmp.ne.s32.totalorder %s272, %s286
      %p288 = scmp.eq.s32.totalorder %s47, 0
      %p289 = por %p287, %p288
      %s291 = sadd.s32 %s290, 1
      %p294 = scmp.eq.s32.totalorder %s41, 1
      %p295 = scmp.ne.s32.totalorder %s290, %s292
      %p296 = scmp.eq.s32.totalorder %s41, 0
      %p297 = por %p295, %p296
      %p298 = scmp.ne.s32.totalorder %s290, %s292
      %p299 = scmp.eq.s32.totalorder %s46, 1
      %p300 = por %p298, %p299
      %p301 = scmp.ne.s32.totalorder %s292, %s293
      %p302 = scmp.eq.s32.totalorder %s46, 0
      %p303 = por %p301, %p302
      %p304 = scmp.ne.s32.totalorder %s292, %s293
      %p305 = scmp.eq.s32.totalorder %s47, 1
      %p306 = por %p304, %p305
      %p308 = scmp.ne.s32.totalorder %s293, %s307
      %p309 = scmp.eq.s32.totalorder %s47, 0
      %p310 = por %p308, %p309
      %s312 = sadd.s32 %s311, 1
      %p315 = scmp.eq.s32.totalorder %s41, 1
      %p316 = scmp.ne.s32.totalorder %s311, %s313
      %p317 = scmp.eq.s32.totalorder %s41, 0
      %p318 = por %p316, %p317
      %p319 = scmp.ne.s32.totalorder %s311, %s313
      %p320 = scmp.eq.s32.totalorder %s46, 1
      %p321 = por %p319, %p320
      %p322 = scmp.ne.s32.totalorder %s313, %s314
      %p323 = scmp.eq.s32.totalorder %s46, 0
      %p324 = por %p322, %p323
      %p325 = scmp.ne.s32.totalorder %s313, %s314
      %p326 = scmp.eq.s32.totalorder %s47, 1
      %p327 = por %p325, %p326
      %p329 = scmp.ne.s32.totalorder %s314, %s328
      %p330 = scmp.eq.s32.totalorder %s47, 0
      %p331 = por %p329, %p330
      %s333 = sadd.s32 %s332, 1
      %p336 = scmp.eq.s32.totalorder %s41, 1
      %p337 = scmp.ne.s32.totalorder %s332, %s334
      %p338 = scmp.eq.s32.totalorder %s41, 0
      %p339 = por %p337, %p338
      %p340 = scmp.ne.s32.totalorder %s332, %s334
      %p341 = scmp.eq.s32.totalorder %s46, 1
      %p342 = por %p340, %p341
      %p343 = scmp.ne.s32.totalorder %s334, %s335
      %p344 = scmp.eq.s32.totalorder %s46, 0
      %p345 = por %p343, %p344
      %p346 = scmp.ne.s32.totalorder %s334, %s335
      %p347 = scmp.eq.s32.totalorder %s47, 1
      %p348 = por %p346, %p347
      %p350 = scmp.ne.s32.totalorder %s335, %s349
      %p351 = scmp.eq.s32.totalorder %s47, 0
      %p352 = por %p350, %p351
      %s354 = sadd.s32 %s353, 1
      %p357 = scmp.eq.s32.totalorder %s41, 1
      %p358 = scmp.ne.s32.totalorder %s353, %s355
      %p359 = scmp.eq.s32.totalorder %s41, 0
      %p360 = por %p358, %p359
      %p361 = scmp.ne.s32.totalorder %s353, %s355
      %p362 = scmp.eq.s32.totalorder %s46, 1
      %p363 = por %p361, %p362
      %p364 = scmp.ne.s32.totalorder %s355, %s356
      %p365 = scmp.eq.s32.totalorder %s46, 0
      %p366 = por %p364, %p365
      %p367 = scmp.ne.s32.totalorder %s355, %s356
      %p368 = scmp.eq.s32.totalorder %s47, 1
      %p369 = por %p367, %p368
      %p371 = scmp.ne.s32.totalorder %s356, %s370
      %p372 = scmp.eq.s32.totalorder %s47, 0
      %p373 = por %p371, %p372
      %s375 = sadd.s32 %s374, 1
      %p378 = scmp.eq.s32.totalorder %s41, 1
      %p379 = scmp.ne.s32.totalorder %s374, %s376
      %p380 = scmp.eq.s32.totalorder %s41, 0
      %p381 = por %p379, %p380
      %p382 = scmp.ne.s32.totalorder %s374, %s376
      %p383 = scmp.eq.s32.totalorder %s46, 1
      %p384 = por %p382, %p383
      %p385 = scmp.ne.s32.totalorder %s376, %s377
      %p386 = scmp.eq.s32.totalorder %s46, 0
      %p387 = por %p385, %p386
      %p388 = scmp.ne.s32.totalorder %s376, %s377
      %p389 = scmp.eq.s32.totalorder %s47, 1
      %p390 = por %p388, %p389
      %p392 = scmp.ne.s32.totalorder %s377, %s391
      %p393 = scmp.eq.s32.totalorder %s47, 0
      %p394 = por %p392, %p393
      %s396 = sadd.s32 %s395, 1
      %p399 = scmp.eq.s32.totalorder %s41, 1
      %p400 = scmp.ne.s32.totalorder %s395, %s397
      %p401 = scmp.eq.s32.totalorder %s41, 0
      %p402 = por %p400, %p401
      %p403 = scmp.ne.s32.totalorder %s395, %s397
      %p404 = scmp.eq.s32.totalorder %s46, 1
      %p405 = por %p403, %p404
      %p406 = scmp.ne.s32.totalorder %s397, %s398
      %p407 = scmp.eq.s32.totalorder %s46, 0
      %p408 = por %p406, %p407
      %p409 = scmp.ne.s32.totalorder %s397, %s398
      %p410 = scmp.eq.s32.totalorder %s47, 1
      %p411 = por %p409, %p410
      %p413 = scmp.ne.s32.totalorder %s398, %s412
      %p414 = scmp.eq.s32.totalorder %s47, 0
      %p415 = por %p413, %p414
      %s417 = sadd.s32 %s416, 1
      %p420 = scmp.eq.s32.totalorder %s41, 1
      %p421 = scmp.ne.s32.totalorder %s416, %s418
      %p422 = scmp.eq.s32.totalorder %s41, 0
      %p423 = por %p421, %p422
      %p424 = scmp.ne.s32.totalorder %s416, %s418
      %p425 = scmp.eq.s32.totalorder %s46, 1
      %p426 = por %p424, %p425
      %p427 = scmp.ne.s32.totalorder %s418, %s419
      %p428 = scmp.eq.s32.totalorder %s46, 0
      %p429 = por %p427, %p428
      %p430 = scmp.ne.s32.totalorder %s418, %s419
      %p431 = scmp.eq.s32.totalorder %s47, 1
      %p432 = por %p430, %p431
      %p434 = scmp.ne.s32.totalorder %s419, %s433
      %p435 = scmp.eq.s32.totalorder %s47, 0
      %p436 = por %p434, %p435
      %s437 = ssub.s32 %s41, %s48
      %p438 = scmp.eq.s32.totalorder %s437, 0
      %s440 = sadd.s32 %s439, 1
      %s441 = scalar_select %p438, %s439, %s440
      %p444 = pneg %p438
      %p445 = scmp.eq.s32.totalorder %s41, 1
      %p446 = por %p444, %p445
      %p447 = scmp.ne.s32.totalorder %s439, %s442
      %p448 = scmp.eq.s32.totalorder %s41, 0
      %p449 = por %p447, %p448
      %p450 = scmp.ne.s32.totalorder %s439, %s442
      %p451 = scmp.eq.s32.totalorder %s46, 1
      %p452 = por %p450, %p451
      %p453 = scmp.ne.s32.totalorder %s442, %s443
      %p454 = scmp.eq.s32.totalorder %s46, 0
      %p455 = por %p453, %p454
      %p456 = scmp.ne.s32.totalorder %s442, %s443
      %p457 = scmp.eq.s32.totalorder %s47, 1
      %p458 = por %p456, %p457
      %p460 = scmp.ne.s32.totalorder %s443, %s459
      %p461 = scmp.eq.s32.totalorder %s47, 0
      %p462 = por %p460, %p461
      %s463 = ssub.s32 %s41, %s48
      %p464 = scmp.eq.s32.totalorder %s463, 0
      %s466 = sadd.s32 %s465, 1
      %s467 = scalar_select %p464, %s465, %s466
      %p470 = pneg %p464
      %p471 = scmp.eq.s32.totalorder %s41, 1
      %p472 = por %p470, %p471
      %p473 = scmp.ne.s32.totalorder %s465, %s468
      %p474 = scmp.eq.s32.totalorder %s41, 0
      %p475 = por %p473, %p474
      %p476 = scmp.ne.s32.totalorder %s465, %s468
      %p477 = scmp.eq.s32.totalorder %s46, 1
      %p478 = por %p476, %p477
      %p479 = scmp.ne.s32.totalorder %s468, %s469
      %p480 = scmp.eq.s32.totalorder %s46, 0
      %p481 = por %p479, %p480
      %p482 = scmp.ne.s32.totalorder %s468, %s469
      %p483 = scmp.eq.s32.totalorder %s47, 1
      %p484 = por %p482, %p483
      %p486 = scmp.ne.s32.totalorder %s469, %s485
      %p487 = scmp.eq.s32.totalorder %s47, 0
      %p488 = por %p486, %p487
      %p489 = scmp.le.s32.totalorder 1, %s41
      %p490 = scmp.lt.s32.totalorder %s41, 3
      %p491 = pnand %p489, %p490
      %p492 = pneg %p491
      // Predicated region
      $region9: #{tpu_custom_call.1} parent=5 // pred_check
        _
      $region10: #{tpu_custom_call.1} parent=5 // pred_check_branch
        %494 = sbr.rel (%p491) target = $region12
      $region11: #{tpu_custom_call.1} parent=5 // pred_region
        %s495 = ssub.s32 %s41, 1
        // Predicated region
        $region13: #{tpu_custom_call.1} parent=11 // pred_check
          %p496 = pneg %p114
        $region14: #{tpu_custom_call.1} parent=11 // pred_check_branch
          %498 = sbr.rel (%p496) target = $region16
        $region15: #{tpu_custom_call.1} parent=11 // pred_region
          %s500 = ssub.s32 16, 16
          %501 = vsyncadd [#allocation6], %s500
          %s503 = sshll.u32 [#allocation7], 4
          %s504 = int_to_ptr.vmem [resolvable:$true] %s503
          %506 = dma.hbm_to_vmem [thread:$0]  %s2, 16, %s504, [#allocation6]
        $region16: #{tpu_custom_call.1} parent=11 // pred_fallthru
          _
        // Predicated region
        $region17: #{tpu_custom_call.1} parent=11 // pred_check
          %p507 = pneg %p135
        $region18: #{tpu_custom_call.1} parent=11 // pred_check_branch
          %509 = sbr.rel (%p507) target = $region20
        $region19: #{tpu_custom_call.1} parent=11 // pred_region
          %s511 = ssub.s32 16, 16
          %512 = vsyncadd [#allocation9], %s511
          %s514 = sshll.u32 [#allocation8], 4
          %s515 = int_to_ptr.vmem [resolvable:$true] %s514
          %517 = dma.hbm_to_vmem [thread:$0]  %s3, 16, %s515, [#allocation9]
        $region20: #{tpu_custom_call.1} parent=11 // pred_fallthru
          _
        // Predicated region
        $region21: #{tpu_custom_call.1} parent=11 // pred_check
          %p518 = pneg %p156
        $region22: #{tpu_custom_call.1} parent=11 // pred_check_branch
          %520 = sbr.rel (%p518) target = $region24
        $region23: #{tpu_custom_call.1} parent=11 // pred_region
          %s522 = ssub.s32 12288, 12288
          %523 = vsyncadd [#allocation9], %s522
          %s524 = sshll.u32 [#allocation10], 4
          %s525 = int_to_ptr.vmem [resolvable:$true] %s524
          %530 = dma.hbm_to_vmem [thread:$0]  %s4, 12288, %s525, [#allocation9], 384, 384, 24
        $region24: #{tpu_custom_call.1} parent=11 // pred_fallthru
          _
        // Predicated region
        $region25: #{tpu_custom_call.1} parent=11 // pred_check
          %p531 = pneg %p177
        $region26: #{tpu_custom_call.1} parent=11 // pred_check_branch
          %533 = sbr.rel (%p531) target = $region28
        $region27: #{tpu_custom_call.1} parent=11 // pred_region
          _
        $region28: #{tpu_custom_call.1} parent=11 // pred_fallthru
          _
        // Predicated region
        $region29: #{tpu_custom_call.1} parent=11 // pred_check
          %p534 = pneg %p198
        $region30: #{tpu_custom_call.1} parent=11 // pred_check_branch
          %536 = sbr.rel (%p534) target = $region32
        $region31: #{tpu_custom_call.1} parent=11 // pred_region
          %s538 = ssub.s32 4096, 4096
          %539 = vsyncadd [#allocation12], %s538
          %s540 = sshll.u32 [#allocation11], 4
          %s541 = int_to_ptr.vmem [resolvable:$true] %s540
          %546 = dma.hbm_to_vmem [thread:$0]  %s6, 4096, %s541, [#allocation12], 128, 128, 8
        $region32: #{tpu_custom_call.1} parent=11 // pred_fallthru
          _
        // Predicated region
        $region33: #{tpu_custom_call.1} parent=11 // pred_check
          %p547 = pneg %p219
        $region34: #{tpu_custom_call.1} parent=11 // pred_check_branch
          %549 = sbr.rel (%p547) target = $region36
        $region35: #{tpu_custom_call.1} parent=11 // pred_region
          _
        $region36: #{tpu_custom_call.1} parent=11 // pred_fallthru
          _
        // Predicated region
        $region37: #{tpu_custom_call.1} parent=11 // pred_check
          %p550 = pneg %p240
        $region38: #{tpu_custom_call.1} parent=11 // pred_check_branch
          %552 = sbr.rel (%p550) target = $region40
        $region39: #{tpu_custom_call.1} parent=11 // pred_region
          _
        $region40: #{tpu_custom_call.1} parent=11 // pred_fallthru
          _
        // Predicated region
        $region41: #{tpu_custom_call.1} parent=11 // pred_check
          %p553 = pneg %p261
        $region42: #{tpu_custom_call.1} parent=11 // pred_check_branch
          %555 = sbr.rel (%p553) target = $region44
        $region43: #{tpu_custom_call.1} parent=11 // pred_region
          _
        $region44: #{tpu_custom_call.1} parent=11 // pred_fallthru
          _
        // Predicated region
        $region45: #{tpu_custom_call.1} parent=11 // pred_check
          %p556 = pneg %p282
        $region46: #{tpu_custom_call.1} parent=11 // pred_check_branch
          %558 = sbr.rel (%p556) target = $region48
        $region47: #{tpu_custom_call.1} parent=11 // pred_region
          %s560 = ssub.s32 8192, 8192
          %561 = vsyncadd [#allocation12], %s560
          %s562 = sshll.u32 [#allocation13], 4
          %s563 = int_to_ptr.vmem [resolvable:$true] %s562
          %568 = dma.hbm_to_vmem [thread:$0]  %s10, 8192, %s563, [#allocation12], 256, 256, 16
        $region48: #{tpu_custom_call.1} parent=11 // pred_fallthru
          _
        // Predicated region
        $region49: #{tpu_custom_call.1} parent=11 // pred_check
          %p569 = pneg %p303
        $region50: #{tpu_custom_call.1} parent=11 // pred_check_branch
          %571 = sbr.rel (%p569) target = $region52
        $region51: #{tpu_custom_call.1} parent=11 // pred_region
          _
        $region52: #{tpu_custom_call.1} parent=11 // pred_fallthru
          _
        // Predicated region
        $region53: #{tpu_custom_call.1} parent=11 // pred_check
          %p572 = pneg %p324
        $region54: #{tpu_custom_call.1} parent=11 // pred_check_branch
          %574 = sbr.rel (%p572) target = $region56
        $region55: #{tpu_custom_call.1} parent=11 // pred_region
          %s576 = ssub.s32 8192, 8192
          %577 = vsyncadd [#allocation15], %s576
          %s578 = sshll.u32 [#allocation14], 4
          %s579 = int_to_ptr.vmem [resolvable:$true] %s578
          %584 = dma.hbm_to_vmem [thread:$0]  %s12, 8192, %s579, [#allocation15], 128, 128, 8
        $region56: #{tpu_custom_call.1} parent=11 // pred_fallthru
          _
        // Predicated region
        $region57: #{tpu_custom_call.1} parent=11 // pred_check
          %p585 = pneg %p345
        $region58: #{tpu_custom_call.1} parent=11 // pred_check_branch
          %587 = sbr.rel (%p585) target = $region60
        $region59: #{tpu_custom_call.1} parent=11 // pred_region
          _
        $region60: #{tpu_custom_call.1} parent=11 // pred_fallthru
          _
        // Predicated region
        $region61: #{tpu_custom_call.1} parent=11 // pred_check
          %p588 = pneg %p366
        $region62: #{tpu_custom_call.1} parent=11 // pred_check_branch
          %590 = sbr.rel (%p588) target = $region64
        $region63: #{tpu_custom_call.1} parent=11 // pred_region
          _
        $region64: #{tpu_custom_call.1} parent=11 // pred_fallthru
          _
        // Predicated region
        $region65: #{tpu_custom_call.1} parent=11 // pred_check
          %p591 = pneg %p387
        $region66: #{tpu_custom_call.1} parent=11 // pred_check_branch
          %593 = sbr.rel (%p591) target = $region68
        $region67: #{tpu_custom_call.1} parent=11 // pred_region
          _
        $region68: #{tpu_custom_call.1} parent=11 // pred_fallthru
          _
        // Predicated region
        $region69: #{tpu_custom_call.1} parent=11 // pred_check
          %p594 = pneg %p408
        $region70: #{tpu_custom_call.1} parent=11 // pred_check_branch
          %596 = sbr.rel (%p594) target = $region72
        $region71: #{tpu_custom_call.1} parent=11 // pred_region
          %s598 = ssub.s32 2048, 2048
          %599 = vsyncadd [#allocation15], %s598
          %s600 = sshll.u32 [#allocation16], 4
          %s601 = int_to_ptr.vmem [resolvable:$true] %s600
          %606 = dma.hbm_to_vmem [thread:$0]  %s16, 2048, %s601, [#allocation15], 128, 128, 8
        $region72: #{tpu_custom_call.1} parent=11 // pred_fallthru
          _
        // Predicated region
        $region73: #{tpu_custom_call.1} parent=11 // pred_check
          %p607 = pneg %p429
        $region74: #{tpu_custom_call.1} parent=11 // pred_check_branch
          %609 = sbr.rel (%p607) target = $region76
        $region75: #{tpu_custom_call.1} parent=11 // pred_region
          _
        $region76: #{tpu_custom_call.1} parent=11 // pred_fallthru
          _
      $region12: #{tpu_custom_call.1} parent=5 // pred_fallthru
        _
      %p610 = scmp.lt.s32.totalorder %s41, 2
      // Predicated region
      $region77: #{tpu_custom_call.1} parent=5 // pred_check
        %p611 = pneg %p610
      $region78: #{tpu_custom_call.1} parent=5 // pred_check_branch
        %613 = sbr.rel (%p611) target = $region80
      $region79: #{tpu_custom_call.1} parent=5 // pred_region
        // Predicated region
        $region81: #{tpu_custom_call.1} parent=79 // pred_check
          %p614 = pneg %p61
        $region82: #{tpu_custom_call.1} parent=79 // pred_check_branch
          %616 = sbr.rel (%p614) target = $region84
        $region83: #{tpu_custom_call.1} parent=79 // pred_region
          %s617 = sand.u32 %s51, 1
          %s618 = scalar_lea.sflag [#allocation3], %s617
          %s619 = sand.u32 %s51, 1
          %s620 = smul.addr %s619, 16
          %s621 = scalar_lea.vmem [#allocation2], %s620
          %s623 = ssub.s32 256, 256
          %624 = vsyncadd %s618, %s623
          %s625 = smul.addr %s41, 2
          %s626 = smul.addr %s625, 128
          %s627 = scalar_lea.hbm %s0, %s626
          %s628 = sshll.u32 %s621, 4
          %s629 = int_to_ptr.vmem [resolvable:$true] %s628
          %634 = dma.hbm_to_vmem [thread:$0]  %s627, 256, %s629, %s618, 128, 128, 8
        $region84: #{tpu_custom_call.1} parent=79 // pred_fallthru
          _
        // Predicated region
        $region85: #{tpu_custom_call.1} parent=79 // pred_check
          %p635 = pneg %p87
        $region86: #{tpu_custom_call.1} parent=79 // pred_check_branch
          %637 = sbr.rel (%p635) target = $region88
        $region87: #{tpu_custom_call.1} parent=79 // pred_region
          %s638 = sand.u32 %s41, 1
          %s639 = scalar_lea.sflag [#allocation6], %s638
          %s640 = sand.u32 %s77, 1
          %s641 = scalar_lea.vmem [#allocation5], %s640
          %s643 = ssub.s32 16, 16
          %644 = vsyncadd %s639, %s643
          %s645 = smul.addr %s41, 16
          %s646 = scalar_lea.hbm %s1, %s645
          %s648 = sshll.u32 %s641, 4
          %s649 = int_to_ptr.vmem [resolvable:$true] %s648
          %651 = dma.hbm_to_vmem [thread:$0]  %s646, 16, %s649, %s639
        $region88: #{tpu_custom_call.1} parent=79 // pred_fallthru
          _
      $region80: #{tpu_custom_call.1} parent=5 // pred_fallthru
        _
      %p652 = scmp.le.s32.totalorder 1, %s41
      %p653 = scmp.lt.s32.totalorder %s41, 3
      %p654 = pnand %p652, %p653
      %p655 = pneg %p654
      // Predicated region
      $region89: #{tpu_custom_call.1} parent=5 // pred_check
        _
      $region90: #{tpu_custom_call.1} parent=5 // pred_check_branch
        %657 = sbr.rel (%p654) target = $region92
      $region91: #{tpu_custom_call.1} parent=5 // pred_region
        %s658 = ssub.s32 %s41, 1
        %s659 = sand.u32 %s54, 1
        %s660 = scalar_lea.sflag [#allocation3], %s659
        %s661 = sand.u32 %s54, 1
        %s662 = smul.addr %s661, 16
        %s663 = scalar_lea.vmem [#allocation2], %s662
        // Predicated region
        $region93: #{tpu_custom_call.1} parent=91 // pred_check
          %p664 = pneg %p67
        $region94: #{tpu_custom_call.1} parent=91 // pred_check_branch
          %666 = sbr.rel (%p664) target = $region96
        $region95: #{tpu_custom_call.1} parent=91 // pred_region
          %667 = dma.done %s660, 256
        $region96: #{tpu_custom_call.1} parent=91 // pred_fallthru
          _
        %s668 = sand.u32 %s46, 1
        %s669 = scalar_lea.sflag [#allocation6], %s668
        %s670 = sand.u32 %s80, 1
        %s671 = scalar_lea.vmem [#allocation5], %s670
        // Predicated region
        $region97: #{tpu_custom_call.1} parent=91 // pred_check
          %p672 = pneg %p93
        $region98: #{tpu_custom_call.1} parent=91 // pred_check_branch
          %674 = sbr.rel (%p672) target = $region100
        $region99: #{tpu_custom_call.1} parent=91 // pred_region
          %675 = dma.done %s669, 16
        $region100: #{tpu_custom_call.1} parent=91 // pred_fallthru
          _
        // Predicated region
        $region101: #{tpu_custom_call.1} parent=91 // pred_check
          %p676 = pneg %p114
        $region102: #{tpu_custom_call.1} parent=91 // pred_check_branch
          %678 = sbr.rel (%p676) target = $region104
        $region103: #{tpu_custom_call.1} parent=91 // pred_region
          %679 = dma.done [#allocation6], 16
        $region104: #{tpu_custom_call.1} parent=91 // pred_fallthru
          _
        // Predicated region
        $region105: #{tpu_custom_call.1} parent=91 // pred_check
          %p680 = pneg %p135
        $region106: #{tpu_custom_call.1} parent=91 // pred_check_branch
          %682 = sbr.rel (%p680) target = $region108
        $region107: #{tpu_custom_call.1} parent=91 // pred_region
          %683 = dma.done [#allocation9], 16
        $region108: #{tpu_custom_call.1} parent=91 // pred_fallthru
          _
        // Predicated region
        $region109: #{tpu_custom_call.1} parent=91 // pred_check
          %p684 = pneg %p156
        $region110: #{tpu_custom_call.1} parent=91 // pred_check_branch
          %686 = sbr.rel (%p684) target = $region112
        $region111: #{tpu_custom_call.1} parent=91 // pred_region
          %687 = dma.done [#allocation9], 12288
        $region112: #{tpu_custom_call.1} parent=91 // pred_fallthru
          _
        // Predicated region
        $region113: #{tpu_custom_call.1} parent=91 // pred_check
          %p688 = pneg %p198
        $region114: #{tpu_custom_call.1} parent=91 // pred_check_branch
          %690 = sbr.rel (%p688) target = $region116
        $region115: #{tpu_custom_call.1} parent=91 // pred_region
          %691 = dma.done [#allocation12], 4096
        $region116: #{tpu_custom_call.1} parent=91 // pred_fallthru
          _
        // Predicated region
        $region117: #{tpu_custom_call.1} parent=91 // pred_check
          %p692 = pneg %p282
        $region118: #{tpu_custom_call.1} parent=91 // pred_check_branch
          %694 = sbr.rel (%p692) target = $region120
        $region119: #{tpu_custom_call.1} parent=91 // pred_region
          %695 = dma.done [#allocation12], 8192
        $region120: #{tpu_custom_call.1} parent=91 // pred_fallthru
          _
        // Predicated region
        $region121: #{tpu_custom_call.1} parent=91 // pred_check
          %p696 = pneg %p324
        $region122: #{tpu_custom_call.1} parent=91 // pred_check_branch
          %698 = sbr.rel (%p696) target = $region124
        $region123: #{tpu_custom_call.1} parent=91 // pred_region
          %699 = dma.done [#allocation15], 8192
        $region124: #{tpu_custom_call.1} parent=91 // pred_fallthru
          _
        // Predicated region
        $region125: #{tpu_custom_call.1} parent=91 // pred_check
          %p700 = pneg %p408
        $region126: #{tpu_custom_call.1} parent=91 // pred_check_branch
          %702 = sbr.rel (%p700) target = $region128
        $region127: #{tpu_custom_call.1} parent=91 // pred_region
          %703 = dma.done [#allocation15], 2048
        $region128: #{tpu_custom_call.1} parent=91 // pred_fallthru
          _
        %s704 = sand.u32 %s54, 1
        %s705 = scalar_lea.sflag [#allocation3], %s704
        %s706 = sand.u32 %s54, 1
        %s707 = smul.addr %s706, 16
        %s708 = scalar_lea.vmem [#allocation2], %s707
        %p709 = pneg %p67
        %p710 = pneg %p64
        %s711 = sand.u32 %s46, 1
        %s712 = scalar_lea.sflag [#allocation6], %s711
        %s713 = sand.u32 %s80, 1
        %s714 = scalar_lea.vmem [#allocation5], %s713
        %p715 = pneg %p93
        %p716 = pneg %p90
        %p717 = pneg %p114
        %p718 = pneg %p111
        %p719 = pneg %p135
        %p720 = pneg %p132
        %p721 = pneg %p156
        %p722 = pneg %p153
        %p723 = pneg %p177
        %p724 = pneg %p174
        %p725 = pneg %p198
        %p726 = pneg %p195
        %p727 = pneg %p219
        %p728 = pneg %p216
        %p729 = pneg %p240
        %p730 = pneg %p237
        %p731 = pneg %p261
        %p732 = pneg %p258
        %p733 = pneg %p282
        %p734 = pneg %p279
        %p735 = pneg %p303
        %p736 = pneg %p300
        %p737 = pneg %p324
        %p738 = pneg %p321
        %p739 = pneg %p345
        %p740 = pneg %p342
        %p741 = pneg %p366
        %p742 = pneg %p363
        %p743 = pneg %p387
        %p744 = pneg %p384
        %p745 = pneg %p408
        %p746 = pneg %p405
        %p747 = pneg %p429
        %p748 = pneg %p426
        %p749 = pneg %p455
        %p750 = pneg %p452
        %s751 = sand.u32 %s442, 1
        %s752 = scalar_lea.sflag [#allocation4], %s751
        %s753 = sand.u32 %s442, 1
        %s754 = smul.addr %s753, 16
        %s755 = scalar_lea.vmem [#allocation17], %s754
        %p756 = pneg %p481
        %p757 = pneg %p478
        %s758 = sand.u32 %s468, 1
        %s759 = scalar_lea.sflag [#allocation19], %s758
        %s760 = sand.u32 %s468, 1
        %s761 = smul.addr %s760, 16
        %s762 = scalar_lea.vmem [#allocation18], %s761
        %v763 = vld [vmem:[%s671] sm:$0x1]
        %v764 = vld [vmem:[%s663] sm:$0xff]
        %v765 = vld [vmem:[%s663 + $0x8] sm:$0xff]
        %v766 = vld [vmem:[#allocation7] sm:$0x1]
        %v767 = vld [vmem:[#allocation8] sm:$0x1]
        %768 = vadd.xlane.f32.xlu0 %v764
        %v769 = vpop.xlane.xlu0 %768
        %770 = vadd.xlane.f32.xlu0 %v765
        %v771 = vpop.xlane.xlu0 %770
        %v772 = vrcp.pop 128.0
        %v773 = vmul.f32 %v769, %v772
        %v774 = vmul.f32 %v771, %v772
        %v775 = vsub.f32 %v764, %v773
        %v776 = vsub.f32 %v765, %v774
        %v777 = vmul.f32 %v775, %v775
        %v778 = vmul.f32 %v776, %v776
        %779 = vadd.xlane.f32.xlu0 %v777
        %v780 = vpop.xlane.xlu0 %779
        %781 = vadd.xlane.f32.xlu0 %v778
        %v782 = vpop.xlane.xlu0 %781
        %v783 = vmul.f32 %v780, %v772
        %v784 = vmul.f32 %v782, %v772
        %v785 = vadd.f32 %v783, 1e-12
        %v786 = vadd.f32 %v784, 1e-12
        %v787 = vrsqrt.pop %v785
        %v788 = vrsqrt.pop %v786
        %v789 = vmul.f32 %v775, %v787
        %v790 = vmul.f32 %v776, %v788
        %v792 = vlaneseq
        %v793 = vshrl.u32 %v792, 7
        %v794 = vsub.s32 0, %v793
        %v795 = vrot.slane %v766, %v794
        %v797 = vmul.f32 %v795, %v789
        %v798 = vmul.f32 %v795, %v790
        %v800 = vlaneseq
        %v801 = vshrl.u32 %v800, 7
        %v802 = vsub.s32 0, %v801
        %v803 = vrot.slane %v767, %v802
        %v805 = vadd.f32 %v797, %v803
        %v806 = vadd.f32 %v798, %v803
        %v807 = vld [vmem:[#allocation10] sm:$0xff]
        %v808 = vld [vmem:[#allocation10 + $0x8] sm:$0xff]
        %v809 = vld [vmem:[#allocation10 + $0x10] sm:$0xff]
        %v810 = vld [vmem:[#allocation10 + $0x18] sm:$0xff]
        %v811 = vld [vmem:[#allocation10 + $0x20] sm:$0xff]
        %v812 = vld [vmem:[#allocation10 + $0x28] sm:$0xff]
        %v813 = vld [vmem:[#allocation10 + $0x30] sm:$0xff]
        %v814 = vld [vmem:[#allocation10 + $0x38] sm:$0xff]
        %v815 = vld [vmem:[#allocation10 + $0x40] sm:$0xff]
        %v816 = vld [vmem:[#allocation10 + $0x48] sm:$0xff]
        %v817 = vld [vmem:[#allocation10 + $0x50] sm:$0xff]
        %v818 = vld [vmem:[#allocation10 + $0x58] sm:$0xff]
        %v819 = vld [vmem:[#allocation10 + $0x60] sm:$0xff]
        %v820 = vld [vmem:[#allocation10 + $0x68] sm:$0xff]
        %v821 = vld [vmem:[#allocation10 + $0x70] sm:$0xff]
        %v822 = vld [vmem:[#allocation10 + $0x78] sm:$0xff]
        %v823 = vld [vmem:[#allocation10 + $0x80] sm:$0xff]
        %v824 = vld [vmem:[#allocation10 + $0x88] sm:$0xff]
        %v825 = vld [vmem:[#allocation10 + $0x90] sm:$0xff]
        %v826 = vld [vmem:[#allocation10 + $0x98] sm:$0xff]
        %v827 = vld [vmem:[#allocation10 + $0xa0] sm:$0xff]
        %v828 = vld [vmem:[#allocation10 + $0xa8] sm:$0xff]
        %v829 = vld [vmem:[#allocation10 + $0xb0] sm:$0xff]
        %v830 = vld [vmem:[#allocation10 + $0xb8] sm:$0xff]
        %v831 = vld [vmem:[#allocation10 + $0xc0] sm:$0xff]
        %v832 = vld [vmem:[#allocation10 + $0xc8] sm:$0xff]
        %v833 = vld [vmem:[#allocation10 + $0xd0] sm:$0xff]
        %v834 = vld [vmem:[#allocation10 + $0xd8] sm:$0xff]
        %v835 = vld [vmem:[#allocation10 + $0xe0] sm:$0xff]
        %v836 = vld [vmem:[#allocation10 + $0xe8] sm:$0xff]
        %v837 = vld [vmem:[#allocation10 + $0xf0] sm:$0xff]
        %v838 = vld [vmem:[#allocation10 + $0xf8] sm:$0xff]
        %v839 = vld [vmem:[#allocation10 + $0x100] sm:$0xff]
        %v840 = vld [vmem:[#allocation10 + $0x108] sm:$0xff]
        %v841 = vld [vmem:[#allocation10 + $0x110] sm:$0xff]
        %v842 = vld [vmem:[#allocation10 + $0x118] sm:$0xff]
        %v843 = vld [vmem:[#allocation10 + $0x120] sm:$0xff]
        %v844 = vld [vmem:[#allocation10 + $0x128] sm:$0xff]
        %v845 = vld [vmem:[#allocation10 + $0x130] sm:$0xff]
        %v846 = vld [vmem:[#allocation10 + $0x138] sm:$0xff]
        %v847 = vld [vmem:[#allocation10 + $0x140] sm:$0xff]
        %v848 = vld [vmem:[#allocation10 + $0x148] sm:$0xff]
        %v849 = vld [vmem:[#allocation10 + $0x150] sm:$0xff]
        %v850 = vld [vmem:[#allocation10 + $0x158] sm:$0xff]
        %v851 = vld [vmem:[#allocation10 + $0x160] sm:$0xff]
        %v852 = vld [vmem:[#allocation10 + $0x168] sm:$0xff]
        %v853 = vld [vmem:[#allocation10 + $0x170] sm:$0xff]
        %v854 = vld [vmem:[#allocation10 + $0x178] sm:$0xff]
        %v855 = vld [vmem:[%s5] sm:$0x7]
        %v857 = vlaneseq
        %v858 = vshrl.u32 %v857, 7
        %v859 = vsub.s32 0, %v858
        %v860 = vrot.slane %v855, %v859
        %v861 = vlaneseq
        %v862 = vshrl.u32 %v861, 7
        %v863 = vsub.s32 1, %v862
        %v864 = vrot.slane %v855, %v863
        %v865 = vlaneseq
        %v866 = vshrl.u32 %v865, 7
        %v867 = vsub.s32 2, %v866
        %v868 = vrot.slane %v855, %v867
        %872 = vmatprep.subr.mxu0 %v853
        %873 = vmatpush1.msra.mxu0 %v852
        %874 = vmatprep.subr.mxu0 %v850
        %875 = vmatpush1.msra.mxu0 %v849
        %876 = vmatprep.subr.mxu0 %v847
        %877 = vmatpush1.msra.mxu0 %v846
        %878 = vmatprep.subr.mxu0 %v844
        %879 = vmatpush1.msra.mxu0 %v843
        %880 = vmatprep.subr.mxu0 %v841
        %881 = vmatpush1.msra.mxu0 %v840
        %882 = vmatprep.subr.mxu0 %v838
        %883 = vmatpush1.msra.mxu0 %v837
        %884 = vmatprep.subr.mxu0 %v835
        %885 = vmatpush1.msra.mxu0 %v834
        %886 = vmatprep.subr.mxu0 %v832
        %887 = vmatpush1.msra.mxu0 %v831
        %888 = vmatprep.subr.mxu0 %v829
        %889 = vmatpush1.msra.mxu0 %v828
        %890 = vmatprep.subr.mxu0 %v826
        %891 = vmatpush1.msra.mxu0 %v825
        %892 = vmatprep.subr.mxu0 %v823
        %893 = vmatpush1.msra.mxu0 %v822
        %894 = vmatprep.subr.mxu0 %v820
        %895 = vmatpush1.msra.mxu0 %v819
        %896 = vmatprep.subr.mxu0 %v817
        %897 = vmatpush1.msra.mxu0 %v816
        %898 = vmatprep.subr.mxu0 %v814
        %899 = vmatpush1.msra.mxu0 %v813
        %900 = vmatprep.subr.mxu0 %v811
        %901 = vmatpush1.msra.mxu0 %v810
        %902 = vmatprep.subr.mxu0 %v808
        %903 = vmatpush1.msra.mxu0 %v807
        %904 = vmatprep.subr.mxu0 0.0
        %905 = vmatpush2.msra.mxu0 0.0
        %906 = vmatprep.subr.mxu0 0.0
        %907 = vmatpush2.msra.mxu0 0.0
        %908 = vmatprep.subr.mxu0 0.0
        %909 = vmatpush2.msra.mxu0 0.0
        %910 = vmatprep.subr.mxu0 0.0
        %911 = vmatpush2.msra.mxu0 0.0
        %912 = vmatprep.subr.mxu0 0.0
        %913 = vmatpush2.msra.mxu0 0.0
        %914 = vmatprep.subr.mxu0 0.0
        %915 = vmatpush2.msra.mxu0 0.0
        %916 = vmatprep.subr.mxu0 0.0
        %917 = vmatpush2.msra.mxu0 0.0
        %918 = vmatprep.subr.mxu0 0.0
        %919 = vmatpush2.msra.mxu0 0.0
        %920 = vmatprep.subr.mxu0 0.0
        %921 = vmatpush2.msra.mxu0 0.0
        %922 = vmatprep.subr.mxu0 0.0
        %923 = vmatpush2.msra.mxu0 0.0
        %924 = vmatprep.subr.mxu0 0.0
        %925 = vmatpush2.msra.mxu0 0.0
        %926 = vmatprep.subr.mxu0 0.0
        %927 = vmatpush2.msra.mxu0 0.0
        %928 = vmatprep.subr.mxu0 0.0
        %929 = vmatpush2.msra.mxu0 0.0
        %930 = vmatprep.subr.mxu0 0.0
        %931 = vmatpush2.msra.mxu0 0.0
        %932 = vmatprep.subr.mxu0 0.0
        %933 = vmatpush2.msra.mxu0 0.0
        %934 = vmatprep.subr.mxu0 0.0
        %935 = vmatpush2.msra.mxu0 0.0
        %936 = vmatprep.mubr.f32.mxu0 0.0
        %937 = vmatmul.mubr.f32.gmra.mxu0 %v805
        %v938 = vpop.f32.mrf.mxu0
        %v939 = vadd.f32 %v860, %v938
        %v940 = vpop.f32.mrf.mxu0
        %v941 = vadd.f32 %v864, %v940
        %942 = vmatprep.mubr.f32.mxu0 0.0
        %943 = vmatmul.mubr.f32.gmra.mxu0 %v806
        %v944 = vpop.f32.mrf.mxu0
        %v945 = vadd.f32 %v860, %v944
        %v946 = vpop.f32.mrf.mxu0
        %v947 = vadd.f32 %v864, %v946
        %948 = vdwg.mxu0
        %949 = vmatprep.subr.mxu0 0.0
        %950 = vmatpush1.msra.mxu0 %v854
        %951 = vmatprep.subr.mxu0 0.0
        %952 = vmatpush1.msra.mxu0 %v851
        %953 = vmatprep.subr.mxu0 0.0
        %954 = vmatpush1.msra.mxu0 %v848
        %955 = vmatprep.subr.mxu0 0.0
        %956 = vmatpush1.msra.mxu0 %v845
        %957 = vmatprep.subr.mxu0 0.0
        %958 = vmatpush1.msra.mxu0 %v842
        %959 = vmatprep.subr.mxu0 0.0
        %960 = vmatpush1.msra.mxu0 %v839
        %961 = vmatprep.subr.mxu0 0.0
        %962 = vmatpush1.msra.mxu0 %v836
        %963 = vmatprep.subr.mxu0 0.0
        %964 = vmatpush1.msra.mxu0 %v833
        %965 = vmatprep.subr.mxu0 0.0
        %966 = vmatpush1.msra.mxu0 %v830
        %967 = vmatprep.subr.mxu0 0.0
        %968 = vmatpush1.msra.mxu0 %v827
        %969 = vmatprep.subr.mxu0 0.0
        %970 = vmatpush1.msra.mxu0 %v824
        %971 = vmatprep.subr.mxu0 0.0
        %972 = vmatpush1.msra.mxu0 %v821
        %973 = vmatprep.subr.mxu0 0.0
        %974 = vmatpush1.msra.mxu0 %v818
        %975 = vmatprep.subr.mxu0 0.0
        %976 = vmatpush1.msra.mxu0 %v815
        %977 = vmatprep.subr.mxu0 0.0
        %978 = vmatpush1.msra.mxu0 %v812
        %979 = vmatprep.subr.mxu0 0.0
        %980 = vmatpush1.msra.mxu0 %v809
        %981 = vmatprep.subr.mxu0 0.0
        %982 = vmatpush2.msra.mxu0 0.0
        %983 = vmatprep.subr.mxu0 0.0
        %984 = vmatpush2.msra.mxu0 0.0
        %985 = vmatprep.subr.mxu0 0.0
        %986 = vmatpush2.msra.mxu0 0.0
        %987 = vmatprep.subr.mxu0 0.0
        %988 = vmatpush2.msra.mxu0 0.0
        %989 = vmatprep.subr.mxu0 0.0
        %990 = vmatpush2.msra.mxu0 0.0
        %991 = vmatprep.subr.mxu0 0.0
        %992 = vmatpush2.msra.mxu0 0.0
        %993 = vmatprep.subr.mxu0 0.0
        %994 = vmatpush2.msra.mxu0 0.0
        %995 = vmatprep.subr.mxu0 0.0
        %996 = vmatpush2.msra.mxu0 0.0
        %997 = vmatprep.subr.mxu0 0.0
        %998 = vmatpush2.msra.mxu0 0.0
        %999 = vmatprep.subr.mxu0 0.0
        %1000 = vmatpush2.msra.mxu0 0.0
        %1001 = vmatprep.subr.mxu0 0.0
        %1002 = vmatpush2.msra.mxu0 0.0
        %1003 = vmatprep.subr.mxu0 0.0
        %1004 = vmatpush2.msra.mxu0 0.0
        %1005 = vmatprep.subr.mxu0 0.0
        %1006 = vmatpush2.msra.mxu0 0.0
        %1007 = vmatprep.subr.mxu0 0.0
        %1008 = vmatpush2.msra.mxu0 0.0
        %1009 = vmatprep.subr.mxu0 0.0
        %1010 = vmatpush2.msra.mxu0 0.0
        %1011 = vmatprep.subr.mxu0 0.0
        %1012 = vmatpush2.msra.mxu0 0.0
        %1013 = vmatprep.mubr.f32.mxu0 0.0
        %1014 = vmatmul.mubr.f32.gmra.mxu0 %v805
        %v1015 = vpop.f32.mrf.mxu0
        %v1016 = vadd.f32 %v868, %v1015
        %v1017 = vpop.f32.mrf.mxu0
        %1018 = vmatprep.mubr.f32.mxu0 0.0
        %1019 = vmatmul.mubr.f32.gmra.mxu0 %v806
        %v1020 = vpop.f32.mrf.mxu0
        %v1021 = vadd.f32 %v868, %v1020
        %v1022 = vpop.f32.mrf.mxu0
        %1023 = vdwg.mxu0
        %v1025 = vlaneseq
        %v1026 = vshrl.u32 %v1025, 7
        %v1027 = vsub.s32 0, %v1026
        %v1028 = vrot.slane %v763, %v1027
        %vm1030 = vcmask 261120
        %v1032 = vsel %vm1030, %v939, 0
        %v1035 = vsel %vm1030, %v945, 0
        %v1038 = vsel %vm1030, %v941, 0
        %v1041 = vsel %vm1030, %v947, 0
        %1043 = vmatprep.subr.mxu0 0.0
        %1044 = vmatpush1.xpose.msra.mxu0 0.0
        %1045 = vmatprep.subr.mxu0 0.0
        %1046 = vmatpush1.xpose.msra.mxu0 0.0
        %1047 = vmatprep.subr.mxu0 0.0
        %1048 = vmatpush1.xpose.msra.mxu0 0.0
        %1049 = vmatprep.subr.mxu0 0.0
        %1050 = vmatpush1.xpose.msra.mxu0 0.0
        %1051 = vmatprep.subr.mxu0 0.0
        %1052 = vmatpush1.xpose.msra.mxu0 0.0
        %1053 = vmatprep.subr.mxu0 0.0
        %1054 = vmatpush1.xpose.msra.mxu0 0.0
        %1055 = vmatprep.subr.mxu0 0.0
        %1056 = vmatpush1.xpose.msra.mxu0 0.0
        %1057 = vmatprep.subr.mxu0 0.0
        %1058 = vmatpush1.xpose.msra.mxu0 0.0
        %1059 = vmatprep.subr.mxu0 0.0
        %1060 = vmatpush1.xpose.msra.mxu0 0.0
        %1061 = vmatprep.subr.mxu0 0.0
        %1062 = vmatpush1.xpose.msra.mxu0 0.0
        %1063 = vmatprep.subr.mxu0 0.0
        %1064 = vmatpush1.xpose.msra.mxu0 0.0
        %1065 = vmatprep.subr.mxu0 0.0
        %1066 = vmatpush1.xpose.msra.mxu0 0.0
        %1067 = vmatprep.subr.mxu0 0.0
        %1068 = vmatpush1.xpose.msra.mxu0 0.0
        %1069 = vmatprep.subr.mxu0 0.0
        %1070 = vmatpush1.xpose.msra.mxu0 0.0
        %1071 = vmatprep.subr.mxu0 0.0
        %1072 = vmatpush1.xpose.msra.mxu0 %v1041
        %1073 = vmatprep.subr.mxu0 0.0
        %1074 = vmatpush1.xpose.msra.mxu0 %v1038
        %1075 = vmatprep.subr.mxu0 0.0
        %1076 = vmatpush2.xpose.msra.mxu0 0.0
        %1077 = vmatprep.subr.mxu0 0.0
        %1078 = vmatpush2.xpose.msra.mxu0 0.0
        %1079 = vmatprep.subr.mxu0 0.0
        %1080 = vmatpush2.xpose.msra.mxu0 0.0
        %1081 = vmatprep.subr.mxu0 0.0
        %1082 = vmatpush2.xpose.msra.mxu0 0.0
        %1083 = vmatprep.subr.mxu0 0.0
        %1084 = vmatpush2.xpose.msra.mxu0 0.0
        %1085 = vmatprep.subr.mxu0 0.0
        %1086 = vmatpush2.xpose.msra.mxu0 0.0
        %1087 = vmatprep.subr.mxu0 0.0
        %1088 = vmatpush2.xpose.msra.mxu0 0.0
        %1089 = vmatprep.subr.mxu0 0.0
        %1090 = vmatpush2.xpose.msra.mxu0 0.0
        %1091 = vmatprep.subr.mxu0 0.0
        %1092 = vmatpush2.xpose.msra.mxu0 0.0
        %1093 = vmatprep.subr.mxu0 0.0
        %1094 = vmatpush2.xpose.msra.mxu0 0.0
        %1095 = vmatprep.subr.mxu0 0.0
        %1096 = vmatpush2.xpose.msra.mxu0 0.0
        %1097 = vmatprep.subr.mxu0 0.0
        %1098 = vmatpush2.xpose.msra.mxu0 0.0
        %1099 = vmatprep.subr.mxu0 0.0
        %1100 = vmatpush2.xpose.msra.mxu0 0.0
        %1101 = vmatprep.subr.mxu0 0.0
        %1102 = vmatpush2.xpose.msra.mxu0 0.0
        %1103 = vmatprep.subr.mxu0 0.0
        %1104 = vmatpush2.xpose.msra.mxu0 0.0
        %1105 = vmatprep.subr.mxu0 0.0
        %1106 = vmatpush2.xpose.msra.mxu0 0.0
        %1107 = vmatprep.mubr.f32.mxu0 0.0
        %1108 = vmatmul.mubr.f32.gmra.mxu0 %v1032
        %v1109 = vpop.f32.mrf.mxu0
        %v1110 = vadd.f32 %v1028, %v1109
        %v1111 = vpop.f32.mrf.mxu0
        %1112 = vmatprep.mubr.f32.mxu0 0.0
        %1113 = vmatmul.mubr.f32.gmra.mxu0 %v1035
        %v1114 = vpop.f32.mrf.mxu0
        %v1115 = vadd.f32 %v1028, %v1114
        %v1116 = vpop.f32.mrf.mxu0
        %1117 = vdwg.mxu0
        %vm1118 = vcmask 130048
        %v1119 = vsel %vm1118, %v1110, -inf
        %1120 = vmax.xlane.f32.xlu0 %v1119
        %v1121 = vpop.xlane.xlu0 %1120
        %v1122 = vsel %vm1118, %v1115, -inf
        %1123 = vmax.xlane.f32.xlu0 %v1122
        %v1124 = vpop.xlane.xlu0 %1123
        %v1125 = vsub.f32 %v1110, %v1121
        %v1126 = vsub.f32 %v1115, %v1124
        %v1127 = vmul.f32 %v1125, 1.442695
        %v1128 = vpow.pop %v1127
        %v1129 = vmul.f32 %v1126, 1.442695
        %v1130 = vpow.pop %v1129
        %v1131 = vsel %vm1118, %v1128, 0.0
        %1132 = vadd.xlane.f32.xlu0 %v1131
        %v1133 = vpop.xlane.xlu0 %1132
        %v1134 = vsel %vm1118, %v1130, 0.0
        %1135 = vadd.xlane.f32.xlu0 %v1134
        %v1136 = vpop.xlane.xlu0 %1135
        %v1137 = vrcp.pop %v1133
        %v1138 = vrcp.pop %v1136
        %v1139 = vmul.f32 %v1128, %v1137
        %v1140 = vmul.f32 %v1130, %v1138
        %v1142 = vsel %vm1118, %v1139, 0
        %v1145 = vsel %vm1118, %v1140, 0
        %1147 = vmatprep.subr.mxu0 0.0
        %1148 = vmatpush1.msra.mxu0 0.0
        %1149 = vmatprep.subr.mxu0 0.0
        %1150 = vmatpush1.msra.mxu0 0.0
        %1151 = vmatprep.subr.mxu0 0.0
        %1152 = vmatpush1.msra.mxu0 0.0
        %1153 = vmatprep.subr.mxu0 0.0
        %1154 = vmatpush1.msra.mxu0 0.0
        %1155 = vmatprep.subr.mxu0 0.0
        %1156 = vmatpush1.msra.mxu0 0.0
        %1157 = vmatprep.subr.mxu0 0.0
        %1158 = vmatpush1.msra.mxu0 0.0
        %1159 = vmatprep.subr.mxu0 0.0
        %1160 = vmatpush1.msra.mxu0 0.0
        %1161 = vmatprep.subr.mxu0 0.0
        %1162 = vmatpush1.msra.mxu0 0.0
        %1163 = vmatprep.subr.mxu0 0.0
        %1164 = vmatpush1.msra.mxu0 0.0
        %1165 = vmatprep.subr.mxu0 0.0
        %1166 = vmatpush1.msra.mxu0 0.0
        %1167 = vmatprep.subr.mxu0 0.0
        %1168 = vmatpush1.msra.mxu0 0.0
        %1169 = vmatprep.subr.mxu0 0.0
        %1170 = vmatpush1.msra.mxu0 0.0
        %1171 = vmatprep.subr.mxu0 0.0
        %1172 = vmatpush1.msra.mxu0 0.0
        %1173 = vmatprep.subr.mxu0 0.0
        %1174 = vmatpush1.msra.mxu0 0.0
        %1175 = vmatprep.subr.mxu0 0.0
        %1176 = vmatpush1.msra.mxu0 %v1021
        %1177 = vmatprep.subr.mxu0 0.0
        %1178 = vmatpush1.msra.mxu0 %v1016
        %1179 = vmatprep.subr.mxu0 0.0
        %1180 = vmatpush2.msra.mxu0 0.0
        %1181 = vmatprep.subr.mxu0 0.0
        %1182 = vmatpush2.msra.mxu0 0.0
        %1183 = vmatprep.subr.mxu0 0.0
        %1184 = vmatpush2.msra.mxu0 0.0
        %1185 = vmatprep.subr.mxu0 0.0
        %1186 = vmatpush2.msra.mxu0 0.0
        %1187 = vmatprep.subr.mxu0 0.0
        %1188 = vmatpush2.msra.mxu0 0.0
        %1189 = vmatprep.subr.mxu0 0.0
        %1190 = vmatpush2.msra.mxu0 0.0
        %1191 = vmatprep.subr.mxu0 0.0
        %1192 = vmatpush2.msra.mxu0 0.0
        %1193 = vmatprep.subr.mxu0 0.0
        %1194 = vmatpush2.msra.mxu0 0.0
        %1195 = vmatprep.subr.mxu0 0.0
        %1196 = vmatpush2.msra.mxu0 0.0
        %1197 = vmatprep.subr.mxu0 0.0
        %1198 = vmatpush2.msra.mxu0 0.0
        %1199 = vmatprep.subr.mxu0 0.0
        %1200 = vmatpush2.msra.mxu0 0.0
        %1201 = vmatprep.subr.mxu0 0.0
        %1202 = vmatpush2.msra.mxu0 0.0
        %1203 = vmatprep.subr.mxu0 0.0
        %1204 = vmatpush2.msra.mxu0 0.0
        %1205 = vmatprep.subr.mxu0 0.0
        %1206 = vmatpush2.msra.mxu0 0.0
        %1207 = vmatprep.subr.mxu0 0.0
        %1208 = vmatpush2.msra.mxu0 0.0
        %1209 = vmatprep.subr.mxu0 0.0
        %1210 = vmatpush2.msra.mxu0 0.0
        %1211 = vmatprep.mubr.f32.mxu0 0.0
        %1212 = vmatmul.mubr.f32.gmra.mxu0 %v1142
        %v1213 = vpop.f32.mrf.mxu0
        %v1214 = vadd.f32 0.0, %v1213
        %v1215 = vpop.f32.mrf.mxu0
        %1216 = vmatprep.mubr.f32.mxu0 0.0
        %1217 = vmatmul.mubr.f32.gmra.mxu0 %v1145
        %v1218 = vpop.f32.mrf.mxu0
        %v1219 = vadd.f32 0.0, %v1218
        %v1220 = vpop.f32.mrf.mxu0
        %1221 = vdwg.mxu0
        %1222 = vrot.lane.b32.xlu0 %v939, 96
        %v1223 = vpop.permute.xlu0 %1222
        %1224 = vrot.lane.b32.xlu0 %v945, 96
        %v1225 = vpop.permute.xlu0 %1224
        %1226 = vrot.lane.b32.xlu0 %v941, 96
        %v1227 = vpop.permute.xlu0 %1226
        %1228 = vrot.lane.b32.xlu0 %v947, 96
        %v1229 = vpop.permute.xlu0 %1228
        %v1230 = vsel %vm1030, %v1223, 0
        %v1232 = vsel %vm1030, %v1225, 0
        %v1234 = vsel %vm1030, %v1227, 0
        %v1236 = vsel %vm1030, %v1229, 0
        %1238 = vmatprep.subr.mxu0 0.0
        %1239 = vmatpush1.xpose.msra.mxu0 0.0
        %1240 = vmatprep.subr.mxu0 0.0
        %1241 = vmatpush1.xpose.msra.mxu0 0.0
        %1242 = vmatprep.subr.mxu0 0.0
        %1243 = vmatpush1.xpose.msra.mxu0 0.0
        %1244 = vmatprep.subr.mxu0 0.0
        %1245 = vmatpush1.xpose.msra.mxu0 0.0
        %1246 = vmatprep.subr.mxu0 0.0
        %1247 = vmatpush1.xpose.msra.mxu0 0.0
        %1248 = vmatprep.subr.mxu0 0.0
        %1249 = vmatpush1.xpose.msra.mxu0 0.0
        %1250 = vmatprep.subr.mxu0 0.0
        %1251 = vmatpush1.xpose.msra.mxu0 0.0
        %1252 = vmatprep.subr.mxu0 0.0
        %1253 = vmatpush1.xpose.msra.mxu0 0.0
        %1254 = vmatprep.subr.mxu0 0.0
        %1255 = vmatpush1.xpose.msra.mxu0 0.0
        %1256 = vmatprep.subr.mxu0 0.0
        %1257 = vmatpush1.xpose.msra.mxu0 0.0
        %1258 = vmatprep.subr.mxu0 0.0
        %1259 = vmatpush1.xpose.msra.mxu0 0.0
        %1260 = vmatprep.subr.mxu0 0.0
        %1261 = vmatpush1.xpose.msra.mxu0 0.0
        %1262 = vmatprep.subr.mxu0 0.0
        %1263 = vmatpush1.xpose.msra.mxu0 0.0
        %1264 = vmatprep.subr.mxu0 0.0
        %1265 = vmatpush1.xpose.msra.mxu0 0.0
        %1266 = vmatprep.subr.mxu0 0.0
        %1267 = vmatpush1.xpose.msra.mxu0 %v1236
        %1268 = vmatprep.subr.mxu0 0.0
        %1269 = vmatpush1.xpose.msra.mxu0 %v1234
        %1270 = vmatprep.subr.mxu0 0.0
        %1271 = vmatpush2.xpose.msra.mxu0 0.0
        %1272 = vmatprep.subr.mxu0 0.0
        %1273 = vmatpush2.xpose.msra.mxu0 0.0
        %1274 = vmatprep.subr.mxu0 0.0
        %1275 = vmatpush2.xpose.msra.mxu0 0.0
        %1276 = vmatprep.subr.mxu0 0.0
        %1277 = vmatpush2.xpose.msra.mxu0 0.0
        %1278 = vmatprep.subr.mxu0 0.0
        %1279 = vmatpush2.xpose.msra.mxu0 0.0
        %1280 = vmatprep.subr.mxu0 0.0
        %1281 = vmatpush2.xpose.msra.mxu0 0.0
        %1282 = vmatprep.subr.mxu0 0.0
        %1283 = vmatpush2.xpose.msra.mxu0 0.0
        %1284 = vmatprep.subr.mxu0 0.0
        %1285 = vmatpush2.xpose.msra.mxu0 0.0
        %1286 = vmatprep.subr.mxu0 0.0
        %1287 = vmatpush2.xpose.msra.mxu0 0.0
        %1288 = vmatprep.subr.mxu0 0.0
        %1289 = vmatpush2.xpose.msra.mxu0 0.0
        %1290 = vmatprep.subr.mxu0 0.0
        %1291 = vmatpush2.xpose.msra.mxu0 0.0
        %1292 = vmatprep.subr.mxu0 0.0
        %1293 = vmatpush2.xpose.msra.mxu0 0.0
        %1294 = vmatprep.subr.mxu0 0.0
        %1295 = vmatpush2.xpose.msra.mxu0 0.0
        %1296 = vmatprep.subr.mxu0 0.0
        %1297 = vmatpush2.xpose.msra.mxu0 0.0
        %1298 = vmatprep.subr.mxu0 0.0
        %1299 = vmatpush2.xpose.msra.mxu0 0.0
        %1300 = vmatprep.subr.mxu0 0.0
        %1301 = vmatpush2.xpose.msra.mxu0 0.0
        %1302 = vmatprep.mubr.f32.mxu0 0.0
        %1303 = vmatmul.mubr.f32.gmra.mxu0 %v1230
        %v1304 = vpop.f32.mrf.mxu0
        %v1305 = vadd.f32 %v1028, %v1304
        %v1306 = vpop.f32.mrf.mxu0
        %1307 = vmatprep.mubr.f32.mxu0 0.0
        %1308 = vmatmul.mubr.f32.gmra.mxu0 %v1232
        %v1309 = vpop.f32.mrf.mxu0
        %v1310 = vadd.f32 %v1028, %v1309
        %v1311 = vpop.f32.mrf.mxu0
        %1312 = vdwg.mxu0
        %v1313 = vsel %vm1118, %v1305, -inf
        %1314 = vmax.xlane.f32.xlu0 %v1313
        %v1315 = vpop.xlane.xlu0 %1314
        %v1316 = vsel %vm1118, %v1310, -inf
        %1317 = vmax.xlane.f32.xlu0 %v1316
        %v1318 = vpop.xlane.xlu0 %1317
        %v1319 = vsub.f32 %v1305, %v1315
        %v1320 = vsub.f32 %v1310, %v1318
        %v1321 = vmul.f32 %v1319, 1.442695
        %v1322 = vpow.pop %v1321
        %v1323 = vmul.f32 %v1320, 1.442695
        %v1324 = vpow.pop %v1323
        %v1325 = vsel %vm1118, %v1322, 0.0
        %1326 = vadd.xlane.f32.xlu0 %v1325
        %v1327 = vpop.xlane.xlu0 %1326
        %v1328 = vsel %vm1118, %v1324, 0.0
        %1329 = vadd.xlane.f32.xlu0 %v1328
        %v1330 = vpop.xlane.xlu0 %1329
        %v1331 = vrcp.pop %v1327
        %v1332 = vrcp.pop %v1330
        %v1333 = vmul.f32 %v1322, %v1331
        %v1334 = vmul.f32 %v1324, %v1332
        %1337 = vrot.lane.b32.xlu0 %v1016, 96
        %v1338 = vpop.permute.xlu0 %1337
        %1339 = vrot.lane.b32.xlu0 %v1021, 96
        %v1340 = vpop.permute.xlu0 %1339
        %v1344 = vsel %vm1118, %v1333, 0
        %v1347 = vsel %vm1118, %v1334, 0
        %1349 = vmatprep.subr.mxu0 0.0
        %1350 = vmatpush1.msra.mxu0 0.0
        %1351 = vmatprep.subr.mxu0 0.0
        %1352 = vmatpush1.msra.mxu0 0.0
        %1353 = vmatprep.subr.mxu0 0.0
        %1354 = vmatpush1.msra.mxu0 0.0
        %1355 = vmatprep.subr.mxu0 0.0
        %1356 = vmatpush1.msra.mxu0 0.0
        %1357 = vmatprep.subr.mxu0 0.0
        %1358 = vmatpush1.msra.mxu0 0.0
        %1359 = vmatprep.subr.mxu0 0.0
        %1360 = vmatpush1.msra.mxu0 0.0
        %1361 = vmatprep.subr.mxu0 0.0
        %1362 = vmatpush1.msra.mxu0 0.0
        %1363 = vmatprep.subr.mxu0 0.0
        %1364 = vmatpush1.msra.mxu0 0.0
        %1365 = vmatprep.subr.mxu0 0.0
        %1366 = vmatpush1.msra.mxu0 0.0
        %1367 = vmatprep.subr.mxu0 0.0
        %1368 = vmatpush1.msra.mxu0 0.0
        %1369 = vmatprep.subr.mxu0 0.0
        %1370 = vmatpush1.msra.mxu0 0.0
        %1371 = vmatprep.subr.mxu0 0.0
        %1372 = vmatpush1.msra.mxu0 0.0
        %1373 = vmatprep.subr.mxu0 0.0
        %1374 = vmatpush1.msra.mxu0 0.0
        %1375 = vmatprep.subr.mxu0 0.0
        %1376 = vmatpush1.msra.mxu0 0.0
        %1377 = vmatprep.subr.mxu0 0.0
        %1378 = vmatpush1.msra.mxu0 %v1340
        %1379 = vmatprep.subr.mxu0 0.0
        %1380 = vmatpush1.msra.mxu0 %v1338
        %1381 = vmatprep.subr.mxu0 0.0
        %1382 = vmatpush2.msra.mxu0 0.0
        %1383 = vmatprep.subr.mxu0 0.0
        %1384 = vmatpush2.msra.mxu0 0.0
        %1385 = vmatprep.subr.mxu0 0.0
        %1386 = vmatpush2.msra.mxu0 0.0
        %1387 = vmatprep.subr.mxu0 0.0
        %1388 = vmatpush2.msra.mxu0 0.0
        %1389 = vmatprep.subr.mxu0 0.0
        %1390 = vmatpush2.msra.mxu0 0.0
        %1391 = vmatprep.subr.mxu0 0.0
        %1392 = vmatpush2.msra.mxu0 0.0
        %1393 = vmatprep.subr.mxu0 0.0
        %1394 = vmatpush2.msra.mxu0 0.0
        %1395 = vmatprep.subr.mxu0 0.0
        %1396 = vmatpush2.msra.mxu0 0.0
        %1397 = vmatprep.subr.mxu0 0.0
        %1398 = vmatpush2.msra.mxu0 0.0
        %1399 = vmatprep.subr.mxu0 0.0
        %1400 = vmatpush2.msra.mxu0 0.0
        %1401 = vmatprep.subr.mxu0 0.0
        %1402 = vmatpush2.msra.mxu0 0.0
        %1403 = vmatprep.subr.mxu0 0.0
        %1404 = vmatpush2.msra.mxu0 0.0
        %1405 = vmatprep.subr.mxu0 0.0
        %1406 = vmatpush2.msra.mxu0 0.0
        %1407 = vmatprep.subr.mxu0 0.0
        %1408 = vmatpush2.msra.mxu0 0.0
        %1409 = vmatprep.subr.mxu0 0.0
        %1410 = vmatpush2.msra.mxu0 0.0
        %1411 = vmatprep.subr.mxu0 0.0
        %1412 = vmatpush2.msra.mxu0 0.0
        %1413 = vmatprep.mubr.f32.mxu0 0.0
        %1414 = vmatmul.mubr.f32.gmra.mxu0 %v1344
        %v1415 = vpop.f32.mrf.mxu0
        %v1416 = vadd.f32 0.0, %v1415
        %v1417 = vpop.f32.mrf.mxu0
        %1418 = vmatprep.mubr.f32.mxu0 0.0
        %1419 = vmatmul.mubr.f32.gmra.mxu0 %v1347
        %v1420 = vpop.f32.mrf.mxu0
        %v1421 = vadd.f32 0.0, %v1420
        %v1422 = vpop.f32.mrf.mxu0
        %1423 = vdwg.mxu0
        %1424 = vrot.lane.b32.xlu0 %v939, 64
        %v1425 = vpop.permute.xlu0 %1424
        %1426 = vrot.lane.b32.xlu0 %v945, 64
        %v1427 = vpop.permute.xlu0 %1426
        %1428 = vrot.lane.b32.xlu0 %v941, 64
        %v1429 = vpop.permute.xlu0 %1428
        %1430 = vrot.lane.b32.xlu0 %v947, 64
        %v1431 = vpop.permute.xlu0 %1430
        %v1432 = vsel %vm1030, %v1425, 0
        %v1434 = vsel %vm1030, %v1427, 0
        %v1436 = vsel %vm1030, %v1429, 0
        %v1438 = vsel %vm1030, %v1431, 0
        %1440 = vmatprep.subr.mxu0 0.0
        %1441 = vmatpush1.xpose.msra.mxu0 0.0
        %1442 = vmatprep.subr.mxu0 0.0
        %1443 = vmatpush1.xpose.msra.mxu0 0.0
        %1444 = vmatprep.subr.mxu0 0.0
        %1445 = vmatpush1.xpose.msra.mxu0 0.0
        %1446 = vmatprep.subr.mxu0 0.0
        %1447 = vmatpush1.xpose.msra.mxu0 0.0
        %1448 = vmatprep.subr.mxu0 0.0
        %1449 = vmatpush1.xpose.msra.mxu0 0.0
        %1450 = vmatprep.subr.mxu0 0.0
        %1451 = vmatpush1.xpose.msra.mxu0 0.0
        %1452 = vmatprep.subr.mxu0 0.0
        %1453 = vmatpush1.xpose.msra.mxu0 0.0
        %1454 = vmatprep.subr.mxu0 0.0
        %1455 = vmatpush1.xpose.msra.mxu0 0.0
        %1456 = vmatprep.subr.mxu0 0.0
        %1457 = vmatpush1.xpose.msra.mxu0 0.0
        %1458 = vmatprep.subr.mxu0 0.0
        %1459 = vmatpush1.xpose.msra.mxu0 0.0
        %1460 = vmatprep.subr.mxu0 0.0
        %1461 = vmatpush1.xpose.msra.mxu0 0.0
        %1462 = vmatprep.subr.mxu0 0.0
        %1463 = vmatpush1.xpose.msra.mxu0 0.0
        %1464 = vmatprep.subr.mxu0 0.0
        %1465 = vmatpush1.xpose.msra.mxu0 0.0
        %1466 = vmatprep.subr.mxu0 0.0
        %1467 = vmatpush1.xpose.msra.mxu0 0.0
        %1468 = vmatprep.subr.mxu0 0.0
        %1469 = vmatpush1.xpose.msra.mxu0 %v1438
        %1470 = vmatprep.subr.mxu0 0.0
        %1471 = vmatpush1.xpose.msra.mxu0 %v1436
        %1472 = vmatprep.subr.mxu0 0.0
        %1473 = vmatpush2.xpose.msra.mxu0 0.0
        %1474 = vmatprep.subr.mxu0 0.0
        %1475 = vmatpush2.xpose.msra.mxu0 0.0
        %1476 = vmatprep.subr.mxu0 0.0
        %1477 = vmatpush2.xpose.msra.mxu0 0.0
        %1478 = vmatprep.subr.mxu0 0.0
        %1479 = vmatpush2.xpose.msra.mxu0 0.0
        %1480 = vmatprep.subr.mxu0 0.0
        %1481 = vmatpush2.xpose.msra.mxu0 0.0
        %1482 = vmatprep.subr.mxu0 0.0
        %1483 = vmatpush2.xpose.msra.mxu0 0.0
        %1484 = vmatprep.subr.mxu0 0.0
        %1485 = vmatpush2.xpose.msra.mxu0 0.0
        %1486 = vmatprep.subr.mxu0 0.0
        %1487 = vmatpush2.xpose.msra.mxu0 0.0
        %1488 = vmatprep.subr.mxu0 0.0
        %1489 = vmatpush2.xpose.msra.mxu0 0.0
        %1490 = vmatprep.subr.mxu0 0.0
        %1491 = vmatpush2.xpose.msra.mxu0 0.0
        %1492 = vmatprep.subr.mxu0 0.0
        %1493 = vmatpush2.xpose.msra.mxu0 0.0
        %1494 = vmatprep.subr.mxu0 0.0
        %1495 = vmatpush2.xpose.msra.mxu0 0.0
        %1496 = vmatprep.subr.mxu0 0.0
        %1497 = vmatpush2.xpose.msra.mxu0 0.0
        %1498 = vmatprep.subr.mxu0 0.0
        %1499 = vmatpush2.xpose.msra.mxu0 0.0
        %1500 = vmatprep.subr.mxu0 0.0
        %1501 = vmatpush2.xpose.msra.mxu0 0.0
        %1502 = vmatprep.subr.mxu0 0.0
        %1503 = vmatpush2.xpose.msra.mxu0 0.0
        %1504 = vmatprep.mubr.f32.mxu0 0.0
        %1505 = vmatmul.mubr.f32.gmra.mxu0 %v1432
        %v1506 = vpop.f32.mrf.mxu0
        %v1507 = vadd.f32 %v1028, %v1506
        %v1508 = vpop.f32.mrf.mxu0
        %1509 = vmatprep.mubr.f32.mxu0 0.0
        %1510 = vmatmul.mubr.f32.gmra.mxu0 %v1434
        %v1511 = vpop.f32.mrf.mxu0
        %v1512 = vadd.f32 %v1028, %v1511
        %v1513 = vpop.f32.mrf.mxu0
        %1514 = vdwg.mxu0
        %v1515 = vsel %vm1118, %v1507, -inf
        %1516 = vmax.xlane.f32.xlu0 %v1515
        %v1517 = vpop.xlane.xlu0 %1516
        %v1518 = vsel %vm1118, %v1512, -inf
        %1519 = vmax.xlane.f32.xlu0 %v1518
        %v1520 = vpop.xlane.xlu0 %1519
        %v1521 = vsub.f32 %v1507, %v1517
        %v1522 = vsub.f32 %v1512, %v1520
        %v1523 = vmul.f32 %v1521, 1.442695
        %v1524 = vpow.pop %v1523
        %v1525 = vmul.f32 %v1522, 1.442695
        %v1526 = vpow.pop %v1525
        %v1527 = vsel %vm1118, %v1524, 0.0
        %1528 = vadd.xlane.f32.xlu0 %v1527
        %v1529 = vpop.xlane.xlu0 %1528
        %v1530 = vsel %vm1118, %v1526, 0.0
        %1531 = vadd.xlane.f32.xlu0 %v1530
        %v1532 = vpop.xlane.xlu0 %1531
        %v1533 = vrcp.pop %v1529
        %v1534 = vrcp.pop %v1532
        %v1535 = vmul.f32 %v1524, %v1533
        %v1536 = vmul.f32 %v1526, %v1534
        %1537 = vrot.lane.b32.xlu0 %v1016, 64
        %v1538 = vpop.permute.xlu0 %1537
        %1539 = vrot.lane.b32.xlu0 %v1021, 64
        %v1540 = vpop.permute.xlu0 %1539
        %v1544 = vsel %vm1118, %v1535, 0
        %v1547 = vsel %vm1118, %v1536, 0
        %1549 = vmatprep.subr.mxu0 0.0
        %1550 = vmatpush1.msra.mxu0 0.0
        %1551 = vmatprep.subr.mxu0 0.0
        %1552 = vmatpush1.msra.mxu0 0.0
        %1553 = vmatprep.subr.mxu0 0.0
        %1554 = vmatpush1.msra.mxu0 0.0
        %1555 = vmatprep.subr.mxu0 0.0
        %1556 = vmatpush1.msra.mxu0 0.0
        %1557 = vmatprep.subr.mxu0 0.0
        %1558 = vmatpush1.msra.mxu0 0.0
        %1559 = vmatprep.subr.mxu0 0.0
        %1560 = vmatpush1.msra.mxu0 0.0
        %1561 = vmatprep.subr.mxu0 0.0
        %1562 = vmatpush1.msra.mxu0 0.0
        %1563 = vmatprep.subr.mxu0 0.0
        %1564 = vmatpush1.msra.mxu0 0.0
        %1565 = vmatprep.subr.mxu0 0.0
        %1566 = vmatpush1.msra.mxu0 0.0
        %1567 = vmatprep.subr.mxu0 0.0
        %1568 = vmatpush1.msra.mxu0 0.0
        %1569 = vmatprep.subr.mxu0 0.0
        %1570 = vmatpush1.msra.mxu0 0.0
        %1571 = vmatprep.subr.mxu0 0.0
        %1572 = vmatpush1.msra.mxu0 0.0
        %1573 = vmatprep.subr.mxu0 0.0
        %1574 = vmatpush1.msra.mxu0 0.0
        %1575 = vmatprep.subr.mxu0 0.0
        %1576 = vmatpush1.msra.mxu0 0.0
        %1577 = vmatprep.subr.mxu0 0.0
        %1578 = vmatpush1.msra.mxu0 %v1540
        %1579 = vmatprep.subr.mxu0 0.0
        %1580 = vmatpush1.msra.mxu0 %v1538
        %1581 = vmatprep.subr.mxu0 0.0
        %1582 = vmatpush2.msra.mxu0 0.0
        %1583 = vmatprep.subr.mxu0 0.0
        %1584 = vmatpush2.msra.mxu0 0.0
        %1585 = vmatprep.subr.mxu0 0.0
        %1586 = vmatpush2.msra.mxu0 0.0
        %1587 = vmatprep.subr.mxu0 0.0
        %1588 = vmatpush2.msra.mxu0 0.0
        %1589 = vmatprep.subr.mxu0 0.0
        %1590 = vmatpush2.msra.mxu0 0.0
        %1591 = vmatprep.subr.mxu0 0.0
        %1592 = vmatpush2.msra.mxu0 0.0
        %1593 = vmatprep.subr.mxu0 0.0
        %1594 = vmatpush2.msra.mxu0 0.0
        %1595 = vmatprep.subr.mxu0 0.0
        %1596 = vmatpush2.msra.mxu0 0.0
        %1597 = vmatprep.subr.mxu0 0.0
        %1598 = vmatpush2.msra.mxu0 0.0
        %1599 = vmatprep.subr.mxu0 0.0
        %1600 = vmatpush2.msra.mxu0 0.0
        %1601 = vmatprep.subr.mxu0 0.0
        %1602 = vmatpush2.msra.mxu0 0.0
        %1603 = vmatprep.subr.mxu0 0.0
        %1604 = vmatpush2.msra.mxu0 0.0
        %1605 = vmatprep.subr.mxu0 0.0
        %1606 = vmatpush2.msra.mxu0 0.0
        %1607 = vmatprep.subr.mxu0 0.0
        %1608 = vmatpush2.msra.mxu0 0.0
        %1609 = vmatprep.subr.mxu0 0.0
        %1610 = vmatpush2.msra.mxu0 0.0
        %1611 = vmatprep.subr.mxu0 0.0
        %1612 = vmatpush2.msra.mxu0 0.0
        %1613 = vmatprep.mubr.f32.mxu0 0.0
        %1614 = vmatmul.mubr.f32.gmra.mxu0 %v1544
        %v1615 = vpop.f32.mrf.mxu0
        %v1616 = vadd.f32 0.0, %v1615
        %v1617 = vpop.f32.mrf.mxu0
        %1618 = vmatprep.mubr.f32.mxu0 0.0
        %1619 = vmatmul.mubr.f32.gmra.mxu0 %v1547
        %v1620 = vpop.f32.mrf.mxu0
        %v1621 = vadd.f32 0.0, %v1620
        %v1622 = vpop.f32.mrf.mxu0
        %1623 = vdwg.mxu0
        %1624 = vrot.lane.b32.xlu0 %v939, 32
        %v1625 = vpop.permute.xlu0 %1624
        %1626 = vrot.lane.b32.xlu0 %v945, 32
        %v1627 = vpop.permute.xlu0 %1626
        %1628 = vrot.lane.b32.xlu0 %v941, 32
        %v1629 = vpop.permute.xlu0 %1628
        %1630 = vrot.lane.b32.xlu0 %v947, 32
        %v1631 = vpop.permute.xlu0 %1630
        %v1632 = vsel %vm1030, %v1625, 0
        %v1634 = vsel %vm1030, %v1627, 0
        %v1636 = vsel %vm1030, %v1629, 0
        %v1638 = vsel %vm1030, %v1631, 0
        %1640 = vmatprep.subr.mxu0 0.0
        %1641 = vmatpush1.xpose.msra.mxu0 0.0
        %1642 = vmatprep.subr.mxu0 0.0
        %1643 = vmatpush1.xpose.msra.mxu0 0.0
        %1644 = vmatprep.subr.mxu0 0.0
        %1645 = vmatpush1.xpose.msra.mxu0 0.0
        %1646 = vmatprep.subr.mxu0 0.0
        %1647 = vmatpush1.xpose.msra.mxu0 0.0
        %1648 = vmatprep.subr.mxu0 0.0
        %1649 = vmatpush1.xpose.msra.mxu0 0.0
        %1650 = vmatprep.subr.mxu0 0.0
        %1651 = vmatpush1.xpose.msra.mxu0 0.0
        %1652 = vmatprep.subr.mxu0 0.0
        %1653 = vmatpush1.xpose.msra.mxu0 0.0
        %1654 = vmatprep.subr.mxu0 0.0
        %1655 = vmatpush1.xpose.msra.mxu0 0.0
        %1656 = vmatprep.subr.mxu0 0.0
        %1657 = vmatpush1.xpose.msra.mxu0 0.0
        %1658 = vmatprep.subr.mxu0 0.0
        %1659 = vmatpush1.xpose.msra.mxu0 0.0
        %1660 = vmatprep.subr.mxu0 0.0
        %1661 = vmatpush1.xpose.msra.mxu0 0.0
        %1662 = vmatprep.subr.mxu0 0.0
        %1663 = vmatpush1.xpose.msra.mxu0 0.0
        %1664 = vmatprep.subr.mxu0 0.0
        %1665 = vmatpush1.xpose.msra.mxu0 0.0
        %1666 = vmatprep.subr.mxu0 0.0
        %1667 = vmatpush1.xpose.msra.mxu0 0.0
        %1668 = vmatprep.subr.mxu0 0.0
        %1669 = vmatpush1.xpose.msra.mxu0 %v1638
        %1670 = vmatprep.subr.mxu0 0.0
        %1671 = vmatpush1.xpose.msra.mxu0 %v1636
        %1672 = vmatprep.subr.mxu0 0.0
        %1673 = vmatpush2.xpose.msra.mxu0 0.0
        %1674 = vmatprep.subr.mxu0 0.0
        %1675 = vmatpush2.xpose.msra.mxu0 0.0
        %1676 = vmatprep.subr.mxu0 0.0
        %1677 = vmatpush2.xpose.msra.mxu0 0.0
        %1678 = vmatprep.subr.mxu0 0.0
        %1679 = vmatpush2.xpose.msra.mxu0 0.0
        %1680 = vmatprep.subr.mxu0 0.0
        %1681 = vmatpush2.xpose.msra.mxu0 0.0
        %1682 = vmatprep.subr.mxu0 0.0
        %1683 = vmatpush2.xpose.msra.mxu0 0.0
        %1684 = vmatprep.subr.mxu0 0.0
        %1685 = vmatpush2.xpose.msra.mxu0 0.0
        %1686 = vmatprep.subr.mxu0 0.0
        %1687 = vmatpush2.xpose.msra.mxu0 0.0
        %1688 = vmatprep.subr.mxu0 0.0
        %1689 = vmatpush2.xpose.msra.mxu0 0.0
        %1690 = vmatprep.subr.mxu0 0.0
        %1691 = vmatpush2.xpose.msra.mxu0 0.0
        %1692 = vmatprep.subr.mxu0 0.0
        %1693 = vmatpush2.xpose.msra.mxu0 0.0
        %1694 = vmatprep.subr.mxu0 0.0
        %1695 = vmatpush2.xpose.msra.mxu0 0.0
        %1696 = vmatprep.subr.mxu0 0.0
        %1697 = vmatpush2.xpose.msra.mxu0 0.0
        %1698 = vmatprep.subr.mxu0 0.0
        %1699 = vmatpush2.xpose.msra.mxu0 0.0
        %1700 = vmatprep.subr.mxu0 0.0
        %1701 = vmatpush2.xpose.msra.mxu0 0.0
        %1702 = vmatprep.subr.mxu0 0.0
        %1703 = vmatpush2.xpose.msra.mxu0 0.0
        %1704 = vmatprep.mubr.f32.mxu0 0.0
        %1705 = vmatmul.mubr.f32.gmra.mxu0 %v1632
        %v1706 = vpop.f32.mrf.mxu0
        %v1707 = vadd.f32 %v1028, %v1706
        %v1708 = vpop.f32.mrf.mxu0
        %1709 = vmatprep.mubr.f32.mxu0 0.0
        %1710 = vmatmul.mubr.f32.gmra.mxu0 %v1634
        %v1711 = vpop.f32.mrf.mxu0
        %v1712 = vadd.f32 %v1028, %v1711
        %v1713 = vpop.f32.mrf.mxu0
        %1714 = vdwg.mxu0
        %v1715 = vsel %vm1118, %v1707, -inf
        %1716 = vmax.xlane.f32.xlu0 %v1715
        %v1717 = vpop.xlane.xlu0 %1716
        %v1718 = vsel %vm1118, %v1712, -inf
        %1719 = vmax.xlane.f32.xlu0 %v1718
        %v1720 = vpop.xlane.xlu0 %1719
        %v1721 = vsub.f32 %v1707, %v1717
        %v1722 = vsub.f32 %v1712, %v1720
        %v1723 = vmul.f32 %v1721, 1.442695
        %v1724 = vpow.pop %v1723
        %v1725 = vmul.f32 %v1722, 1.442695
        %v1726 = vpow.pop %v1725
        %v1727 = vsel %vm1118, %v1724, 0.0
        %1728 = vadd.xlane.f32.xlu0 %v1727
        %v1729 = vpop.xlane.xlu0 %1728
        %v1730 = vsel %vm1118, %v1726, 0.0
        %1731 = vadd.xlane.f32.xlu0 %v1730
        %v1732 = vpop.xlane.xlu0 %1731
        %v1733 = vrcp.pop %v1729
        %v1734 = vrcp.pop %v1732
        %v1735 = vmul.f32 %v1724, %v1733
        %v1736 = vmul.f32 %v1726, %v1734
        %1737 = vrot.lane.b32.xlu0 %v1016, 32
        %v1738 = vpop.permute.xlu0 %1737
        %1739 = vrot.lane.b32.xlu0 %v1021, 32
        %v1740 = vpop.permute.xlu0 %1739
        %v1744 = vsel %vm1118, %v1735, 0
        %v1747 = vsel %vm1118, %v1736, 0
        %1749 = vmatprep.subr.mxu0 0.0
        %1750 = vmatpush1.msra.mxu0 0.0
        %1751 = vmatprep.subr.mxu0 0.0
        %1752 = vmatpush1.msra.mxu0 0.0
        %1753 = vmatprep.subr.mxu0 0.0
        %1754 = vmatpush1.msra.mxu0 0.0
        %1755 = vmatprep.subr.mxu0 0.0
        %1756 = vmatpush1.msra.mxu0 0.0
        %1757 = vmatprep.subr.mxu0 0.0
        %1758 = vmatpush1.msra.mxu0 0.0
        %1759 = vmatprep.subr.mxu0 0.0
        %1760 = vmatpush1.msra.mxu0 0.0
        %1761 = vmatprep.subr.mxu0 0.0
        %1762 = vmatpush1.msra.mxu0 0.0
        %1763 = vmatprep.subr.mxu0 0.0
        %1764 = vmatpush1.msra.mxu0 0.0
        %1765 = vmatprep.subr.mxu0 0.0
        %1766 = vmatpush1.msra.mxu0 0.0
        %1767 = vmatprep.subr.mxu0 0.0
        %1768 = vmatpush1.msra.mxu0 0.0
        %1769 = vmatprep.subr.mxu0 0.0
        %1770 = vmatpush1.msra.mxu0 0.0
        %1771 = vmatprep.subr.mxu0 0.0
        %1772 = vmatpush1.msra.mxu0 0.0
        %1773 = vmatprep.subr.mxu0 0.0
        %1774 = vmatpush1.msra.mxu0 0.0
        %1775 = vmatprep.subr.mxu0 0.0
        %1776 = vmatpush1.msra.mxu0 0.0
        %1777 = vmatprep.subr.mxu0 0.0
        %1778 = vmatpush1.msra.mxu0 %v1740
        %1779 = vmatprep.subr.mxu0 0.0
        %1780 = vmatpush1.msra.mxu0 %v1738
        %1781 = vmatprep.subr.mxu0 0.0
        %1782 = vmatpush2.msra.mxu0 0.0
        %1783 = vmatprep.subr.mxu0 0.0
        %1784 = vmatpush2.msra.mxu0 0.0
        %1785 = vmatprep.subr.mxu0 0.0
        %1786 = vmatpush2.msra.mxu0 0.0
        %1787 = vmatprep.subr.mxu0 0.0
        %1788 = vmatpush2.msra.mxu0 0.0
        %1789 = vmatprep.subr.mxu0 0.0
        %1790 = vmatpush2.msra.mxu0 0.0
        %1791 = vmatprep.subr.mxu0 0.0
        %1792 = vmatpush2.msra.mxu0 0.0
        %1793 = vmatprep.subr.mxu0 0.0
        %1794 = vmatpush2.msra.mxu0 0.0
        %1795 = vmatprep.subr.mxu0 0.0
        %1796 = vmatpush2.msra.mxu0 0.0
        %1797 = vmatprep.subr.mxu0 0.0
        %1798 = vmatpush2.msra.mxu0 0.0
        %1799 = vmatprep.subr.mxu0 0.0
        %1800 = vmatpush2.msra.mxu0 0.0
        %1801 = vmatprep.subr.mxu0 0.0
        %1802 = vmatpush2.msra.mxu0 0.0
        %1803 = vmatprep.subr.mxu0 0.0
        %1804 = vmatpush2.msra.mxu0 0.0
        %1805 = vmatprep.subr.mxu0 0.0
        %1806 = vmatpush2.msra.mxu0 0.0
        %1807 = vmatprep.subr.mxu0 0.0
        %1808 = vmatpush2.msra.mxu0 0.0
        %1809 = vmatprep.subr.mxu0 0.0
        %1810 = vmatpush2.msra.mxu0 0.0
        %1811 = vmatprep.subr.mxu0 0.0
        %1812 = vmatpush2.msra.mxu0 0.0
        %1813 = vmatprep.mubr.f32.mxu0 0.0
        %1814 = vmatmul.mubr.f32.gmra.mxu0 %v1744
        %v1815 = vpop.f32.mrf.mxu0
        %v1816 = vadd.f32 0.0, %v1815
        %v1817 = vpop.f32.mrf.mxu0
        %1818 = vmatprep.mubr.f32.mxu0 0.0
        %1819 = vmatmul.mubr.f32.gmra.mxu0 %v1747
        %v1820 = vpop.f32.mrf.mxu0
        %v1821 = vadd.f32 0.0, %v1820
        %v1822 = vpop.f32.mrf.mxu0
        %1823 = vdwg.mxu0
        %1826 = vrot.lane.b32.xlu0 %v1416, 32
        %v1827 = vpop.permute.xlu0 %1826
        %1828 = vrot.lane.b32.xlu0 %v1421, 32
        %v1829 = vpop.permute.xlu0 %1828
        %1834 = vrot.lane.b32.xlu0 %v1616, 64
        %v1835 = vpop.permute.xlu0 %1834
        %1836 = vrot.lane.b32.xlu0 %v1621, 64
        %v1837 = vpop.permute.xlu0 %1836
        %1842 = vrot.lane.b32.xlu0 %v1816, 96
        %v1843 = vpop.permute.xlu0 %1842
        %1844 = vrot.lane.b32.xlu0 %v1821, 96
        %v1845 = vpop.permute.xlu0 %1844
        %v1848 = vsel %vm1030, %v1214, %v1827
        %v1849 = vsel %vm1030, %v1219, %v1829
        %vm1850 = vcmask 523264
        %v1851 = vsel %vm1850, %v1848, %v1835
        %v1852 = vsel %vm1850, %v1849, %v1837
        %vm1853 = vcmask 785408
        %v1854 = vsel %vm1853, %v1851, %v1843
        %v1855 = vsel %vm1853, %v1852, %v1845
        %v1856 = vld [vmem:[#allocation11] sm:$0xff]
        %v1857 = vld [vmem:[#allocation11 + $0x8] sm:$0xff]
        %v1858 = vld [vmem:[#allocation11 + $0x10] sm:$0xff]
        %v1859 = vld [vmem:[#allocation11 + $0x18] sm:$0xff]
        %v1860 = vld [vmem:[#allocation11 + $0x20] sm:$0xff]
        %v1861 = vld [vmem:[#allocation11 + $0x28] sm:$0xff]
        %v1862 = vld [vmem:[#allocation11 + $0x30] sm:$0xff]
        %v1863 = vld [vmem:[#allocation11 + $0x38] sm:$0xff]
        %v1864 = vld [vmem:[#allocation11 + $0x40] sm:$0xff]
        %v1865 = vld [vmem:[#allocation11 + $0x48] sm:$0xff]
        %v1866 = vld [vmem:[#allocation11 + $0x50] sm:$0xff]
        %v1867 = vld [vmem:[#allocation11 + $0x58] sm:$0xff]
        %v1868 = vld [vmem:[#allocation11 + $0x60] sm:$0xff]
        %v1869 = vld [vmem:[#allocation11 + $0x68] sm:$0xff]
        %v1870 = vld [vmem:[#allocation11 + $0x70] sm:$0xff]
        %v1871 = vld [vmem:[#allocation11 + $0x78] sm:$0xff]
        %v1872 = vld [vmem:[%s7] sm:$0x1]
        %v1874 = vlaneseq
        %v1875 = vshrl.u32 %v1874, 7
        %v1876 = vsub.s32 0, %v1875
        %v1877 = vrot.slane %v1872, %v1876
        %1879 = vmatprep.subr.mxu0 0.0
        %1880 = vmatpush1.msra.mxu0 %v1871
        %1881 = vmatprep.subr.mxu0 0.0
        %1882 = vmatpush1.msra.mxu0 %v1870
        %1883 = vmatprep.subr.mxu0 0.0
        %1884 = vmatpush1.msra.mxu0 %v1869
        %1885 = vmatprep.subr.mxu0 0.0
        %1886 = vmatpush1.msra.mxu0 %v1868
        %1887 = vmatprep.subr.mxu0 0.0
        %1888 = vmatpush1.msra.mxu0 %v1867
        %1889 = vmatprep.subr.mxu0 0.0
        %1890 = vmatpush1.msra.mxu0 %v1866
        %1891 = vmatprep.subr.mxu0 0.0
        %1892 = vmatpush1.msra.mxu0 %v1865
        %1893 = vmatprep.subr.mxu0 0.0
        %1894 = vmatpush1.msra.mxu0 %v1864
        %1895 = vmatprep.subr.mxu0 0.0
        %1896 = vmatpush1.msra.mxu0 %v1863
        %1897 = vmatprep.subr.mxu0 0.0
        %1898 = vmatpush1.msra.mxu0 %v1862
        %1899 = vmatprep.subr.mxu0 0.0
        %1900 = vmatpush1.msra.mxu0 %v1861
        %1901 = vmatprep.subr.mxu0 0.0
        %1902 = vmatpush1.msra.mxu0 %v1860
        %1903 = vmatprep.subr.mxu0 0.0
        %1904 = vmatpush1.msra.mxu0 %v1859
        %1905 = vmatprep.subr.mxu0 0.0
        %1906 = vmatpush1.msra.mxu0 %v1858
        %1907 = vmatprep.subr.mxu0 0.0
        %1908 = vmatpush1.msra.mxu0 %v1857
        %1909 = vmatprep.subr.mxu0 0.0
        %1910 = vmatpush1.msra.mxu0 %v1856
        %1911 = vmatprep.subr.mxu0 0.0
        %1912 = vmatpush2.msra.mxu0 0.0
        %1913 = vmatprep.subr.mxu0 0.0
        %1914 = vmatpush2.msra.mxu0 0.0
        %1915 = vmatprep.subr.mxu0 0.0
        %1916 = vmatpush2.msra.mxu0 0.0
        %1917 = vmatprep.subr.mxu0 0.0
        %1918 = vmatpush2.msra.mxu0 0.0
        %1919 = vmatprep.subr.mxu0 0.0
        %1920 = vmatpush2.msra.mxu0 0.0
        %1921 = vmatprep.subr.mxu0 0.0
        %1922 = vmatpush2.msra.mxu0 0.0
        %1923 = vmatprep.subr.mxu0 0.0
        %1924 = vmatpush2.msra.mxu0 0.0
        %1925 = vmatprep.subr.mxu0 0.0
        %1926 = vmatpush2.msra.mxu0 0.0
        %1927 = vmatprep.subr.mxu0 0.0
        %1928 = vmatpush2.msra.mxu0 0.0
        %1929 = vmatprep.subr.mxu0 0.0
        %1930 = vmatpush2.msra.mxu0 0.0
        %1931 = vmatprep.subr.mxu0 0.0
        %1932 = vmatpush2.msra.mxu0 0.0
        %1933 = vmatprep.subr.mxu0 0.0
        %1934 = vmatpush2.msra.mxu0 0.0
        %1935 = vmatprep.subr.mxu0 0.0
        %1936 = vmatpush2.msra.mxu0 0.0
        %1937 = vmatprep.subr.mxu0 0.0
        %1938 = vmatpush2.msra.mxu0 0.0
        %1939 = vmatprep.subr.mxu0 0.0
        %1940 = vmatpush2.msra.mxu0 0.0
        %1941 = vmatprep.subr.mxu0 0.0
        %1942 = vmatpush2.msra.mxu0 0.0
        %1943 = vmatprep.mubr.f32.mxu0 0.0
        %1944 = vmatmul.mubr.f32.gmra.mxu0 %v1854
        %v1945 = vpop.f32.mrf.mxu0
        %v1946 = vadd.f32 %v1877, %v1945
        %v1947 = vpop.f32.mrf.mxu0
        %1948 = vmatprep.mubr.f32.mxu0 0.0
        %1949 = vmatmul.mubr.f32.gmra.mxu0 %v1855
        %v1950 = vpop.f32.mrf.mxu0
        %v1951 = vadd.f32 %v1877, %v1950
        %v1952 = vpop.f32.mrf.mxu0
        %1953 = vdwg.mxu0
        %v1954 = vadd.f32 %v1946, %v805
        %v1955 = vadd.f32 %v1951, %v806
        %v1956 = vld [vmem:[%s8] sm:$0x1]
        %v1957 = vld [vmem:[%s9] sm:$0x1]
        %1958 = vadd.xlane.f32.xlu0 %v1954
        %v1959 = vpop.xlane.xlu0 %1958
        %1960 = vadd.xlane.f32.xlu0 %v1955
        %v1961 = vpop.xlane.xlu0 %1960
        %v1962 = vmul.f32 %v1959, %v772
        %v1963 = vmul.f32 %v1961, %v772
        %v1964 = vsub.f32 %v1954, %v1962
        %v1965 = vsub.f32 %v1955, %v1963
        %v1966 = vmul.f32 %v1964, %v1964
        %v1967 = vmul.f32 %v1965, %v1965
        %1968 = vadd.xlane.f32.xlu0 %v1966
        %v1969 = vpop.xlane.xlu0 %1968
        %1970 = vadd.xlane.f32.xlu0 %v1967
        %v1971 = vpop.xlane.xlu0 %1970
        %v1972 = vmul.f32 %v1969, %v772
        %v1973 = vmul.f32 %v1971, %v772
        %v1974 = vadd.f32 %v1972, 1e-12
        %v1975 = vadd.f32 %v1973, 1e-12
        %v1976 = vrsqrt.pop %v1974
        %v1977 = vrsqrt.pop %v1975
        %v1978 = vmul.f32 %v1964, %v1976
        %v1979 = vmul.f32 %v1965, %v1977
        %v1981 = vlaneseq
        %v1982 = vshrl.u32 %v1981, 7
        %v1983 = vsub.s32 0, %v1982
        %v1984 = vrot.slane %v1956, %v1983
        %v1986 = vmul.f32 %v1984, %v1978
        %v1987 = vmul.f32 %v1984, %v1979
        %v1989 = vlaneseq
        %v1990 = vshrl.u32 %v1989, 7
        %v1991 = vsub.s32 0, %v1990
        %v1992 = vrot.slane %v1957, %v1991
        %v1994 = vadd.f32 %v1986, %v1992
        %v1995 = vadd.f32 %v1987, %v1992
        %v1996 = vld [vmem:[#allocation13] sm:$0xff]
        %v1997 = vld [vmem:[#allocation13 + $0x8] sm:$0xff]
        %v1998 = vld [vmem:[#allocation13 + $0x10] sm:$0xff]
        %v1999 = vld [vmem:[#allocation13 + $0x18] sm:$0xff]
        %v2000 = vld [vmem:[#allocation13 + $0x20] sm:$0xff]
        %v2001 = vld [vmem:[#allocation13 + $0x28] sm:$0xff]
        %v2002 = vld [vmem:[#allocation13 + $0x30] sm:$0xff]
        %v2003 = vld [vmem:[#allocation13 + $0x38] sm:$0xff]
        %v2004 = vld [vmem:[#allocation13 + $0x40] sm:$0xff]
        %v2005 = vld [vmem:[#allocation13 + $0x48] sm:$0xff]
        %v2006 = vld [vmem:[#allocation13 + $0x50] sm:$0xff]
        %v2007 = vld [vmem:[#allocation13 + $0x58] sm:$0xff]
        %v2008 = vld [vmem:[#allocation13 + $0x60] sm:$0xff]
        %v2009 = vld [vmem:[#allocation13 + $0x68] sm:$0xff]
        %v2010 = vld [vmem:[#allocation13 + $0x70] sm:$0xff]
        %v2011 = vld [vmem:[#allocation13 + $0x78] sm:$0xff]
        %v2012 = vld [vmem:[#allocation13 + $0x80] sm:$0xff]
        %v2013 = vld [vmem:[#allocation13 + $0x88] sm:$0xff]
        %v2014 = vld [vmem:[#allocation13 + $0x90] sm:$0xff]
        %v2015 = vld [vmem:[#allocation13 + $0x98] sm:$0xff]
        %v2016 = vld [vmem:[#allocation13 + $0xa0] sm:$0xff]
        %v2017 = vld [vmem:[#allocation13 + $0xa8] sm:$0xff]
        %v2018 = vld [vmem:[#allocation13 + $0xb0] sm:$0xff]
        %v2019 = vld [vmem:[#allocation13 + $0xb8] sm:$0xff]
        %v2020 = vld [vmem:[#allocation13 + $0xc0] sm:$0xff]
        %v2021 = vld [vmem:[#allocation13 + $0xc8] sm:$0xff]
        %v2022 = vld [vmem:[#allocation13 + $0xd0] sm:$0xff]
        %v2023 = vld [vmem:[#allocation13 + $0xd8] sm:$0xff]
        %v2024 = vld [vmem:[#allocation13 + $0xe0] sm:$0xff]
        %v2025 = vld [vmem:[#allocation13 + $0xe8] sm:$0xff]
        %v2026 = vld [vmem:[#allocation13 + $0xf0] sm:$0xff]
        %v2027 = vld [vmem:[#allocation13 + $0xf8] sm:$0xff]
        %v2028 = vld [vmem:[%s11] sm:$0x3]
        %v2030 = vlaneseq
        %v2031 = vshrl.u32 %v2030, 7
        %v2032 = vsub.s32 0, %v2031
        %v2033 = vrot.slane %v2028, %v2032
        %v2034 = vlaneseq
        %v2035 = vshrl.u32 %v2034, 7
        %v2036 = vsub.s32 1, %v2035
        %v2037 = vrot.slane %v2028, %v2036
        %2040 = vmatprep.subr.mxu0 %v2027
        %2041 = vmatpush1.msra.mxu0 %v2026
        %2042 = vmatprep.subr.mxu0 %v2025
        %2043 = vmatpush1.msra.mxu0 %v2024
        %2044 = vmatprep.subr.mxu0 %v2023
        %2045 = vmatpush1.msra.mxu0 %v2022
        %2046 = vmatprep.subr.mxu0 %v2021
        %2047 = vmatpush1.msra.mxu0 %v2020
        %2048 = vmatprep.subr.mxu0 %v2019
        %2049 = vmatpush1.msra.mxu0 %v2018
        %2050 = vmatprep.subr.mxu0 %v2017
        %2051 = vmatpush1.msra.mxu0 %v2016
        %2052 = vmatprep.subr.mxu0 %v2015
        %2053 = vmatpush1.msra.mxu0 %v2014
        %2054 = vmatprep.subr.mxu0 %v2013
        %2055 = vmatpush1.msra.mxu0 %v2012
        %2056 = vmatprep.subr.mxu0 %v2011
        %2057 = vmatpush1.msra.mxu0 %v2010
        %2058 = vmatprep.subr.mxu0 %v2009
        %2059 = vmatpush1.msra.mxu0 %v2008
        %2060 = vmatprep.subr.mxu0 %v2007
        %2061 = vmatpush1.msra.mxu0 %v2006
        %2062 = vmatprep.subr.mxu0 %v2005
        %2063 = vmatpush1.msra.mxu0 %v2004
        %2064 = vmatprep.subr.mxu0 %v2003
        %2065 = vmatpush1.msra.mxu0 %v2002
        %2066 = vmatprep.subr.mxu0 %v2001
        %2067 = vmatpush1.msra.mxu0 %v2000
        %2068 = vmatprep.subr.mxu0 %v1999
        %2069 = vmatpush1.msra.mxu0 %v1998
        %2070 = vmatprep.subr.mxu0 %v1997
        %2071 = vmatpush1.msra.mxu0 %v1996
        %2072 = vmatprep.subr.mxu0 0.0
        %2073 = vmatpush2.msra.mxu0 0.0
        %2074 = vmatprep.subr.mxu0 0.0
        %2075 = vmatpush2.msra.mxu0 0.0
        %2076 = vmatprep.subr.mxu0 0.0
        %2077 = vmatpush2.msra.mxu0 0.0
        %2078 = vmatprep.subr.mxu0 0.0
        %2079 = vmatpush2.msra.mxu0 0.0
        %2080 = vmatprep.subr.mxu0 0.0
        %2081 = vmatpush2.msra.mxu0 0.0
        %2082 = vmatprep.subr.mxu0 0.0
        %2083 = vmatpush2.msra.mxu0 0.0
        %2084 = vmatprep.subr.mxu0 0.0
        %2085 = vmatpush2.msra.mxu0 0.0
        %2086 = vmatprep.subr.mxu0 0.0
        %2087 = vmatpush2.msra.mxu0 0.0
        %2088 = vmatprep.subr.mxu0 0.0
        %2089 = vmatpush2.msra.mxu0 0.0
        %2090 = vmatprep.subr.mxu0 0.0
        %2091 = vmatpush2.msra.mxu0 0.0
        %2092 = vmatprep.subr.mxu0 0.0
        %2093 = vmatpush2.msra.mxu0 0.0
        %2094 = vmatprep.subr.mxu0 0.0
        %2095 = vmatpush2.msra.mxu0 0.0
        %2096 = vmatprep.subr.mxu0 0.0
        %2097 = vmatpush2.msra.mxu0 0.0
        %2098 = vmatprep.subr.mxu0 0.0
        %2099 = vmatpush2.msra.mxu0 0.0
        %2100 = vmatprep.subr.mxu0 0.0
        %2101 = vmatpush2.msra.mxu0 0.0
        %2102 = vmatprep.subr.mxu0 0.0
        %2103 = vmatpush2.msra.mxu0 0.0
        %2104 = vmatprep.mubr.f32.mxu0 0.0
        %2105 = vmatmul.mubr.f32.gmra.mxu0 %v1994
        %v2106 = vpop.f32.mrf.mxu0
        %v2107 = vadd.f32 %v2033, %v2106
        %v2108 = vpop.f32.mrf.mxu0
        %v2109 = vadd.f32 %v2037, %v2108
        %2110 = vmatprep.mubr.f32.mxu0 0.0
        %2111 = vmatmul.mubr.f32.gmra.mxu0 %v1995
        %v2112 = vpop.f32.mrf.mxu0
        %v2113 = vadd.f32 %v2033, %v2112
        %v2114 = vpop.f32.mrf.mxu0
        %v2115 = vadd.f32 %v2037, %v2114
        %2116 = vdwg.mxu0
        %v2117 = vmul.f32 %v2107, 0.5
        %v2118 = vmul.f32 %v2109, 0.5
        %v2119 = vmul.f32 %v2113, 0.5
        %v2120 = vmul.f32 %v2115, 0.5
        %v2121 = vmul.f32 %v2107, 0.044715
        %v2122 = vmul.f32 %v2109, 0.044715
        %v2123 = vmul.f32 %v2113, 0.044715
        %v2124 = vmul.f32 %v2115, 0.044715
        %v2125 = vmul.f32 %v2121, %v2107
        %v2126 = vmul.f32 %v2122, %v2109
        %v2127 = vmul.f32 %v2123, %v2113
        %v2128 = vmul.f32 %v2124, %v2115
        %v2129 = vmul.f32 %v2125, %v2107
        %v2130 = vmul.f32 %v2126, %v2109
        %v2131 = vmul.f32 %v2127, %v2113
        %v2132 = vmul.f32 %v2128, %v2115
        %v2133 = vadd.f32 %v2107, %v2129
        %v2134 = vadd.f32 %v2109, %v2130
        %v2135 = vadd.f32 %v2113, %v2131
        %v2136 = vadd.f32 %v2115, %v2132
        %v2137 = vmul.f32 %v2133, 0.7978846
        %v2138 = vmul.f32 %v2134, 0.7978846
        %v2139 = vmul.f32 %v2135, 0.7978846
        %v2140 = vmul.f32 %v2136, 0.7978846
        %v2141 = vtanh.pop %v2137
        %v2142 = vtanh.pop %v2138
        %v2143 = vtanh.pop %v2139
        %v2144 = vtanh.pop %v2140
        %v2145 = vadd.f32 %v2141, 1.0
        %v2146 = vadd.f32 %v2142, 1.0
        %v2147 = vadd.f32 %v2143, 1.0
        %v2148 = vadd.f32 %v2144, 1.0
        %v2149 = vmul.f32 %v2117, %v2145
        %v2150 = vmul.f32 %v2118, %v2146
        %v2151 = vmul.f32 %v2119, %v2147
        %v2152 = vmul.f32 %v2120, %v2148
        %v2153 = vld [vmem:[#allocation14] sm:$0xff]
        %v2154 = vld [vmem:[#allocation14 + $0x8] sm:$0xff]
        %v2155 = vld [vmem:[#allocation14 + $0x10] sm:$0xff]
        %v2156 = vld [vmem:[#allocation14 + $0x18] sm:$0xff]
        %v2157 = vld [vmem:[#allocation14 + $0x20] sm:$0xff]
        %v2158 = vld [vmem:[#allocation14 + $0x28] sm:$0xff]
        %v2159 = vld [vmem:[#allocation14 + $0x30] sm:$0xff]
        %v2160 = vld [vmem:[#allocation14 + $0x38] sm:$0xff]
        %v2161 = vld [vmem:[#allocation14 + $0x40] sm:$0xff]
        %v2162 = vld [vmem:[#allocation14 + $0x48] sm:$0xff]
        %v2163 = vld [vmem:[#allocation14 + $0x50] sm:$0xff]
        %v2164 = vld [vmem:[#allocation14 + $0x58] sm:$0xff]
        %v2165 = vld [vmem:[#allocation14 + $0x60] sm:$0xff]
        %v2166 = vld [vmem:[#allocation14 + $0x68] sm:$0xff]
        %v2167 = vld [vmem:[#allocation14 + $0x70] sm:$0xff]
        %v2168 = vld [vmem:[#allocation14 + $0x78] sm:$0xff]
        %v2169 = vld [vmem:[#allocation14 + $0x80] sm:$0xff]
        %v2170 = vld [vmem:[#allocation14 + $0x88] sm:$0xff]
        %v2171 = vld [vmem:[#allocation14 + $0x90] sm:$0xff]
        %v2172 = vld [vmem:[#allocation14 + $0x98] sm:$0xff]
        %v2173 = vld [vmem:[#allocation14 + $0xa0] sm:$0xff]
        %v2174 = vld [vmem:[#allocation14 + $0xa8] sm:$0xff]
        %v2175 = vld [vmem:[#allocation14 + $0xb0] sm:$0xff]
        %v2176 = vld [vmem:[#allocation14 + $0xb8] sm:$0xff]
        %v2177 = vld [vmem:[#allocation14 + $0xc0] sm:$0xff]
        %v2178 = vld [vmem:[#allocation14 + $0xc8] sm:$0xff]
        %v2179 = vld [vmem:[#allocation14 + $0xd0] sm:$0xff]
        %v2180 = vld [vmem:[#allocation14 + $0xd8] sm:$0xff]
        %v2181 = vld [vmem:[#allocation14 + $0xe0] sm:$0xff]
        %v2182 = vld [vmem:[#allocation14 + $0xe8] sm:$0xff]
        %v2183 = vld [vmem:[#allocation14 + $0xf0] sm:$0xff]
        %v2184 = vld [vmem:[#allocation14 + $0xf8] sm:$0xff]
        %v2185 = vld [vmem:[%s13] sm:$0x1]
        %v2187 = vlaneseq
        %v2188 = vshrl.u32 %v2187, 7
        %v2189 = vsub.s32 0, %v2188
        %v2190 = vrot.slane %v2185, %v2189
        %2192 = vmatprep.subr.mxu0 0.0
        %2193 = vmatpush1.msra.mxu0 %v2168
        %2194 = vmatprep.subr.mxu0 0.0
        %2195 = vmatpush1.msra.mxu0 %v2167
        %2196 = vmatprep.subr.mxu0 0.0
        %2197 = vmatpush1.msra.mxu0 %v2166
        %2198 = vmatprep.subr.mxu0 0.0
        %2199 = vmatpush1.msra.mxu0 %v2165
        %2200 = vmatprep.subr.mxu0 0.0
        %2201 = vmatpush1.msra.mxu0 %v2164
        %2202 = vmatprep.subr.mxu0 0.0
        %2203 = vmatpush1.msra.mxu0 %v2163
        %2204 = vmatprep.subr.mxu0 0.0
        %2205 = vmatpush1.msra.mxu0 %v2162
        %2206 = vmatprep.subr.mxu0 0.0
        %2207 = vmatpush1.msra.mxu0 %v2161
        %2208 = vmatprep.subr.mxu0 0.0
        %2209 = vmatpush1.msra.mxu0 %v2160
        %2210 = vmatprep.subr.mxu0 0.0
        %2211 = vmatpush1.msra.mxu0 %v2159
        %2212 = vmatprep.subr.mxu0 0.0
        %2213 = vmatpush1.msra.mxu0 %v2158
        %2214 = vmatprep.subr.mxu0 0.0
        %2215 = vmatpush1.msra.mxu0 %v2157
        %2216 = vmatprep.subr.mxu0 0.0
        %2217 = vmatpush1.msra.mxu0 %v2156
        %2218 = vmatprep.subr.mxu0 0.0
        %2219 = vmatpush1.msra.mxu0 %v2155
        %2220 = vmatprep.subr.mxu0 0.0
        %2221 = vmatpush1.msra.mxu0 %v2154
        %2222 = vmatprep.subr.mxu0 0.0
        %2223 = vmatpush1.msra.mxu0 %v2153
        %2224 = vmatprep.subr.mxu0 0.0
        %2225 = vmatpush2.msra.mxu0 %v2184
        %2226 = vmatprep.subr.mxu0 0.0
        %2227 = vmatpush2.msra.mxu0 %v2183
        %2228 = vmatprep.subr.mxu0 0.0
        %2229 = vmatpush2.msra.mxu0 %v2182
        %2230 = vmatprep.subr.mxu0 0.0
        %2231 = vmatpush2.msra.mxu0 %v2181
        %2232 = vmatprep.subr.mxu0 0.0
        %2233 = vmatpush2.msra.mxu0 %v2180
        %2234 = vmatprep.subr.mxu0 0.0
        %2235 = vmatpush2.msra.mxu0 %v2179
        %2236 = vmatprep.subr.mxu0 0.0
        %2237 = vmatpush2.msra.mxu0 %v2178
        %2238 = vmatprep.subr.mxu0 0.0
        %2239 = vmatpush2.msra.mxu0 %v2177
        %2240 = vmatprep.subr.mxu0 0.0
        %2241 = vmatpush2.msra.mxu0 %v2176
        %2242 = vmatprep.subr.mxu0 0.0
        %2243 = vmatpush2.msra.mxu0 %v2175
        %2244 = vmatprep.subr.mxu0 0.0
        %2245 = vmatpush2.msra.mxu0 %v2174
        %2246 = vmatprep.subr.mxu0 0.0
        %2247 = vmatpush2.msra.mxu0 %v2173
        %2248 = vmatprep.subr.mxu0 0.0
        %2249 = vmatpush2.msra.mxu0 %v2172
        %2250 = vmatprep.subr.mxu0 0.0
        %2251 = vmatpush2.msra.mxu0 %v2171
        %2252 = vmatprep.subr.mxu0 0.0
        %2253 = vmatpush2.msra.mxu0 %v2170
        %2254 = vmatprep.subr.mxu0 0.0
        %2255 = vmatpush2.msra.mxu0 %v2169
        %2256 = vmatprep.mubr.f32.mxu0 %v2150
        %2257 = vmatmul.mubr.f32.gmra.mxu0 %v2149
        %v2258 = vpop.f32.mrf.mxu0
        %v2259 = vadd.f32 %v2190, %v2258
        %v2260 = vpop.f32.mrf.mxu0
        %2261 = vmatprep.mubr.f32.mxu0 %v2152
        %2262 = vmatmul.mubr.f32.gmra.mxu0 %v2151
        %v2263 = vpop.f32.mrf.mxu0
        %v2264 = vadd.f32 %v2190, %v2263
        %v2265 = vpop.f32.mrf.mxu0
        %2266 = vdwg.mxu0
        %v2267 = vadd.f32 %v2259, %v1994
        %v2268 = vadd.f32 %v2264, %v1995
        %v2269 = vld [vmem:[%s14] sm:$0x1]
        %v2270 = vld [vmem:[%s15] sm:$0x1]
        %2271 = vadd.xlane.f32.xlu0 %v2267
        %v2272 = vpop.xlane.xlu0 %2271
        %2273 = vadd.xlane.f32.xlu0 %v2268
        %v2274 = vpop.xlane.xlu0 %2273
        %v2275 = vmul.f32 %v2272, %v772
        %v2276 = vmul.f32 %v2274, %v772
        %v2277 = vsub.f32 %v2267, %v2275
        %v2278 = vsub.f32 %v2268, %v2276
        %v2279 = vmul.f32 %v2277, %v2277
        %v2280 = vmul.f32 %v2278, %v2278
        %2281 = vadd.xlane.f32.xlu0 %v2279
        %v2282 = vpop.xlane.xlu0 %2281
        %2283 = vadd.xlane.f32.xlu0 %v2280
        %v2284 = vpop.xlane.xlu0 %2283
        %v2285 = vmul.f32 %v2282, %v772
        %v2286 = vmul.f32 %v2284, %v772
        %v2287 = vadd.f32 %v2285, 1e-12
        %v2288 = vadd.f32 %v2286, 1e-12
        %v2289 = vrsqrt.pop %v2287
        %v2290 = vrsqrt.pop %v2288
        %v2291 = vmul.f32 %v2277, %v2289
        %v2292 = vmul.f32 %v2278, %v2290
        %v2294 = vlaneseq
        %v2295 = vshrl.u32 %v2294, 7
        %v2296 = vsub.s32 0, %v2295
        %v2297 = vrot.slane %v2269, %v2296
        %v2299 = vmul.f32 %v2297, %v2291
        %v2300 = vmul.f32 %v2297, %v2292
        %v2302 = vlaneseq
        %v2303 = vshrl.u32 %v2302, 7
        %v2304 = vsub.s32 0, %v2303
        %v2305 = vrot.slane %v2270, %v2304
        %v2307 = vadd.f32 %v2299, %v2305
        %v2308 = vadd.f32 %v2300, %v2305
        %s2309 = scalar_lea.vmem [#allocation10], 384
        %v2310 = vld [vmem:[%s2309] sm:$0xff]
        %v2311 = vld [vmem:[%s2309 + $0x8] sm:$0xff]
        %v2312 = vld [vmem:[%s2309 + $0x10] sm:$0xff]
        %v2313 = vld [vmem:[%s2309 + $0x18] sm:$0xff]
        %v2314 = vld [vmem:[%s2309 + $0x20] sm:$0xff]
        %v2315 = vld [vmem:[%s2309 + $0x28] sm:$0xff]
        %v2316 = vld [vmem:[%s2309 + $0x30] sm:$0xff]
        %v2317 = vld [vmem:[%s2309 + $0x38] sm:$0xff]
        %v2318 = vld [vmem:[%s2309 + $0x40] sm:$0xff]
        %v2319 = vld [vmem:[%s2309 + $0x48] sm:$0xff]
        %v2320 = vld [vmem:[%s2309 + $0x50] sm:$0xff]
        %v2321 = vld [vmem:[%s2309 + $0x58] sm:$0xff]
        %v2322 = vld [vmem:[%s2309 + $0x60] sm:$0xff]
        %v2323 = vld [vmem:[%s2309 + $0x68] sm:$0xff]
        %v2324 = vld [vmem:[%s2309 + $0x70] sm:$0xff]
        %v2325 = vld [vmem:[%s2309 + $0x78] sm:$0xff]
        %v2326 = vld [vmem:[%s2309 + $0x80] sm:$0xff]
        %v2327 = vld [vmem:[%s2309 + $0x88] sm:$0xff]
        %v2328 = vld [vmem:[%s2309 + $0x90] sm:$0xff]
        %v2329 = vld [vmem:[%s2309 + $0x98] sm:$0xff]
        %v2330 = vld [vmem:[%s2309 + $0xa0] sm:$0xff]
        %v2331 = vld [vmem:[%s2309 + $0xa8] sm:$0xff]
        %v2332 = vld [vmem:[%s2309 + $0xb0] sm:$0xff]
        %v2333 = vld [vmem:[%s2309 + $0xb8] sm:$0xff]
        %v2334 = vld [vmem:[%s2309 + $0xc0] sm:$0xff]
        %v2335 = vld [vmem:[%s2309 + $0xc8] sm:$0xff]
        %v2336 = vld [vmem:[%s2309 + $0xd0] sm:$0xff]
        %v2337 = vld [vmem:[%s2309 + $0xd8] sm:$0xff]
        %v2338 = vld [vmem:[%s2309 + $0xe0] sm:$0xff]
        %v2339 = vld [vmem:[%s2309 + $0xe8] sm:$0xff]
        %v2340 = vld [vmem:[%s2309 + $0xf0] sm:$0xff]
        %v2341 = vld [vmem:[%s2309 + $0xf8] sm:$0xff]
        %v2342 = vld [vmem:[%s2309 + $0x100] sm:$0xff]
        %v2343 = vld [vmem:[%s2309 + $0x108] sm:$0xff]
        %v2344 = vld [vmem:[%s2309 + $0x110] sm:$0xff]
        %v2345 = vld [vmem:[%s2309 + $0x118] sm:$0xff]
        %v2346 = vld [vmem:[%s2309 + $0x120] sm:$0xff]
        %v2347 = vld [vmem:[%s2309 + $0x128] sm:$0xff]
        %v2348 = vld [vmem:[%s2309 + $0x130] sm:$0xff]
        %v2349 = vld [vmem:[%s2309 + $0x138] sm:$0xff]
        %v2350 = vld [vmem:[%s2309 + $0x140] sm:$0xff]
        %v2351 = vld [vmem:[%s2309 + $0x148] sm:$0xff]
        %v2352 = vld [vmem:[%s2309 + $0x150] sm:$0xff]
        %v2353 = vld [vmem:[%s2309 + $0x158] sm:$0xff]
        %v2354 = vld [vmem:[%s2309 + $0x160] sm:$0xff]
        %v2355 = vld [vmem:[%s2309 + $0x168] sm:$0xff]
        %v2356 = vld [vmem:[%s2309 + $0x170] sm:$0xff]
        %v2357 = vld [vmem:[%s2309 + $0x178] sm:$0xff]
        %s2358 = scalar_lea.vmem %s5, 3
        %v2359 = vld [vmem:[%s2358] sm:$0x7]
        %v2361 = vlaneseq
        %v2362 = vshrl.u32 %v2361, 7
        %v2363 = vsub.s32 0, %v2362
        %v2364 = vrot.slane %v2359, %v2363
        %v2365 = vlaneseq
        %v2366 = vshrl.u32 %v2365, 7
        %v2367 = vsub.s32 1, %v2366
        %v2368 = vrot.slane %v2359, %v2367
        %v2369 = vlaneseq
        %v2370 = vshrl.u32 %v2369, 7
        %v2371 = vsub.s32 2, %v2370
        %v2372 = vrot.slane %v2359, %v2371
        %2376 = vmatprep.subr.mxu0 %v2356
        %2377 = vmatpush1.msra.mxu0 %v2355
        %2378 = vmatprep.subr.mxu0 %v2353
        %2379 = vmatpush1.msra.mxu0 %v2352
        %2380 = vmatprep.subr.mxu0 %v2350
        %2381 = vmatpush1.msra.mxu0 %v2349
        %2382 = vmatprep.subr.mxu0 %v2347
        %2383 = vmatpush1.msra.mxu0 %v2346
        %2384 = vmatprep.subr.mxu0 %v2344
        %2385 = vmatpush1.msra.mxu0 %v2343
        %2386 = vmatprep.subr.mxu0 %v2341
        %2387 = vmatpush1.msra.mxu0 %v2340
        %2388 = vmatprep.subr.mxu0 %v2338
        %2389 = vmatpush1.msra.mxu0 %v2337
        %2390 = vmatprep.subr.mxu0 %v2335
        %2391 = vmatpush1.msra.mxu0 %v2334
        %2392 = vmatprep.subr.mxu0 %v2332
        %2393 = vmatpush1.msra.mxu0 %v2331
        %2394 = vmatprep.subr.mxu0 %v2329
        %2395 = vmatpush1.msra.mxu0 %v2328
        %2396 = vmatprep.subr.mxu0 %v2326
        %2397 = vmatpush1.msra.mxu0 %v2325
        %2398 = vmatprep.subr.mxu0 %v2323
        %2399 = vmatpush1.msra.mxu0 %v2322
        %2400 = vmatprep.subr.mxu0 %v2320
        %2401 = vmatpush1.msra.mxu0 %v2319
        %2402 = vmatprep.subr.mxu0 %v2317
        %2403 = vmatpush1.msra.mxu0 %v2316
        %2404 = vmatprep.subr.mxu0 %v2314
        %2405 = vmatpush1.msra.mxu0 %v2313
        %2406 = vmatprep.subr.mxu0 %v2311
        %2407 = vmatpush1.msra.mxu0 %v2310
        %2408 = vmatprep.subr.mxu0 0.0
        %2409 = vmatpush2.msra.mxu0 0.0
        %2410 = vmatprep.subr.mxu0 0.0
        %2411 = vmatpush2.msra.mxu0 0.0
        %2412 = vmatprep.subr.mxu0 0.0
        %2413 = vmatpush2.msra.mxu0 0.0
        %2414 = vmatprep.subr.mxu0 0.0
        %2415 = vmatpush2.msra.mxu0 0.0
        %2416 = vmatprep.subr.mxu0 0.0
        %2417 = vmatpush2.msra.mxu0 0.0
        %2418 = vmatprep.subr.mxu0 0.0
        %2419 = vmatpush2.msra.mxu0 0.0
        %2420 = vmatprep.subr.mxu0 0.0
        %2421 = vmatpush2.msra.mxu0 0.0
        %2422 = vmatprep.subr.mxu0 0.0
        %2423 = vmatpush2.msra.mxu0 0.0
        %2424 = vmatprep.subr.mxu0 0.0
        %2425 = vmatpush2.msra.mxu0 0.0
        %2426 = vmatprep.subr.mxu0 0.0
        %2427 = vmatpush2.msra.mxu0 0.0
        %2428 = vmatprep.subr.mxu0 0.0
        %2429 = vmatpush2.msra.mxu0 0.0
        %2430 = vmatprep.subr.mxu0 0.0
        %2431 = vmatpush2.msra.mxu0 0.0
        %2432 = vmatprep.subr.mxu0 0.0
        %2433 = vmatpush2.msra.mxu0 0.0
        %2434 = vmatprep.subr.mxu0 0.0
        %2435 = vmatpush2.msra.mxu0 0.0
        %2436 = vmatprep.subr.mxu0 0.0
        %2437 = vmatpush2.msra.mxu0 0.0
        %2438 = vmatprep.subr.mxu0 0.0
        %2439 = vmatpush2.msra.mxu0 0.0
        %2440 = vmatprep.mubr.f32.mxu0 0.0
        %2441 = vmatmul.mubr.f32.gmra.mxu0 %v2307
        %v2442 = vpop.f32.mrf.mxu0
        %v2443 = vadd.f32 %v2364, %v2442
        %v2444 = vpop.f32.mrf.mxu0
        %v2445 = vadd.f32 %v2368, %v2444
        %2446 = vmatprep.mubr.f32.mxu0 0.0
        %2447 = vmatmul.mubr.f32.gmra.mxu0 %v2308
        %v2448 = vpop.f32.mrf.mxu0
        %v2449 = vadd.f32 %v2364, %v2448
        %v2450 = vpop.f32.mrf.mxu0
        %v2451 = vadd.f32 %v2368, %v2450
        %2452 = vdwg.mxu0
        %2453 = vmatprep.subr.mxu0 0.0
        %2454 = vmatpush1.msra.mxu0 %v2357
        %2455 = vmatprep.subr.mxu0 0.0
        %2456 = vmatpush1.msra.mxu0 %v2354
        %2457 = vmatprep.subr.mxu0 0.0
        %2458 = vmatpush1.msra.mxu0 %v2351
        %2459 = vmatprep.subr.mxu0 0.0
        %2460 = vmatpush1.msra.mxu0 %v2348
        %2461 = vmatprep.subr.mxu0 0.0
        %2462 = vmatpush1.msra.mxu0 %v2345
        %2463 = vmatprep.subr.mxu0 0.0
        %2464 = vmatpush1.msra.mxu0 %v2342
        %2465 = vmatprep.subr.mxu0 0.0
        %2466 = vmatpush1.msra.mxu0 %v2339
        %2467 = vmatprep.subr.mxu0 0.0
        %2468 = vmatpush1.msra.mxu0 %v2336
        %2469 = vmatprep.subr.mxu0 0.0
        %2470 = vmatpush1.msra.mxu0 %v2333
        %2471 = vmatprep.subr.mxu0 0.0
        %2472 = vmatpush1.msra.mxu0 %v2330
        %2473 = vmatprep.subr.mxu0 0.0
        %2474 = vmatpush1.msra.mxu0 %v2327
        %2475 = vmatprep.subr.mxu0 0.0
        %2476 = vmatpush1.msra.mxu0 %v2324
        %2477 = vmatprep.subr.mxu0 0.0
        %2478 = vmatpush1.msra.mxu0 %v2321
        %2479 = vmatprep.subr.mxu0 0.0
        %2480 = vmatpush1.msra.mxu0 %v2318
        %2481 = vmatprep.subr.mxu0 0.0
        %2482 = vmatpush1.msra.mxu0 %v2315
        %2483 = vmatprep.subr.mxu0 0.0
        %2484 = vmatpush1.msra.mxu0 %v2312
        %2485 = vmatprep.subr.mxu0 0.0
        %2486 = vmatpush2.msra.mxu0 0.0
        %2487 = vmatprep.subr.mxu0 0.0
        %2488 = vmatpush2.msra.mxu0 0.0
        %2489 = vmatprep.subr.mxu0 0.0
        %2490 = vmatpush2.msra.mxu0 0.0
        %2491 = vmatprep.subr.mxu0 0.0
        %2492 = vmatpush2.msra.mxu0 0.0
        %2493 = vmatprep.subr.mxu0 0.0
        %2494 = vmatpush2.msra.mxu0 0.0
        %2495 = vmatprep.subr.mxu0 0.0
        %2496 = vmatpush2.msra.mxu0 0.0
        %2497 = vmatprep.subr.mxu0 0.0
        %2498 = vmatpush2.msra.mxu0 0.0
        %2499 = vmatprep.subr.mxu0 0.0
        %2500 = vmatpush2.msra.mxu0 0.0
        %2501 = vmatprep.subr.mxu0 0.0
        %2502 = vmatpush2.msra.mxu0 0.0
        %2503 = vmatprep.subr.mxu0 0.0
        %2504 = vmatpush2.msra.mxu0 0.0
        %2505 = vmatprep.subr.mxu0 0.0
        %2506 = vmatpush2.msra.mxu0 0.0
        %2507 = vmatprep.subr.mxu0 0.0
        %2508 = vmatpush2.msra.mxu0 0.0
        %2509 = vmatprep.subr.mxu0 0.0
        %2510 = vmatpush2.msra.mxu0 0.0
        %2511 = vmatprep.subr.mxu0 0.0
        %2512 = vmatpush2.msra.mxu0 0.0
        %2513 = vmatprep.subr.mxu0 0.0
        %2514 = vmatpush2.msra.mxu0 0.0
        %2515 = vmatprep.subr.mxu0 0.0
        %2516 = vmatpush2.msra.mxu0 0.0
        %2517 = vmatprep.mubr.f32.mxu0 0.0
        %2518 = vmatmul.mubr.f32.gmra.mxu0 %v2307
        %v2519 = vpop.f32.mrf.mxu0
        %v2520 = vadd.f32 %v2372, %v2519
        %v2521 = vpop.f32.mrf.mxu0
        %2522 = vmatprep.mubr.f32.mxu0 0.0
        %2523 = vmatmul.mubr.f32.gmra.mxu0 %v2308
        %v2524 = vpop.f32.mrf.mxu0
        %v2525 = vadd.f32 %v2372, %v2524
        %v2526 = vpop.f32.mrf.mxu0
        %2527 = vdwg.mxu0
        %v2529 = vsel %vm1030, %v2443, 0
        %v2532 = vsel %vm1030, %v2449, 0
        %v2535 = vsel %vm1030, %v2445, 0
        %v2538 = vsel %vm1030, %v2451, 0
        %2540 = vmatprep.subr.mxu0 0.0
        %2541 = vmatpush1.xpose.msra.mxu0 0.0
        %2542 = vmatprep.subr.mxu0 0.0
        %2543 = vmatpush1.xpose.msra.mxu0 0.0
        %2544 = vmatprep.subr.mxu0 0.0
        %2545 = vmatpush1.xpose.msra.mxu0 0.0
        %2546 = vmatprep.subr.mxu0 0.0
        %2547 = vmatpush1.xpose.msra.mxu0 0.0
        %2548 = vmatprep.subr.mxu0 0.0
        %2549 = vmatpush1.xpose.msra.mxu0 0.0
        %2550 = vmatprep.subr.mxu0 0.0
        %2551 = vmatpush1.xpose.msra.mxu0 0.0
        %2552 = vmatprep.subr.mxu0 0.0
        %2553 = vmatpush1.xpose.msra.mxu0 0.0
        %2554 = vmatprep.subr.mxu0 0.0
        %2555 = vmatpush1.xpose.msra.mxu0 0.0
        %2556 = vmatprep.subr.mxu0 0.0
        %2557 = vmatpush1.xpose.msra.mxu0 0.0
        %2558 = vmatprep.subr.mxu0 0.0
        %2559 = vmatpush1.xpose.msra.mxu0 0.0
        %2560 = vmatprep.subr.mxu0 0.0
        %2561 = vmatpush1.xpose.msra.mxu0 0.0
        %2562 = vmatprep.subr.mxu0 0.0
        %2563 = vmatpush1.xpose.msra.mxu0 0.0
        %2564 = vmatprep.subr.mxu0 0.0
        %2565 = vmatpush1.xpose.msra.mxu0 0.0
        %2566 = vmatprep.subr.mxu0 0.0
        %2567 = vmatpush1.xpose.msra.mxu0 0.0
        %2568 = vmatprep.subr.mxu0 0.0
        %2569 = vmatpush1.xpose.msra.mxu0 %v2538
        %2570 = vmatprep.subr.mxu0 0.0
        %2571 = vmatpush1.xpose.msra.mxu0 %v2535
        %2572 = vmatprep.subr.mxu0 0.0
        %2573 = vmatpush2.xpose.msra.mxu0 0.0
        %2574 = vmatprep.subr.mxu0 0.0
        %2575 = vmatpush2.xpose.msra.mxu0 0.0
        %2576 = vmatprep.subr.mxu0 0.0
        %2577 = vmatpush2.xpose.msra.mxu0 0.0
        %2578 = vmatprep.subr.mxu0 0.0
        %2579 = vmatpush2.xpose.msra.mxu0 0.0
        %2580 = vmatprep.subr.mxu0 0.0
        %2581 = vmatpush2.xpose.msra.mxu0 0.0
        %2582 = vmatprep.subr.mxu0 0.0
        %2583 = vmatpush2.xpose.msra.mxu0 0.0
        %2584 = vmatprep.subr.mxu0 0.0
        %2585 = vmatpush2.xpose.msra.mxu0 0.0
        %2586 = vmatprep.subr.mxu0 0.0
        %2587 = vmatpush2.xpose.msra.mxu0 0.0
        %2588 = vmatprep.subr.mxu0 0.0
        %2589 = vmatpush2.xpose.msra.mxu0 0.0
        %2590 = vmatprep.subr.mxu0 0.0
        %2591 = vmatpush2.xpose.msra.mxu0 0.0
        %2592 = vmatprep.subr.mxu0 0.0
        %2593 = vmatpush2.xpose.msra.mxu0 0.0
        %2594 = vmatprep.subr.mxu0 0.0
        %2595 = vmatpush2.xpose.msra.mxu0 0.0
        %2596 = vmatprep.subr.mxu0 0.0
        %2597 = vmatpush2.xpose.msra.mxu0 0.0
        %2598 = vmatprep.subr.mxu0 0.0
        %2599 = vmatpush2.xpose.msra.mxu0 0.0
        %2600 = vmatprep.subr.mxu0 0.0
        %2601 = vmatpush2.xpose.msra.mxu0 0.0
        %2602 = vmatprep.subr.mxu0 0.0
        %2603 = vmatpush2.xpose.msra.mxu0 0.0
        %2604 = vmatprep.mubr.f32.mxu0 0.0
        %2605 = vmatmul.mubr.f32.gmra.mxu0 %v2529
        %v2606 = vpop.f32.mrf.mxu0
        %v2607 = vadd.f32 %v1028, %v2606
        %v2608 = vpop.f32.mrf.mxu0
        %2609 = vmatprep.mubr.f32.mxu0 0.0
        %2610 = vmatmul.mubr.f32.gmra.mxu0 %v2532
        %v2611 = vpop.f32.mrf.mxu0
        %v2612 = vadd.f32 %v1028, %v2611
        %v2613 = vpop.f32.mrf.mxu0
        %2614 = vdwg.mxu0
        %v2615 = vsel %vm1118, %v2607, -inf
        %2616 = vmax.xlane.f32.xlu0 %v2615
        %v2617 = vpop.xlane.xlu0 %2616
        %v2618 = vsel %vm1118, %v2612, -inf
        %2619 = vmax.xlane.f32.xlu0 %v2618
        %v2620 = vpop.xlane.xlu0 %2619
        %v2621 = vsub.f32 %v2607, %v2617
        %v2622 = vsub.f32 %v2612, %v2620
        %v2623 = vmul.f32 %v2621, 1.442695
        %v2624 = vpow.pop %v2623
        %v2625 = vmul.f32 %v2622, 1.442695
        %v2626 = vpow.pop %v2625
        %v2627 = vsel %vm1118, %v2624, 0.0
        %2628 = vadd.xlane.f32.xlu0 %v2627
        %v2629 = vpop.xlane.xlu0 %2628
        %v2630 = vsel %vm1118, %v2626, 0.0
        %2631 = vadd.xlane.f32.xlu0 %v2630
        %v2632 = vpop.xlane.xlu0 %2631
        %v2633 = vrcp.pop %v2629
        %v2634 = vrcp.pop %v2632
        %v2635 = vmul.f32 %v2624, %v2633
        %v2636 = vmul.f32 %v2626, %v2634
        %v2638 = vsel %vm1118, %v2635, 0
        %v2641 = vsel %vm1118, %v2636, 0
        %2643 = vmatprep.subr.mxu0 0.0
        %2644 = vmatpush1.msra.mxu0 0.0
        %2645 = vmatprep.subr.mxu0 0.0
        %2646 = vmatpush1.msra.mxu0 0.0
        %2647 = vmatprep.subr.mxu0 0.0
        %2648 = vmatpush1.msra.mxu0 0.0
        %2649 = vmatprep.subr.mxu0 0.0
        %2650 = vmatpush1.msra.mxu0 0.0
        %2651 = vmatprep.subr.mxu0 0.0
        %2652 = vmatpush1.msra.mxu0 0.0
        %2653 = vmatprep.subr.mxu0 0.0
        %2654 = vmatpush1.msra.mxu0 0.0
        %2655 = vmatprep.subr.mxu0 0.0
        %2656 = vmatpush1.msra.mxu0 0.0
        %2657 = vmatprep.subr.mxu0 0.0
        %2658 = vmatpush1.msra.mxu0 0.0
        %2659 = vmatprep.subr.mxu0 0.0
        %2660 = vmatpush1.msra.mxu0 0.0
        %2661 = vmatprep.subr.mxu0 0.0
        %2662 = vmatpush1.msra.mxu0 0.0
        %2663 = vmatprep.subr.mxu0 0.0
        %2664 = vmatpush1.msra.mxu0 0.0
        %2665 = vmatprep.subr.mxu0 0.0
        %2666 = vmatpush1.msra.mxu0 0.0
        %2667 = vmatprep.subr.mxu0 0.0
        %2668 = vmatpush1.msra.mxu0 0.0
        %2669 = vmatprep.subr.mxu0 0.0
        %2670 = vmatpush1.msra.mxu0 0.0
        %2671 = vmatprep.subr.mxu0 0.0
        %2672 = vmatpush1.msra.mxu0 %v2525
        %2673 = vmatprep.subr.mxu0 0.0
        %2674 = vmatpush1.msra.mxu0 %v2520
        %2675 = vmatprep.subr.mxu0 0.0
        %2676 = vmatpush2.msra.mxu0 0.0
        %2677 = vmatprep.subr.mxu0 0.0
        %2678 = vmatpush2.msra.mxu0 0.0
        %2679 = vmatprep.subr.mxu0 0.0
        %2680 = vmatpush2.msra.mxu0 0.0
        %2681 = vmatprep.subr.mxu0 0.0
        %2682 = vmatpush2.msra.mxu0 0.0
        %2683 = vmatprep.subr.mxu0 0.0
        %2684 = vmatpush2.msra.mxu0 0.0
        %2685 = vmatprep.subr.mxu0 0.0
        %2686 = vmatpush2.msra.mxu0 0.0
        %2687 = vmatprep.subr.mxu0 0.0
        %2688 = vmatpush2.msra.mxu0 0.0
        %2689 = vmatprep.subr.mxu0 0.0
        %2690 = vmatpush2.msra.mxu0 0.0
        %2691 = vmatprep.subr.mxu0 0.0
        %2692 = vmatpush2.msra.mxu0 0.0
        %2693 = vmatprep.subr.mxu0 0.0
        %2694 = vmatpush2.msra.mxu0 0.0
        %2695 = vmatprep.subr.mxu0 0.0
        %2696 = vmatpush2.msra.mxu0 0.0
        %2697 = vmatprep.subr.mxu0 0.0
        %2698 = vmatpush2.msra.mxu0 0.0
        %2699 = vmatprep.subr.mxu0 0.0
        %2700 = vmatpush2.msra.mxu0 0.0
        %2701 = vmatprep.subr.mxu0 0.0
        %2702 = vmatpush2.msra.mxu0 0.0
        %2703 = vmatprep.subr.mxu0 0.0
        %2704 = vmatpush2.msra.mxu0 0.0
        %2705 = vmatprep.subr.mxu0 0.0
        %2706 = vmatpush2.msra.mxu0 0.0
        %2707 = vmatprep.mubr.f32.mxu0 0.0
        %2708 = vmatmul.mubr.f32.gmra.mxu0 %v2638
        %v2709 = vpop.f32.mrf.mxu0
        %v2710 = vadd.f32 0.0, %v2709
        %v2711 = vpop.f32.mrf.mxu0
        %2712 = vmatprep.mubr.f32.mxu0 0.0
        %2713 = vmatmul.mubr.f32.gmra.mxu0 %v2641
        %v2714 = vpop.f32.mrf.mxu0
        %v2715 = vadd.f32 0.0, %v2714
        %v2716 = vpop.f32.mrf.mxu0
        %2717 = vdwg.mxu0
        %2718 = vrot.lane.b32.xlu0 %v2443, 96
        %v2719 = vpop.permute.xlu0 %2718
        %2720 = vrot.lane.b32.xlu0 %v2449, 96
        %v2721 = vpop.permute.xlu0 %2720
        %2722 = vrot.lane.b32.xlu0 %v2445, 96
        %v2723 = vpop.permute.xlu0 %2722
        %2724 = vrot.lane.b32.xlu0 %v2451, 96
        %v2725 = vpop.permute.xlu0 %2724
        %v2726 = vsel %vm1030, %v2719, 0
        %v2728 = vsel %vm1030, %v2721, 0
        %v2730 = vsel %vm1030, %v2723, 0
        %v2732 = vsel %vm1030, %v2725, 0
        %2734 = vmatprep.subr.mxu0 0.0
        %2735 = vmatpush1.xpose.msra.mxu0 0.0
        %2736 = vmatprep.subr.mxu0 0.0
        %2737 = vmatpush1.xpose.msra.mxu0 0.0
        %2738 = vmatprep.subr.mxu0 0.0
        %2739 = vmatpush1.xpose.msra.mxu0 0.0
        %2740 = vmatprep.subr.mxu0 0.0
        %2741 = vmatpush1.xpose.msra.mxu0 0.0
        %2742 = vmatprep.subr.mxu0 0.0
        %2743 = vmatpush1.xpose.msra.mxu0 0.0
        %2744 = vmatprep.subr.mxu0 0.0
        %2745 = vmatpush1.xpose.msra.mxu0 0.0
        %2746 = vmatprep.subr.mxu0 0.0
        %2747 = vmatpush1.xpose.msra.mxu0 0.0
        %2748 = vmatprep.subr.mxu0 0.0
        %2749 = vmatpush1.xpose.msra.mxu0 0.0
        %2750 = vmatprep.subr.mxu0 0.0
        %2751 = vmatpush1.xpose.msra.mxu0 0.0
        %2752 = vmatprep.subr.mxu0 0.0
        %2753 = vmatpush1.xpose.msra.mxu0 0.0
        %2754 = vmatprep.subr.mxu0 0.0
        %2755 = vmatpush1.xpose.msra.mxu0 0.0
        %2756 = vmatprep.subr.mxu0 0.0
        %2757 = vmatpush1.xpose.msra.mxu0 0.0
        %2758 = vmatprep.subr.mxu0 0.0
        %2759 = vmatpush1.xpose.msra.mxu0 0.0
        %2760 = vmatprep.subr.mxu0 0.0
        %2761 = vmatpush1.xpose.msra.mxu0 0.0
        %2762 = vmatprep.subr.mxu0 0.0
        %2763 = vmatpush1.xpose.msra.mxu0 %v2732
        %2764 = vmatprep.subr.mxu0 0.0
        %2765 = vmatpush1.xpose.msra.mxu0 %v2730
        %2766 = vmatprep.subr.mxu0 0.0
        %2767 = vmatpush2.xpose.msra.mxu0 0.0
        %2768 = vmatprep.subr.mxu0 0.0
        %2769 = vmatpush2.xpose.msra.mxu0 0.0
        %2770 = vmatprep.subr.mxu0 0.0
        %2771 = vmatpush2.xpose.msra.mxu0 0.0
        %2772 = vmatprep.subr.mxu0 0.0
        %2773 = vmatpush2.xpose.msra.mxu0 0.0
        %2774 = vmatprep.subr.mxu0 0.0
        %2775 = vmatpush2.xpose.msra.mxu0 0.0
        %2776 = vmatprep.subr.mxu0 0.0
        %2777 = vmatpush2.xpose.msra.mxu0 0.0
        %2778 = vmatprep.subr.mxu0 0.0
        %2779 = vmatpush2.xpose.msra.mxu0 0.0
        %2780 = vmatprep.subr.mxu0 0.0
        %2781 = vmatpush2.xpose.msra.mxu0 0.0
        %2782 = vmatprep.subr.mxu0 0.0
        %2783 = vmatpush2.xpose.msra.mxu0 0.0
        %2784 = vmatprep.subr.mxu0 0.0
        %2785 = vmatpush2.xpose.msra.mxu0 0.0
        %2786 = vmatprep.subr.mxu0 0.0
        %2787 = vmatpush2.xpose.msra.mxu0 0.0
        %2788 = vmatprep.subr.mxu0 0.0
        %2789 = vmatpush2.xpose.msra.mxu0 0.0
        %2790 = vmatprep.subr.mxu0 0.0
        %2791 = vmatpush2.xpose.msra.mxu0 0.0
        %2792 = vmatprep.subr.mxu0 0.0
        %2793 = vmatpush2.xpose.msra.mxu0 0.0
        %2794 = vmatprep.subr.mxu0 0.0
        %2795 = vmatpush2.xpose.msra.mxu0 0.0
        %2796 = vmatprep.subr.mxu0 0.0
        %2797 = vmatpush2.xpose.msra.mxu0 0.0
        %2798 = vmatprep.mubr.f32.mxu0 0.0
        %2799 = vmatmul.mubr.f32.gmra.mxu0 %v2726
        %v2800 = vpop.f32.mrf.mxu0
        %v2801 = vadd.f32 %v1028, %v2800
        %v2802 = vpop.f32.mrf.mxu0
        %2803 = vmatprep.mubr.f32.mxu0 0.0
        %2804 = vmatmul.mubr.f32.gmra.mxu0 %v2728
        %v2805 = vpop.f32.mrf.mxu0
        %v2806 = vadd.f32 %v1028, %v2805
        %v2807 = vpop.f32.mrf.mxu0
        %2808 = vdwg.mxu0
        %v2809 = vsel %vm1118, %v2801, -inf
        %2810 = vmax.xlane.f32.xlu0 %v2809
        %v2811 = vpop.xlane.xlu0 %2810
        %v2812 = vsel %vm1118, %v2806, -inf
        %2813 = vmax.xlane.f32.xlu0 %v2812
        %v2814 = vpop.xlane.xlu0 %2813
        %v2815 = vsub.f32 %v2801, %v2811
        %v2816 = vsub.f32 %v2806, %v2814
        %v2817 = vmul.f32 %v2815, 1.442695
        %v2818 = vpow.pop %v2817
        %v2819 = vmul.f32 %v2816, 1.442695
        %v2820 = vpow.pop %v2819
        %v2821 = vsel %vm1118, %v2818, 0.0
        %2822 = vadd.xlane.f32.xlu0 %v2821
        %v2823 = vpop.xlane.xlu0 %2822
        %v2824 = vsel %vm1118, %v2820, 0.0
        %2825 = vadd.xlane.f32.xlu0 %v2824
        %v2826 = vpop.xlane.xlu0 %2825
        %v2827 = vrcp.pop %v2823
        %v2828 = vrcp.pop %v2826
        %v2829 = vmul.f32 %v2818, %v2827
        %v2830 = vmul.f32 %v2820, %v2828
        %2833 = vrot.lane.b32.xlu0 %v2520, 96
        %v2834 = vpop.permute.xlu0 %2833
        %2835 = vrot.lane.b32.xlu0 %v2525, 96
        %v2836 = vpop.permute.xlu0 %2835
        %v2840 = vsel %vm1118, %v2829, 0
        %v2843 = vsel %vm1118, %v2830, 0
        %2845 = vmatprep.subr.mxu0 0.0
        %2846 = vmatpush1.msra.mxu0 0.0
        %2847 = vmatprep.subr.mxu0 0.0
        %2848 = vmatpush1.msra.mxu0 0.0
        %2849 = vmatprep.subr.mxu0 0.0
        %2850 = vmatpush1.msra.mxu0 0.0
        %2851 = vmatprep.subr.mxu0 0.0
        %2852 = vmatpush1.msra.mxu0 0.0
        %2853 = vmatprep.subr.mxu0 0.0
        %2854 = vmatpush1.msra.mxu0 0.0
        %2855 = vmatprep.subr.mxu0 0.0
        %2856 = vmatpush1.msra.mxu0 0.0
        %2857 = vmatprep.subr.mxu0 0.0
        %2858 = vmatpush1.msra.mxu0 0.0
        %2859 = vmatprep.subr.mxu0 0.0
        %2860 = vmatpush1.msra.mxu0 0.0
        %2861 = vmatprep.subr.mxu0 0.0
        %2862 = vmatpush1.msra.mxu0 0.0
        %2863 = vmatprep.subr.mxu0 0.0
        %2864 = vmatpush1.msra.mxu0 0.0
        %2865 = vmatprep.subr.mxu0 0.0
        %2866 = vmatpush1.msra.mxu0 0.0
        %2867 = vmatprep.subr.mxu0 0.0
        %2868 = vmatpush1.msra.mxu0 0.0
        %2869 = vmatprep.subr.mxu0 0.0
        %2870 = vmatpush1.msra.mxu0 0.0
        %2871 = vmatprep.subr.mxu0 0.0
        %2872 = vmatpush1.msra.mxu0 0.0
        %2873 = vmatprep.subr.mxu0 0.0
        %2874 = vmatpush1.msra.mxu0 %v2836
        %2875 = vmatprep.subr.mxu0 0.0
        %2876 = vmatpush1.msra.mxu0 %v2834
        %2877 = vmatprep.subr.mxu0 0.0
        %2878 = vmatpush2.msra.mxu0 0.0
        %2879 = vmatprep.subr.mxu0 0.0
        %2880 = vmatpush2.msra.mxu0 0.0
        %2881 = vmatprep.subr.mxu0 0.0
        %2882 = vmatpush2.msra.mxu0 0.0
        %2883 = vmatprep.subr.mxu0 0.0
        %2884 = vmatpush2.msra.mxu0 0.0
        %2885 = vmatprep.subr.mxu0 0.0
        %2886 = vmatpush2.msra.mxu0 0.0
        %2887 = vmatprep.subr.mxu0 0.0
        %2888 = vmatpush2.msra.mxu0 0.0
        %2889 = vmatprep.subr.mxu0 0.0
        %2890 = vmatpush2.msra.mxu0 0.0
        %2891 = vmatprep.subr.mxu0 0.0
        %2892 = vmatpush2.msra.mxu0 0.0
        %2893 = vmatprep.subr.mxu0 0.0
        %2894 = vmatpush2.msra.mxu0 0.0
        %2895 = vmatprep.subr.mxu0 0.0
        %2896 = vmatpush2.msra.mxu0 0.0
        %2897 = vmatprep.subr.mxu0 0.0
        %2898 = vmatpush2.msra.mxu0 0.0
        %2899 = vmatprep.subr.mxu0 0.0
        %2900 = vmatpush2.msra.mxu0 0.0
        %2901 = vmatprep.subr.mxu0 0.0
        %2902 = vmatpush2.msra.mxu0 0.0
        %2903 = vmatprep.subr.mxu0 0.0
        %2904 = vmatpush2.msra.mxu0 0.0
        %2905 = vmatprep.subr.mxu0 0.0
        %2906 = vmatpush2.msra.mxu0 0.0
        %2907 = vmatprep.subr.mxu0 0.0
        %2908 = vmatpush2.msra.mxu0 0.0
        %2909 = vmatprep.mubr.f32.mxu0 0.0
        %2910 = vmatmul.mubr.f32.gmra.mxu0 %v2840
        %v2911 = vpop.f32.mrf.mxu0
        %v2912 = vadd.f32 0.0, %v2911
        %v2913 = vpop.f32.mrf.mxu0
        %2914 = vmatprep.mubr.f32.mxu0 0.0
        %2915 = vmatmul.mubr.f32.gmra.mxu0 %v2843
        %v2916 = vpop.f32.mrf.mxu0
        %v2917 = vadd.f32 0.0, %v2916
        %v2918 = vpop.f32.mrf.mxu0
        %2919 = vdwg.mxu0
        %2920 = vrot.lane.b32.xlu0 %v2443, 64
        %v2921 = vpop.permute.xlu0 %2920
        %2922 = vrot.lane.b32.xlu0 %v2449, 64
        %v2923 = vpop.permute.xlu0 %2922
        %2924 = vrot.lane.b32.xlu0 %v2445, 64
        %v2925 = vpop.permute.xlu0 %2924
        %2926 = vrot.lane.b32.xlu0 %v2451, 64
        %v2927 = vpop.permute.xlu0 %2926
        %v2928 = vsel %vm1030, %v2921, 0
        %v2930 = vsel %vm1030, %v2923, 0
        %v2932 = vsel %vm1030, %v2925, 0
        %v2934 = vsel %vm1030, %v2927, 0
        %2936 = vmatprep.subr.mxu0 0.0
        %2937 = vmatpush1.xpose.msra.mxu0 0.0
        %2938 = vmatprep.subr.mxu0 0.0
        %2939 = vmatpush1.xpose.msra.mxu0 0.0
        %2940 = vmatprep.subr.mxu0 0.0
        %2941 = vmatpush1.xpose.msra.mxu0 0.0
        %2942 = vmatprep.subr.mxu0 0.0
        %2943 = vmatpush1.xpose.msra.mxu0 0.0
        %2944 = vmatprep.subr.mxu0 0.0
        %2945 = vmatpush1.xpose.msra.mxu0 0.0
        %2946 = vmatprep.subr.mxu0 0.0
        %2947 = vmatpush1.xpose.msra.mxu0 0.0
        %2948 = vmatprep.subr.mxu0 0.0
        %2949 = vmatpush1.xpose.msra.mxu0 0.0
        %2950 = vmatprep.subr.mxu0 0.0
        %2951 = vmatpush1.xpose.msra.mxu0 0.0
        %2952 = vmatprep.subr.mxu0 0.0
        %2953 = vmatpush1.xpose.msra.mxu0 0.0
        %2954 = vmatprep.subr.mxu0 0.0
        %2955 = vmatpush1.xpose.msra.mxu0 0.0
        %2956 = vmatprep.subr.mxu0 0.0
        %2957 = vmatpush1.xpose.msra.mxu0 0.0
        %2958 = vmatprep.subr.mxu0 0.0
        %2959 = vmatpush1.xpose.msra.mxu0 0.0
        %2960 = vmatprep.subr.mxu0 0.0
        %2961 = vmatpush1.xpose.msra.mxu0 0.0
        %2962 = vmatprep.subr.mxu0 0.0
        %2963 = vmatpush1.xpose.msra.mxu0 0.0
        %2964 = vmatprep.subr.mxu0 0.0
        %2965 = vmatpush1.xpose.msra.mxu0 %v2934
        %2966 = vmatprep.subr.mxu0 0.0
        %2967 = vmatpush1.xpose.msra.mxu0 %v2932
        %2968 = vmatprep.subr.mxu0 0.0
        %2969 = vmatpush2.xpose.msra.mxu0 0.0
        %2970 = vmatprep.subr.mxu0 0.0
        %2971 = vmatpush2.xpose.msra.mxu0 0.0
        %2972 = vmatprep.subr.mxu0 0.0
        %2973 = vmatpush2.xpose.msra.mxu0 0.0
        %2974 = vmatprep.subr.mxu0 0.0
        %2975 = vmatpush2.xpose.msra.mxu0 0.0
        %2976 = vmatprep.subr.mxu0 0.0
        %2977 = vmatpush2.xpose.msra.mxu0 0.0
        %2978 = vmatprep.subr.mxu0 0.0
        %2979 = vmatpush2.xpose.msra.mxu0 0.0
        %2980 = vmatprep.subr.mxu0 0.0
        %2981 = vmatpush2.xpose.msra.mxu0 0.0
        %2982 = vmatprep.subr.mxu0 0.0
        %2983 = vmatpush2.xpose.msra.mxu0 0.0
        %2984 = vmatprep.subr.mxu0 0.0
        %2985 = vmatpush2.xpose.msra.mxu0 0.0
        %2986 = vmatprep.subr.mxu0 0.0
        %2987 = vmatpush2.xpose.msra.mxu0 0.0
        %2988 = vmatprep.subr.mxu0 0.0
        %2989 = vmatpush2.xpose.msra.mxu0 0.0
        %2990 = vmatprep.subr.mxu0 0.0
        %2991 = vmatpush2.xpose.msra.mxu0 0.0
        %2992 = vmatprep.subr.mxu0 0.0
        %2993 = vmatpush2.xpose.msra.mxu0 0.0
        %2994 = vmatprep.subr.mxu0 0.0
        %2995 = vmatpush2.xpose.msra.mxu0 0.0
        %2996 = vmatprep.subr.mxu0 0.0
        %2997 = vmatpush2.xpose.msra.mxu0 0.0
        %2998 = vmatprep.subr.mxu0 0.0
        %2999 = vmatpush2.xpose.msra.mxu0 0.0
        %3000 = vmatprep.mubr.f32.mxu0 0.0
        %3001 = vmatmul.mubr.f32.gmra.mxu0 %v2928
        %v3002 = vpop.f32.mrf.mxu0
        %v3003 = vadd.f32 %v1028, %v3002
        %v3004 = vpop.f32.mrf.mxu0
        %3005 = vmatprep.mubr.f32.mxu0 0.0
        %3006 = vmatmul.mubr.f32.gmra.mxu0 %v2930
        %v3007 = vpop.f32.mrf.mxu0
        %v3008 = vadd.f32 %v1028, %v3007
        %v3009 = vpop.f32.mrf.mxu0
        %3010 = vdwg.mxu0
        %v3011 = vsel %vm1118, %v3003, -inf
        %3012 = vmax.xlane.f32.xlu0 %v3011
        %v3013 = vpop.xlane.xlu0 %3012
        %v3014 = vsel %vm1118, %v3008, -inf
        %3015 = vmax.xlane.f32.xlu0 %v3014
        %v3016 = vpop.xlane.xlu0 %3015
        %v3017 = vsub.f32 %v3003, %v3013
        %v3018 = vsub.f32 %v3008, %v3016
        %v3019 = vmul.f32 %v3017, 1.442695
        %v3020 = vpow.pop %v3019
        %v3021 = vmul.f32 %v3018, 1.442695
        %v3022 = vpow.pop %v3021
        %v3023 = vsel %vm1118, %v3020, 0.0
        %3024 = vadd.xlane.f32.xlu0 %v3023
        %v3025 = vpop.xlane.xlu0 %3024
        %v3026 = vsel %vm1118, %v3022, 0.0
        %3027 = vadd.xlane.f32.xlu0 %v3026
        %v3028 = vpop.xlane.xlu0 %3027
        %v3029 = vrcp.pop %v3025
        %v3030 = vrcp.pop %v3028
        %v3031 = vmul.f32 %v3020, %v3029
        %v3032 = vmul.f32 %v3022, %v3030
        %3033 = vrot.lane.b32.xlu0 %v2520, 64
        %v3034 = vpop.permute.xlu0 %3033
        %3035 = vrot.lane.b32.xlu0 %v2525, 64
        %v3036 = vpop.permute.xlu0 %3035
        %v3040 = vsel %vm1118, %v3031, 0
        %v3043 = vsel %vm1118, %v3032, 0
        %3045 = vmatprep.subr.mxu0 0.0
        %3046 = vmatpush1.msra.mxu0 0.0
        %3047 = vmatprep.subr.mxu0 0.0
        %3048 = vmatpush1.msra.mxu0 0.0
        %3049 = vmatprep.subr.mxu0 0.0
        %3050 = vmatpush1.msra.mxu0 0.0
        %3051 = vmatprep.subr.mxu0 0.0
        %3052 = vmatpush1.msra.mxu0 0.0
        %3053 = vmatprep.subr.mxu0 0.0
        %3054 = vmatpush1.msra.mxu0 0.0
        %3055 = vmatprep.subr.mxu0 0.0
        %3056 = vmatpush1.msra.mxu0 0.0
        %3057 = vmatprep.subr.mxu0 0.0
        %3058 = vmatpush1.msra.mxu0 0.0
        %3059 = vmatprep.subr.mxu0 0.0
        %3060 = vmatpush1.msra.mxu0 0.0
        %3061 = vmatprep.subr.mxu0 0.0
        %3062 = vmatpush1.msra.mxu0 0.0
        %3063 = vmatprep.subr.mxu0 0.0
        %3064 = vmatpush1.msra.mxu0 0.0
        %3065 = vmatprep.subr.mxu0 0.0
        %3066 = vmatpush1.msra.mxu0 0.0
        %3067 = vmatprep.subr.mxu0 0.0
        %3068 = vmatpush1.msra.mxu0 0.0
        %3069 = vmatprep.subr.mxu0 0.0
        %3070 = vmatpush1.msra.mxu0 0.0
        %3071 = vmatprep.subr.mxu0 0.0
        %3072 = vmatpush1.msra.mxu0 0.0
        %3073 = vmatprep.subr.mxu0 0.0
        %3074 = vmatpush1.msra.mxu0 %v3036
        %3075 = vmatprep.subr.mxu0 0.0
        %3076 = vmatpush1.msra.mxu0 %v3034
        %3077 = vmatprep.subr.mxu0 0.0
        %3078 = vmatpush2.msra.mxu0 0.0
        %3079 = vmatprep.subr.mxu0 0.0
        %3080 = vmatpush2.msra.mxu0 0.0
        %3081 = vmatprep.subr.mxu0 0.0
        %3082 = vmatpush2.msra.mxu0 0.0
        %3083 = vmatprep.subr.mxu0 0.0
        %3084 = vmatpush2.msra.mxu0 0.0
        %3085 = vmatprep.subr.mxu0 0.0
        %3086 = vmatpush2.msra.mxu0 0.0
        %3087 = vmatprep.subr.mxu0 0.0
        %3088 = vmatpush2.msra.mxu0 0.0
        %3089 = vmatprep.subr.mxu0 0.0
        %3090 = vmatpush2.msra.mxu0 0.0
        %3091 = vmatprep.subr.mxu0 0.0
        %3092 = vmatpush2.msra.mxu0 0.0
        %3093 = vmatprep.subr.mxu0 0.0
        %3094 = vmatpush2.msra.mxu0 0.0
        %3095 = vmatprep.subr.mxu0 0.0
        %3096 = vmatpush2.msra.mxu0 0.0
        %3097 = vmatprep.subr.mxu0 0.0
        %3098 = vmatpush2.msra.mxu0 0.0
        %3099 = vmatprep.subr.mxu0 0.0
        %3100 = vmatpush2.msra.mxu0 0.0
        %3101 = vmatprep.subr.mxu0 0.0
        %3102 = vmatpush2.msra.mxu0 0.0
        %3103 = vmatprep.subr.mxu0 0.0
        %3104 = vmatpush2.msra.mxu0 0.0
        %3105 = vmatprep.subr.mxu0 0.0
        %3106 = vmatpush2.msra.mxu0 0.0
        %3107 = vmatprep.subr.mxu0 0.0
        %3108 = vmatpush2.msra.mxu0 0.0
        %3109 = vmatprep.mubr.f32.mxu0 0.0
        %3110 = vmatmul.mubr.f32.gmra.mxu0 %v3040
        %v3111 = vpop.f32.mrf.mxu0
        %v3112 = vadd.f32 0.0, %v3111
        %v3113 = vpop.f32.mrf.mxu0
        %3114 = vmatprep.mubr.f32.mxu0 0.0
        %3115 = vmatmul.mubr.f32.gmra.mxu0 %v3043
        %v3116 = vpop.f32.mrf.mxu0
        %v3117 = vadd.f32 0.0, %v3116
        %v3118 = vpop.f32.mrf.mxu0
        %3119 = vdwg.mxu0
        %3120 = vrot.lane.b32.xlu0 %v2443, 32
        %v3121 = vpop.permute.xlu0 %3120
        %3122 = vrot.lane.b32.xlu0 %v2449, 32
        %v3123 = vpop.permute.xlu0 %3122
        %3124 = vrot.lane.b32.xlu0 %v2445, 32
        %v3125 = vpop.permute.xlu0 %3124
        %3126 = vrot.lane.b32.xlu0 %v2451, 32
        %v3127 = vpop.permute.xlu0 %3126
        %v3128 = vsel %vm1030, %v3121, 0
        %v3130 = vsel %vm1030, %v3123, 0
        %v3132 = vsel %vm1030, %v3125, 0
        %v3134 = vsel %vm1030, %v3127, 0
        %3136 = vmatprep.subr.mxu0 0.0
        %3137 = vmatpush1.xpose.msra.mxu0 0.0
        %3138 = vmatprep.subr.mxu0 0.0
        %3139 = vmatpush1.xpose.msra.mxu0 0.0
        %3140 = vmatprep.subr.mxu0 0.0
        %3141 = vmatpush1.xpose.msra.mxu0 0.0
        %3142 = vmatprep.subr.mxu0 0.0
        %3143 = vmatpush1.xpose.msra.mxu0 0.0
        %3144 = vmatprep.subr.mxu0 0.0
        %3145 = vmatpush1.xpose.msra.mxu0 0.0
        %3146 = vmatprep.subr.mxu0 0.0
        %3147 = vmatpush1.xpose.msra.mxu0 0.0
        %3148 = vmatprep.subr.mxu0 0.0
        %3149 = vmatpush1.xpose.msra.mxu0 0.0
        %3150 = vmatprep.subr.mxu0 0.0
        %3151 = vmatpush1.xpose.msra.mxu0 0.0
        %3152 = vmatprep.subr.mxu0 0.0
        %3153 = vmatpush1.xpose.msra.mxu0 0.0
        %3154 = vmatprep.subr.mxu0 0.0
        %3155 = vmatpush1.xpose.msra.mxu0 0.0
        %3156 = vmatprep.subr.mxu0 0.0
        %3157 = vmatpush1.xpose.msra.mxu0 0.0
        %3158 = vmatprep.subr.mxu0 0.0
        %3159 = vmatpush1.xpose.msra.mxu0 0.0
        %3160 = vmatprep.subr.mxu0 0.0
        %3161 = vmatpush1.xpose.msra.mxu0 0.0
        %3162 = vmatprep.subr.mxu0 0.0
        %3163 = vmatpush1.xpose.msra.mxu0 0.0
        %3164 = vmatprep.subr.mxu0 0.0
        %3165 = vmatpush1.xpose.msra.mxu0 %v3134
        %3166 = vmatprep.subr.mxu0 0.0
        %3167 = vmatpush1.xpose.msra.mxu0 %v3132
        %3168 = vmatprep.subr.mxu0 0.0
        %3169 = vmatpush2.xpose.msra.mxu0 0.0
        %3170 = vmatprep.subr.mxu0 0.0
        %3171 = vmatpush2.xpose.msra.mxu0 0.0
        %3172 = vmatprep.subr.mxu0 0.0
        %3173 = vmatpush2.xpose.msra.mxu0 0.0
        %3174 = vmatprep.subr.mxu0 0.0
        %3175 = vmatpush2.xpose.msra.mxu0 0.0
        %3176 = vmatprep.subr.mxu0 0.0
        %3177 = vmatpush2.xpose.msra.mxu0 0.0
        %3178 = vmatprep.subr.mxu0 0.0
        %3179 = vmatpush2.xpose.msra.mxu0 0.0
        %3180 = vmatprep.subr.mxu0 0.0
        %3181 = vmatpush2.xpose.msra.mxu0 0.0
        %3182 = vmatprep.subr.mxu0 0.0
        %3183 = vmatpush2.xpose.msra.mxu0 0.0
        %3184 = vmatprep.subr.mxu0 0.0
        %3185 = vmatpush2.xpose.msra.mxu0 0.0
        %3186 = vmatprep.subr.mxu0 0.0
        %3187 = vmatpush2.xpose.msra.mxu0 0.0
        %3188 = vmatprep.subr.mxu0 0.0
        %3189 = vmatpush2.xpose.msra.mxu0 0.0
        %3190 = vmatprep.subr.mxu0 0.0
        %3191 = vmatpush2.xpose.msra.mxu0 0.0
        %3192 = vmatprep.subr.mxu0 0.0
        %3193 = vmatpush2.xpose.msra.mxu0 0.0
        %3194 = vmatprep.subr.mxu0 0.0
        %3195 = vmatpush2.xpose.msra.mxu0 0.0
        %3196 = vmatprep.subr.mxu0 0.0
        %3197 = vmatpush2.xpose.msra.mxu0 0.0
        %3198 = vmatprep.subr.mxu0 0.0
        %3199 = vmatpush2.xpose.msra.mxu0 0.0
        %3200 = vmatprep.mubr.f32.mxu0 0.0
        %3201 = vmatmul.mubr.f32.gmra.mxu0 %v3128
        %v3202 = vpop.f32.mrf.mxu0
        %v3203 = vadd.f32 %v1028, %v3202
        %v3204 = vpop.f32.mrf.mxu0
        %3205 = vmatprep.mubr.f32.mxu0 0.0
        %3206 = vmatmul.mubr.f32.gmra.mxu0 %v3130
        %v3207 = vpop.f32.mrf.mxu0
        %v3208 = vadd.f32 %v1028, %v3207
        %v3209 = vpop.f32.mrf.mxu0
        %3210 = vdwg.mxu0
        %v3211 = vsel %vm1118, %v3203, -inf
        %3212 = vmax.xlane.f32.xlu0 %v3211
        %v3213 = vpop.xlane.xlu0 %3212
        %v3214 = vsel %vm1118, %v3208, -inf
        %3215 = vmax.xlane.f32.xlu0 %v3214
        %v3216 = vpop.xlane.xlu0 %3215
        %v3217 = vsub.f32 %v3203, %v3213
        %v3218 = vsub.f32 %v3208, %v3216
        %v3219 = vmul.f32 %v3217, 1.442695
        %v3220 = vpow.pop %v3219
        %v3221 = vmul.f32 %v3218, 1.442695
        %v3222 = vpow.pop %v3221
        %v3223 = vsel %vm1118, %v3220, 0.0
        %3224 = vadd.xlane.f32.xlu0 %v3223
        %v3225 = vpop.xlane.xlu0 %3224
        %v3226 = vsel %vm1118, %v3222, 0.0
        %3227 = vadd.xlane.f32.xlu0 %v3226
        %v3228 = vpop.xlane.xlu0 %3227
        %v3229 = vrcp.pop %v3225
        %v3230 = vrcp.pop %v3228
        %v3231 = vmul.f32 %v3220, %v3229
        %v3232 = vmul.f32 %v3222, %v3230
        %3233 = vrot.lane.b32.xlu0 %v2520, 32
        %v3234 = vpop.permute.xlu0 %3233
        %3235 = vrot.lane.b32.xlu0 %v2525, 32
        %v3236 = vpop.permute.xlu0 %3235
        %v3240 = vsel %vm1118, %v3231, 0
        %v3243 = vsel %vm1118, %v3232, 0
        %3245 = vmatprep.subr.mxu0 0.0
        %3246 = vmatpush1.msra.mxu0 0.0
        %3247 = vmatprep.subr.mxu0 0.0
        %3248 = vmatpush1.msra.mxu0 0.0
        %3249 = vmatprep.subr.mxu0 0.0
        %3250 = vmatpush1.msra.mxu0 0.0
        %3251 = vmatprep.subr.mxu0 0.0
        %3252 = vmatpush1.msra.mxu0 0.0
        %3253 = vmatprep.subr.mxu0 0.0
        %3254 = vmatpush1.msra.mxu0 0.0
        %3255 = vmatprep.subr.mxu0 0.0
        %3256 = vmatpush1.msra.mxu0 0.0
        %3257 = vmatprep.subr.mxu0 0.0
        %3258 = vmatpush1.msra.mxu0 0.0
        %3259 = vmatprep.subr.mxu0 0.0
        %3260 = vmatpush1.msra.mxu0 0.0
        %3261 = vmatprep.subr.mxu0 0.0
        %3262 = vmatpush1.msra.mxu0 0.0
        %3263 = vmatprep.subr.mxu0 0.0
        %3264 = vmatpush1.msra.mxu0 0.0
        %3265 = vmatprep.subr.mxu0 0.0
        %3266 = vmatpush1.msra.mxu0 0.0
        %3267 = vmatprep.subr.mxu0 0.0
        %3268 = vmatpush1.msra.mxu0 0.0
        %3269 = vmatprep.subr.mxu0 0.0
        %3270 = vmatpush1.msra.mxu0 0.0
        %3271 = vmatprep.subr.mxu0 0.0
        %3272 = vmatpush1.msra.mxu0 0.0
        %3273 = vmatprep.subr.mxu0 0.0
        %3274 = vmatpush1.msra.mxu0 %v3236
        %3275 = vmatprep.subr.mxu0 0.0
        %3276 = vmatpush1.msra.mxu0 %v3234
        %3277 = vmatprep.subr.mxu0 0.0
        %3278 = vmatpush2.msra.mxu0 0.0
        %3279 = vmatprep.subr.mxu0 0.0
        %3280 = vmatpush2.msra.mxu0 0.0
        %3281 = vmatprep.subr.mxu0 0.0
        %3282 = vmatpush2.msra.mxu0 0.0
        %3283 = vmatprep.subr.mxu0 0.0
        %3284 = vmatpush2.msra.mxu0 0.0
        %3285 = vmatprep.subr.mxu0 0.0
        %3286 = vmatpush2.msra.mxu0 0.0
        %3287 = vmatprep.subr.mxu0 0.0
        %3288 = vmatpush2.msra.mxu0 0.0
        %3289 = vmatprep.subr.mxu0 0.0
        %3290 = vmatpush2.msra.mxu0 0.0
        %3291 = vmatprep.subr.mxu0 0.0
        %3292 = vmatpush2.msra.mxu0 0.0
        %3293 = vmatprep.subr.mxu0 0.0
        %3294 = vmatpush2.msra.mxu0 0.0
        %3295 = vmatprep.subr.mxu0 0.0
        %3296 = vmatpush2.msra.mxu0 0.0
        %3297 = vmatprep.subr.mxu0 0.0
        %3298 = vmatpush2.msra.mxu0 0.0
        %3299 = vmatprep.subr.mxu0 0.0
        %3300 = vmatpush2.msra.mxu0 0.0
        %3301 = vmatprep.subr.mxu0 0.0
        %3302 = vmatpush2.msra.mxu0 0.0
        %3303 = vmatprep.subr.mxu0 0.0
        %3304 = vmatpush2.msra.mxu0 0.0
        %3305 = vmatprep.subr.mxu0 0.0
        %3306 = vmatpush2.msra.mxu0 0.0
        %3307 = vmatprep.subr.mxu0 0.0
        %3308 = vmatpush2.msra.mxu0 0.0
        %3309 = vmatprep.mubr.f32.mxu0 0.0
        %3310 = vmatmul.mubr.f32.gmra.mxu0 %v3240
        %v3311 = vpop.f32.mrf.mxu0
        %v3312 = vadd.f32 0.0, %v3311
        %v3313 = vpop.f32.mrf.mxu0
        %3314 = vmatprep.mubr.f32.mxu0 0.0
        %3315 = vmatmul.mubr.f32.gmra.mxu0 %v3243
        %v3316 = vpop.f32.mrf.mxu0
        %v3317 = vadd.f32 0.0, %v3316
        %v3318 = vpop.f32.mrf.mxu0
        %3319 = vdwg.mxu0
        %3322 = vrot.lane.b32.xlu0 %v2912, 32
        %v3323 = vpop.permute.xlu0 %3322
        %3324 = vrot.lane.b32.xlu0 %v2917, 32
        %v3325 = vpop.permute.xlu0 %3324
        %3330 = vrot.lane.b32.xlu0 %v3112, 64
        %v3331 = vpop.permute.xlu0 %3330
        %3332 = vrot.lane.b32.xlu0 %v3117, 64
        %v3333 = vpop.permute.xlu0 %3332
        %3338 = vrot.lane.b32.xlu0 %v3312, 96
        %v3339 = vpop.permute.xlu0 %3338
        %3340 = vrot.lane.b32.xlu0 %v3317, 96
        %v3341 = vpop.permute.xlu0 %3340
        %v3344 = vsel %vm1030, %v2710, %v3323
        %v3345 = vsel %vm1030, %v2715, %v3325
        %v3346 = vsel %vm1850, %v3344, %v3331
        %v3347 = vsel %vm1850, %v3345, %v3333
        %v3348 = vsel %vm1853, %v3346, %v3339
        %v3349 = vsel %vm1853, %v3347, %v3341
        %s3350 = scalar_lea.vmem [#allocation11], 128
        %v3351 = vld [vmem:[%s3350] sm:$0xff]
        %v3352 = vld [vmem:[%s3350 + $0x8] sm:$0xff]
        %v3353 = vld [vmem:[%s3350 + $0x10] sm:$0xff]
        %v3354 = vld [vmem:[%s3350 + $0x18] sm:$0xff]
        %v3355 = vld [vmem:[%s3350 + $0x20] sm:$0xff]
        %v3356 = vld [vmem:[%s3350 + $0x28] sm:$0xff]
        %v3357 = vld [vmem:[%s3350 + $0x30] sm:$0xff]
        %v3358 = vld [vmem:[%s3350 + $0x38] sm:$0xff]
        %v3359 = vld [vmem:[%s3350 + $0x40] sm:$0xff]
        %v3360 = vld [vmem:[%s3350 + $0x48] sm:$0xff]
        %v3361 = vld [vmem:[%s3350 + $0x50] sm:$0xff]
        %v3362 = vld [vmem:[%s3350 + $0x58] sm:$0xff]
        %v3363 = vld [vmem:[%s3350 + $0x60] sm:$0xff]
        %v3364 = vld [vmem:[%s3350 + $0x68] sm:$0xff]
        %v3365 = vld [vmem:[%s3350 + $0x70] sm:$0xff]
        %v3366 = vld [vmem:[%s3350 + $0x78] sm:$0xff]
        %s3367 = scalar_lea.vmem %s7, 1
        %v3368 = vld [vmem:[%s3367] sm:$0x1]
        %v3370 = vlaneseq
        %v3371 = vshrl.u32 %v3370, 7
        %v3372 = vsub.s32 0, %v3371
        %v3373 = vrot.slane %v3368, %v3372
        %3375 = vmatprep.subr.mxu0 0.0
        %3376 = vmatpush1.msra.mxu0 %v3366
        %3377 = vmatprep.subr.mxu0 0.0
        %3378 = vmatpush1.msra.mxu0 %v3365
        %3379 = vmatprep.subr.mxu0 0.0
        %3380 = vmatpush1.msra.mxu0 %v3364
        %3381 = vmatprep.subr.mxu0 0.0
        %3382 = vmatpush1.msra.mxu0 %v3363
        %3383 = vmatprep.subr.mxu0 0.0
        %3384 = vmatpush1.msra.mxu0 %v3362
        %3385 = vmatprep.subr.mxu0 0.0
        %3386 = vmatpush1.msra.mxu0 %v3361
        %3387 = vmatprep.subr.mxu0 0.0
        %3388 = vmatpush1.msra.mxu0 %v3360
        %3389 = vmatprep.subr.mxu0 0.0
        %3390 = vmatpush1.msra.mxu0 %v3359
        %3391 = vmatprep.subr.mxu0 0.0
        %3392 = vmatpush1.msra.mxu0 %v3358
        %3393 = vmatprep.subr.mxu0 0.0
        %3394 = vmatpush1.msra.mxu0 %v3357
        %3395 = vmatprep.subr.mxu0 0.0
        %3396 = vmatpush1.msra.mxu0 %v3356
        %3397 = vmatprep.subr.mxu0 0.0
        %3398 = vmatpush1.msra.mxu0 %v3355
        %3399 = vmatprep.subr.mxu0 0.0
        %3400 = vmatpush1.msra.mxu0 %v3354
        %3401 = vmatprep.subr.mxu0 0.0
        %3402 = vmatpush1.msra.mxu0 %v3353
        %3403 = vmatprep.subr.mxu0 0.0
        %3404 = vmatpush1.msra.mxu0 %v3352
        %3405 = vmatprep.subr.mxu0 0.0
        %3406 = vmatpush1.msra.mxu0 %v3351
        %3407 = vmatprep.subr.mxu0 0.0
        %3408 = vmatpush2.msra.mxu0 0.0
        %3409 = vmatprep.subr.mxu0 0.0
        %3410 = vmatpush2.msra.mxu0 0.0
        %3411 = vmatprep.subr.mxu0 0.0
        %3412 = vmatpush2.msra.mxu0 0.0
        %3413 = vmatprep.subr.mxu0 0.0
        %3414 = vmatpush2.msra.mxu0 0.0
        %3415 = vmatprep.subr.mxu0 0.0
        %3416 = vmatpush2.msra.mxu0 0.0
        %3417 = vmatprep.subr.mxu0 0.0
        %3418 = vmatpush2.msra.mxu0 0.0
        %3419 = vmatprep.subr.mxu0 0.0
        %3420 = vmatpush2.msra.mxu0 0.0
        %3421 = vmatprep.subr.mxu0 0.0
        %3422 = vmatpush2.msra.mxu0 0.0
        %3423 = vmatprep.subr.mxu0 0.0
        %3424 = vmatpush2.msra.mxu0 0.0
        %3425 = vmatprep.subr.mxu0 0.0
        %3426 = vmatpush2.msra.mxu0 0.0
        %3427 = vmatprep.subr.mxu0 0.0
        %3428 = vmatpush2.msra.mxu0 0.0
        %3429 = vmatprep.subr.mxu0 0.0
        %3430 = vmatpush2.msra.mxu0 0.0
        %3431 = vmatprep.subr.mxu0 0.0
        %3432 = vmatpush2.msra.mxu0 0.0
        %3433 = vmatprep.subr.mxu0 0.0
        %3434 = vmatpush2.msra.mxu0 0.0
        %3435 = vmatprep.subr.mxu0 0.0
        %3436 = vmatpush2.msra.mxu0 0.0
        %3437 = vmatprep.subr.mxu0 0.0
        %3438 = vmatpush2.msra.mxu0 0.0
        %3439 = vmatprep.mubr.f32.mxu0 0.0
        %3440 = vmatmul.mubr.f32.gmra.mxu0 %v3348
        %v3441 = vpop.f32.mrf.mxu0
        %v3442 = vadd.f32 %v3373, %v3441
        %v3443 = vpop.f32.mrf.mxu0
        %3444 = vmatprep.mubr.f32.mxu0 0.0
        %3445 = vmatmul.mubr.f32.gmra.mxu0 %v3349
        %v3446 = vpop.f32.mrf.mxu0
        %v3447 = vadd.f32 %v3373, %v3446
        %v3448 = vpop.f32.mrf.mxu0
        %3449 = vdwg.mxu0
        %v3450 = vadd.f32 %v3442, %v2307
        %v3451 = vadd.f32 %v3447, %v2308
        %s3452 = scalar_lea.vmem %s8, 1
        %v3453 = vld [vmem:[%s3452] sm:$0x1]
        %s3454 = scalar_lea.vmem %s9, 1
        %v3455 = vld [vmem:[%s3454] sm:$0x1]
        %3456 = vadd.xlane.f32.xlu0 %v3450
        %v3457 = vpop.xlane.xlu0 %3456
        %3458 = vadd.xlane.f32.xlu0 %v3451
        %v3459 = vpop.xlane.xlu0 %3458
        %v3460 = vmul.f32 %v3457, %v772
        %v3461 = vmul.f32 %v3459, %v772
        %v3462 = vsub.f32 %v3450, %v3460
        %v3463 = vsub.f32 %v3451, %v3461
        %v3464 = vmul.f32 %v3462, %v3462
        %v3465 = vmul.f32 %v3463, %v3463
        %3466 = vadd.xlane.f32.xlu0 %v3464
        %v3467 = vpop.xlane.xlu0 %3466
        %3468 = vadd.xlane.f32.xlu0 %v3465
        %v3469 = vpop.xlane.xlu0 %3468
        %v3470 = vmul.f32 %v3467, %v772
        %v3471 = vmul.f32 %v3469, %v772
        %v3472 = vadd.f32 %v3470, 1e-12
        %v3473 = vadd.f32 %v3471, 1e-12
        %v3474 = vrsqrt.pop %v3472
        %v3475 = vrsqrt.pop %v3473
        %v3476 = vmul.f32 %v3462, %v3474
        %v3477 = vmul.f32 %v3463, %v3475
        %v3479 = vlaneseq
        %v3480 = vshrl.u32 %v3479, 7
        %v3481 = vsub.s32 0, %v3480
        %v3482 = vrot.slane %v3453, %v3481
        %v3484 = vmul.f32 %v3482, %v3476
        %v3485 = vmul.f32 %v3482, %v3477
        %v3487 = vlaneseq
        %v3488 = vshrl.u32 %v3487, 7
        %v3489 = vsub.s32 0, %v3488
        %v3490 = vrot.slane %v3455, %v3489
        %v3492 = vadd.f32 %v3484, %v3490
        %v3493 = vadd.f32 %v3485, %v3490
        %s3494 = scalar_lea.vmem [#allocation13], 256
        %v3495 = vld [vmem:[%s3494] sm:$0xff]
        %v3496 = vld [vmem:[%s3494 + $0x8] sm:$0xff]
        %v3497 = vld [vmem:[%s3494 + $0x10] sm:$0xff]
        %v3498 = vld [vmem:[%s3494 + $0x18] sm:$0xff]
        %v3499 = vld [vmem:[%s3494 + $0x20] sm:$0xff]
        %v3500 = vld [vmem:[%s3494 + $0x28] sm:$0xff]
        %v3501 = vld [vmem:[%s3494 + $0x30] sm:$0xff]
        %v3502 = vld [vmem:[%s3494 + $0x38] sm:$0xff]
        %v3503 = vld [vmem:[%s3494 + $0x40] sm:$0xff]
        %v3504 = vld [vmem:[%s3494 + $0x48] sm:$0xff]
        %v3505 = vld [vmem:[%s3494 + $0x50] sm:$0xff]
        %v3506 = vld [vmem:[%s3494 + $0x58] sm:$0xff]
        %v3507 = vld [vmem:[%s3494 + $0x60] sm:$0xff]
        %v3508 = vld [vmem:[%s3494 + $0x68] sm:$0xff]
        %v3509 = vld [vmem:[%s3494 + $0x70] sm:$0xff]
        %v3510 = vld [vmem:[%s3494 + $0x78] sm:$0xff]
        %v3511 = vld [vmem:[%s3494 + $0x80] sm:$0xff]
        %v3512 = vld [vmem:[%s3494 + $0x88] sm:$0xff]
        %v3513 = vld [vmem:[%s3494 + $0x90] sm:$0xff]
        %v3514 = vld [vmem:[%s3494 + $0x98] sm:$0xff]
        %v3515 = vld [vmem:[%s3494 + $0xa0] sm:$0xff]
        %v3516 = vld [vmem:[%s3494 + $0xa8] sm:$0xff]
        %v3517 = vld [vmem:[%s3494 + $0xb0] sm:$0xff]
        %v3518 = vld [vmem:[%s3494 + $0xb8] sm:$0xff]
        %v3519 = vld [vmem:[%s3494 + $0xc0] sm:$0xff]
        %v3520 = vld [vmem:[%s3494 + $0xc8] sm:$0xff]
        %v3521 = vld [vmem:[%s3494 + $0xd0] sm:$0xff]
        %v3522 = vld [vmem:[%s3494 + $0xd8] sm:$0xff]
        %v3523 = vld [vmem:[%s3494 + $0xe0] sm:$0xff]
        %v3524 = vld [vmem:[%s3494 + $0xe8] sm:$0xff]
        %v3525 = vld [vmem:[%s3494 + $0xf0] sm:$0xff]
        %v3526 = vld [vmem:[%s3494 + $0xf8] sm:$0xff]
        %s3527 = scalar_lea.vmem %s11, 2
        %v3528 = vld [vmem:[%s3527] sm:$0x3]
        %v3530 = vlaneseq
        %v3531 = vshrl.u32 %v3530, 7
        %v3532 = vsub.s32 0, %v3531
        %v3533 = vrot.slane %v3528, %v3532
        %v3534 = vlaneseq
        %v3535 = vshrl.u32 %v3534, 7
        %v3536 = vsub.s32 1, %v3535
        %v3537 = vrot.slane %v3528, %v3536
        %3540 = vmatprep.subr.mxu0 %v3526
        %3541 = vmatpush1.msra.mxu0 %v3525
        %3542 = vmatprep.subr.mxu0 %v3524
        %3543 = vmatpush1.msra.mxu0 %v3523
        %3544 = vmatprep.subr.mxu0 %v3522
        %3545 = vmatpush1.msra.mxu0 %v3521
        %3546 = vmatprep.subr.mxu0 %v3520
        %3547 = vmatpush1.msra.mxu0 %v3519
        %3548 = vmatprep.subr.mxu0 %v3518
        %3549 = vmatpush1.msra.mxu0 %v3517
        %3550 = vmatprep.subr.mxu0 %v3516
        %3551 = vmatpush1.msra.mxu0 %v3515
        %3552 = vmatprep.subr.mxu0 %v3514
        %3553 = vmatpush1.msra.mxu0 %v3513
        %3554 = vmatprep.subr.mxu0 %v3512
        %3555 = vmatpush1.msra.mxu0 %v3511
        %3556 = vmatprep.subr.mxu0 %v3510
        %3557 = vmatpush1.msra.mxu0 %v3509
        %3558 = vmatprep.subr.mxu0 %v3508
        %3559 = vmatpush1.msra.mxu0 %v3507
        %3560 = vmatprep.subr.mxu0 %v3506
        %3561 = vmatpush1.msra.mxu0 %v3505
        %3562 = vmatprep.subr.mxu0 %v3504
        %3563 = vmatpush1.msra.mxu0 %v3503
        %3564 = vmatprep.subr.mxu0 %v3502
        %3565 = vmatpush1.msra.mxu0 %v3501
        %3566 = vmatprep.subr.mxu0 %v3500
        %3567 = vmatpush1.msra.mxu0 %v3499
        %3568 = vmatprep.subr.mxu0 %v3498
        %3569 = vmatpush1.msra.mxu0 %v3497
        %3570 = vmatprep.subr.mxu0 %v3496
        %3571 = vmatpush1.msra.mxu0 %v3495
        %3572 = vmatprep.subr.mxu0 0.0
        %3573 = vmatpush2.msra.mxu0 0.0
        %3574 = vmatprep.subr.mxu0 0.0
        %3575 = vmatpush2.msra.mxu0 0.0
        %3576 = vmatprep.subr.mxu0 0.0
        %3577 = vmatpush2.msra.mxu0 0.0
        %3578 = vmatprep.subr.mxu0 0.0
        %3579 = vmatpush2.msra.mxu0 0.0
        %3580 = vmatprep.subr.mxu0 0.0
        %3581 = vmatpush2.msra.mxu0 0.0
        %3582 = vmatprep.subr.mxu0 0.0
        %3583 = vmatpush2.msra.mxu0 0.0
        %3584 = vmatprep.subr.mxu0 0.0
        %3585 = vmatpush2.msra.mxu0 0.0
        %3586 = vmatprep.subr.mxu0 0.0
        %3587 = vmatpush2.msra.mxu0 0.0
        %3588 = vmatprep.subr.mxu0 0.0
        %3589 = vmatpush2.msra.mxu0 0.0
        %3590 = vmatprep.subr.mxu0 0.0
        %3591 = vmatpush2.msra.mxu0 0.0
        %3592 = vmatprep.subr.mxu0 0.0
        %3593 = vmatpush2.msra.mxu0 0.0
        %3594 = vmatprep.subr.mxu0 0.0
        %3595 = vmatpush2.msra.mxu0 0.0
        %3596 = vmatprep.subr.mxu0 0.0
        %3597 = vmatpush2.msra.mxu0 0.0
        %3598 = vmatprep.subr.mxu0 0.0
        %3599 = vmatpush2.msra.mxu0 0.0
        %3600 = vmatprep.subr.mxu0 0.0
        %3601 = vmatpush2.msra.mxu0 0.0
        %3602 = vmatprep.subr.mxu0 0.0
        %3603 = vmatpush2.msra.mxu0 0.0
        %3604 = vmatprep.mubr.f32.mxu0 0.0
        %3605 = vmatmul.mubr.f32.gmra.mxu0 %v3492
        %v3606 = vpop.f32.mrf.mxu0
        %v3607 = vadd.f32 %v3533, %v3606
        %v3608 = vpop.f32.mrf.mxu0
        %v3609 = vadd.f32 %v3537, %v3608
        %3610 = vmatprep.mubr.f32.mxu0 0.0
        %3611 = vmatmul.mubr.f32.gmra.mxu0 %v3493
        %v3612 = vpop.f32.mrf.mxu0
        %v3613 = vadd.f32 %v3533, %v3612
        %v3614 = vpop.f32.mrf.mxu0
        %v3615 = vadd.f32 %v3537, %v3614
        %3616 = vdwg.mxu0
        %v3617 = vmul.f32 %v3607, 0.5
        %v3618 = vmul.f32 %v3609, 0.5
        %v3619 = vmul.f32 %v3613, 0.5
        %v3620 = vmul.f32 %v3615, 0.5
        %v3621 = vmul.f32 %v3607, 0.044715
        %v3622 = vmul.f32 %v3609, 0.044715
        %v3623 = vmul.f32 %v3613, 0.044715
        %v3624 = vmul.f32 %v3615, 0.044715
        %v3625 = vmul.f32 %v3621, %v3607
        %v3626 = vmul.f32 %v3622, %v3609
        %v3627 = vmul.f32 %v3623, %v3613
        %v3628 = vmul.f32 %v3624, %v3615
        %v3629 = vmul.f32 %v3625, %v3607
        %v3630 = vmul.f32 %v3626, %v3609
        %v3631 = vmul.f32 %v3627, %v3613
        %v3632 = vmul.f32 %v3628, %v3615
        %v3633 = vadd.f32 %v3607, %v3629
        %v3634 = vadd.f32 %v3609, %v3630
        %v3635 = vadd.f32 %v3613, %v3631
        %v3636 = vadd.f32 %v3615, %v3632
        %v3637 = vmul.f32 %v3633, 0.7978846
        %v3638 = vmul.f32 %v3634, 0.7978846
        %v3639 = vmul.f32 %v3635, 0.7978846
        %v3640 = vmul.f32 %v3636, 0.7978846
        %v3641 = vtanh.pop %v3637
        %v3642 = vtanh.pop %v3638
        %v3643 = vtanh.pop %v3639
        %v3644 = vtanh.pop %v3640
        %v3645 = vadd.f32 %v3641, 1.0
        %v3646 = vadd.f32 %v3642, 1.0
        %v3647 = vadd.f32 %v3643, 1.0
        %v3648 = vadd.f32 %v3644, 1.0
        %v3649 = vmul.f32 %v3617, %v3645
        %v3650 = vmul.f32 %v3618, %v3646
        %v3651 = vmul.f32 %v3619, %v3647
        %v3652 = vmul.f32 %v3620, %v3648
        %s3653 = scalar_lea.vmem [#allocation14], 256
        %v3654 = vld [vmem:[%s3653] sm:$0xff]
        %v3655 = vld [vmem:[%s3653 + $0x8] sm:$0xff]
        %v3656 = vld [vmem:[%s3653 + $0x10] sm:$0xff]
        %v3657 = vld [vmem:[%s3653 + $0x18] sm:$0xff]
        %v3658 = vld [vmem:[%s3653 + $0x20] sm:$0xff]
        %v3659 = vld [vmem:[%s3653 + $0x28] sm:$0xff]
        %v3660 = vld [vmem:[%s3653 + $0x30] sm:$0xff]
        %v3661 = vld [vmem:[%s3653 + $0x38] sm:$0xff]
        %v3662 = vld [vmem:[%s3653 + $0x40] sm:$0xff]
        %v3663 = vld [vmem:[%s3653 + $0x48] sm:$0xff]
        %v3664 = vld [vmem:[%s3653 + $0x50] sm:$0xff]
        %v3665 = vld [vmem:[%s3653 + $0x58] sm:$0xff]
        %v3666 = vld [vmem:[%s3653 + $0x60] sm:$0xff]
        %v3667 = vld [vmem:[%s3653 + $0x68] sm:$0xff]
        %v3668 = vld [vmem:[%s3653 + $0x70] sm:$0xff]
        %v3669 = vld [vmem:[%s3653 + $0x78] sm:$0xff]
        %v3670 = vld [vmem:[%s3653 + $0x80] sm:$0xff]
        %v3671 = vld [vmem:[%s3653 + $0x88] sm:$0xff]
        %v3672 = vld [vmem:[%s3653 + $0x90] sm:$0xff]
        %v3673 = vld [vmem:[%s3653 + $0x98] sm:$0xff]
        %v3674 = vld [vmem:[%s3653 + $0xa0] sm:$0xff]
        %v3675 = vld [vmem:[%s3653 + $0xa8] sm:$0xff]
        %v3676 = vld [vmem:[%s3653 + $0xb0] sm:$0xff]
        %v3677 = vld [vmem:[%s3653 + $0xb8] sm:$0xff]
        %v3678 = vld [vmem:[%s3653 + $0xc0] sm:$0xff]
        %v3679 = vld [vmem:[%s3653 + $0xc8] sm:$0xff]
        %v3680 = vld [vmem:[%s3653 + $0xd0] sm:$0xff]
        %v3681 = vld [vmem:[%s3653 + $0xd8] sm:$0xff]
        %v3682 = vld [vmem:[%s3653 + $0xe0] sm:$0xff]
        %v3683 = vld [vmem:[%s3653 + $0xe8] sm:$0xff]
        %v3684 = vld [vmem:[%s3653 + $0xf0] sm:$0xff]
        %v3685 = vld [vmem:[%s3653 + $0xf8] sm:$0xff]
        %s3686 = scalar_lea.vmem %s13, 1
        %v3687 = vld [vmem:[%s3686] sm:$0x1]
        %v3689 = vlaneseq
        %v3690 = vshrl.u32 %v3689, 7
        %v3691 = vsub.s32 0, %v3690
        %v3692 = vrot.slane %v3687, %v3691
        %3694 = vmatprep.subr.mxu0 0.0
        %3695 = vmatpush1.msra.mxu0 %v3669
        %3696 = vmatprep.subr.mxu0 0.0
        %3697 = vmatpush1.msra.mxu0 %v3668
        %3698 = vmatprep.subr.mxu0 0.0
        %3699 = vmatpush1.msra.mxu0 %v3667
        %3700 = vmatprep.subr.mxu0 0.0
        %3701 = vmatpush1.msra.mxu0 %v3666
        %3702 = vmatprep.subr.mxu0 0.0
        %3703 = vmatpush1.msra.mxu0 %v3665
        %3704 = vmatprep.subr.mxu0 0.0
        %3705 = vmatpush1.msra.mxu0 %v3664
        %3706 = vmatprep.subr.mxu0 0.0
        %3707 = vmatpush1.msra.mxu0 %v3663
        %3708 = vmatprep.subr.mxu0 0.0
        %3709 = vmatpush1.msra.mxu0 %v3662
        %3710 = vmatprep.subr.mxu0 0.0
        %3711 = vmatpush1.msra.mxu0 %v3661
        %3712 = vmatprep.subr.mxu0 0.0
        %3713 = vmatpush1.msra.mxu0 %v3660
        %3714 = vmatprep.subr.mxu0 0.0
        %3715 = vmatpush1.msra.mxu0 %v3659
        %3716 = vmatprep.subr.mxu0 0.0
        %3717 = vmatpush1.msra.mxu0 %v3658
        %3718 = vmatprep.subr.mxu0 0.0
        %3719 = vmatpush1.msra.mxu0 %v3657
        %3720 = vmatprep.subr.mxu0 0.0
        %3721 = vmatpush1.msra.mxu0 %v3656
        %3722 = vmatprep.subr.mxu0 0.0
        %3723 = vmatpush1.msra.mxu0 %v3655
        %3724 = vmatprep.subr.mxu0 0.0
        %3725 = vmatpush1.msra.mxu0 %v3654
        %3726 = vmatprep.subr.mxu0 0.0
        %3727 = vmatpush2.msra.mxu0 %v3685
        %3728 = vmatprep.subr.mxu0 0.0
        %3729 = vmatpush2.msra.mxu0 %v3684
        %3730 = vmatprep.subr.mxu0 0.0
        %3731 = vmatpush2.msra.mxu0 %v3683
        %3732 = vmatprep.subr.mxu0 0.0
        %3733 = vmatpush2.msra.mxu0 %v3682
        %3734 = vmatprep.subr.mxu0 0.0
        %3735 = vmatpush2.msra.mxu0 %v3681
        %3736 = vmatprep.subr.mxu0 0.0
        %3737 = vmatpush2.msra.mxu0 %v3680
        %3738 = vmatprep.subr.mxu0 0.0
        %3739 = vmatpush2.msra.mxu0 %v3679
        %3740 = vmatprep.subr.mxu0 0.0
        %3741 = vmatpush2.msra.mxu0 %v3678
        %3742 = vmatprep.subr.mxu0 0.0
        %3743 = vmatpush2.msra.mxu0 %v3677
        %3744 = vmatprep.subr.mxu0 0.0
        %3745 = vmatpush2.msra.mxu0 %v3676
        %3746 = vmatprep.subr.mxu0 0.0
        %3747 = vmatpush2.msra.mxu0 %v3675
        %3748 = vmatprep.subr.mxu0 0.0
        %3749 = vmatpush2.msra.mxu0 %v3674
        %3750 = vmatprep.subr.mxu0 0.0
        %3751 = vmatpush2.msra.mxu0 %v3673
        %3752 = vmatprep.subr.mxu0 0.0
        %3753 = vmatpush2.msra.mxu0 %v3672
        %3754 = vmatprep.subr.mxu0 0.0
        %3755 = vmatpush2.msra.mxu0 %v3671
        %3756 = vmatprep.subr.mxu0 0.0
        %3757 = vmatpush2.msra.mxu0 %v3670
        %3758 = vmatprep.mubr.f32.mxu0 %v3650
        %3759 = vmatmul.mubr.f32.gmra.mxu0 %v3649
        %v3760 = vpop.f32.mrf.mxu0
        %v3761 = vadd.f32 %v3692, %v3760
        %v3762 = vpop.f32.mrf.mxu0
        %3763 = vmatprep.mubr.f32.mxu0 %v3652
        %3764 = vmatmul.mubr.f32.gmra.mxu0 %v3651
        %v3765 = vpop.f32.mrf.mxu0
        %v3766 = vadd.f32 %v3692, %v3765
        %v3767 = vpop.f32.mrf.mxu0
        %3768 = vdwg.mxu0
        %v3769 = vadd.f32 %v3761, %v3492
        %v3770 = vadd.f32 %v3766, %v3493
        %s3771 = scalar_lea.vmem %s14, 1
        %v3772 = vld [vmem:[%s3771] sm:$0x1]
        %s3773 = scalar_lea.vmem %s15, 1
        %v3774 = vld [vmem:[%s3773] sm:$0x1]
        %3775 = vadd.xlane.f32.xlu0 %v3769
        %v3776 = vpop.xlane.xlu0 %3775
        %3777 = vadd.xlane.f32.xlu0 %v3770
        %v3778 = vpop.xlane.xlu0 %3777
        %v3779 = vmul.f32 %v3776, %v772
        %v3780 = vmul.f32 %v3778, %v772
        %v3781 = vsub.f32 %v3769, %v3779
        %v3782 = vsub.f32 %v3770, %v3780
        %v3783 = vmul.f32 %v3781, %v3781
        %v3784 = vmul.f32 %v3782, %v3782
        %3785 = vadd.xlane.f32.xlu0 %v3783
        %v3786 = vpop.xlane.xlu0 %3785
        %3787 = vadd.xlane.f32.xlu0 %v3784
        %v3788 = vpop.xlane.xlu0 %3787
        %v3789 = vmul.f32 %v3786, %v772
        %v3790 = vmul.f32 %v3788, %v772
        %v3791 = vadd.f32 %v3789, 1e-12
        %v3792 = vadd.f32 %v3790, 1e-12
        %v3793 = vrsqrt.pop %v3791
        %v3794 = vrsqrt.pop %v3792
        %v3795 = vmul.f32 %v3781, %v3793
        %v3796 = vmul.f32 %v3782, %v3794
        %v3798 = vlaneseq
        %v3799 = vshrl.u32 %v3798, 7
        %v3800 = vsub.s32 0, %v3799
        %v3801 = vrot.slane %v3772, %v3800
        %v3803 = vmul.f32 %v3801, %v3795
        %v3804 = vmul.f32 %v3801, %v3796
        %v3806 = vlaneseq
        %v3807 = vshrl.u32 %v3806, 7
        %v3808 = vsub.s32 0, %v3807
        %v3809 = vrot.slane %v3774, %v3808
        %v3811 = vadd.f32 %v3803, %v3809
        %v3812 = vadd.f32 %v3804, %v3809
        %3813 = vst [vmem:[%s755] sm:$0xff] %v3811
        %3814 = vst [vmem:[%s755 + $0x8] sm:$0xff] %v3812
        %v3815 = vld [vmem:[#allocation16] sm:$0xff]
        %v3816 = vld [vmem:[#allocation16 + $0x8] sm:$0xff]
        %v3817 = vld [vmem:[#allocation16 + $0x10] sm:$0xff]
        %v3818 = vld [vmem:[#allocation16 + $0x18] sm:$0xff]
        %v3819 = vld [vmem:[#allocation16 + $0x20] sm:$0xff]
        %v3820 = vld [vmem:[#allocation16 + $0x28] sm:$0xff]
        %v3821 = vld [vmem:[#allocation16 + $0x30] sm:$0xff]
        %v3822 = vld [vmem:[#allocation16 + $0x38] sm:$0xff]
        %v3823 = vld [vmem:[#allocation16 + $0x40] sm:$0xff]
        %v3824 = vld [vmem:[#allocation16 + $0x48] sm:$0xff]
        %v3825 = vld [vmem:[#allocation16 + $0x50] sm:$0xff]
        %v3826 = vld [vmem:[#allocation16 + $0x58] sm:$0xff]
        %v3827 = vld [vmem:[#allocation16 + $0x60] sm:$0xff]
        %v3828 = vld [vmem:[#allocation16 + $0x68] sm:$0xff]
        %v3829 = vld [vmem:[#allocation16 + $0x70] sm:$0xff]
        %v3830 = vld [vmem:[#allocation16 + $0x78] sm:$0xff]
        %v3831 = vld [vmem:[%s17] sm:$0x1]
        %v3833 = vlaneseq
        %v3834 = vshrl.u32 %v3833, 7
        %v3835 = vsub.s32 0, %v3834
        %v3836 = vrot.slane %v3831, %v3835
        %3838 = vmatprep.subr.mxu0 0.0
        %3839 = vmatpush1.msra.mxu0 %v3830
        %3840 = vmatprep.subr.mxu0 0.0
        %3841 = vmatpush1.msra.mxu0 %v3829
        %3842 = vmatprep.subr.mxu0 0.0
        %3843 = vmatpush1.msra.mxu0 %v3828
        %3844 = vmatprep.subr.mxu0 0.0
        %3845 = vmatpush1.msra.mxu0 %v3827
        %3846 = vmatprep.subr.mxu0 0.0
        %3847 = vmatpush1.msra.mxu0 %v3826
        %3848 = vmatprep.subr.mxu0 0.0
        %3849 = vmatpush1.msra.mxu0 %v3825
        %3850 = vmatprep.subr.mxu0 0.0
        %3851 = vmatpush1.msra.mxu0 %v3824
        %3852 = vmatprep.subr.mxu0 0.0
        %3853 = vmatpush1.msra.mxu0 %v3823
        %3854 = vmatprep.subr.mxu0 0.0
        %3855 = vmatpush1.msra.mxu0 %v3822
        %3856 = vmatprep.subr.mxu0 0.0
        %3857 = vmatpush1.msra.mxu0 %v3821
        %3858 = vmatprep.subr.mxu0 0.0
        %3859 = vmatpush1.msra.mxu0 %v3820
        %3860 = vmatprep.subr.mxu0 0.0
        %3861 = vmatpush1.msra.mxu0 %v3819
        %3862 = vmatprep.subr.mxu0 0.0
        %3863 = vmatpush1.msra.mxu0 %v3818
        %3864 = vmatprep.subr.mxu0 0.0
        %3865 = vmatpush1.msra.mxu0 %v3817
        %3866 = vmatprep.subr.mxu0 0.0
        %3867 = vmatpush1.msra.mxu0 %v3816
        %3868 = vmatprep.subr.mxu0 0.0
        %3869 = vmatpush1.msra.mxu0 %v3815
        %3870 = vmatprep.subr.mxu0 0.0
        %3871 = vmatpush2.msra.mxu0 0.0
        %3872 = vmatprep.subr.mxu0 0.0
        %3873 = vmatpush2.msra.mxu0 0.0
        %3874 = vmatprep.subr.mxu0 0.0
        %3875 = vmatpush2.msra.mxu0 0.0
        %3876 = vmatprep.subr.mxu0 0.0
        %3877 = vmatpush2.msra.mxu0 0.0
        %3878 = vmatprep.subr.mxu0 0.0
        %3879 = vmatpush2.msra.mxu0 0.0
        %3880 = vmatprep.subr.mxu0 0.0
        %3881 = vmatpush2.msra.mxu0 0.0
        %3882 = vmatprep.subr.mxu0 0.0
        %3883 = vmatpush2.msra.mxu0 0.0
        %3884 = vmatprep.subr.mxu0 0.0
        %3885 = vmatpush2.msra.mxu0 0.0
        %3886 = vmatprep.subr.mxu0 0.0
        %3887 = vmatpush2.msra.mxu0 0.0
        %3888 = vmatprep.subr.mxu0 0.0
        %3889 = vmatpush2.msra.mxu0 0.0
        %3890 = vmatprep.subr.mxu0 0.0
        %3891 = vmatpush2.msra.mxu0 0.0
        %3892 = vmatprep.subr.mxu0 0.0
        %3893 = vmatpush2.msra.mxu0 0.0
        %3894 = vmatprep.subr.mxu0 0.0
        %3895 = vmatpush2.msra.mxu0 0.0
        %3896 = vmatprep.subr.mxu0 0.0
        %3897 = vmatpush2.msra.mxu0 0.0
        %3898 = vmatprep.subr.mxu0 0.0
        %3899 = vmatpush2.msra.mxu0 0.0
        %3900 = vmatprep.subr.mxu0 0.0
        %3901 = vmatpush2.msra.mxu0 0.0
        %3902 = vmatprep.mubr.f32.mxu0 0.0
        %3903 = vmatmul.mubr.f32.gmra.mxu0 %v3811
        %v3904 = vpop.f32.mrf.mxu0
        %v3905 = vadd.f32 %v3836, %v3904
        %v3906 = vpop.f32.mrf.mxu0
        %3907 = vmatprep.mubr.f32.mxu0 0.0
        %3908 = vmatmul.mubr.f32.gmra.mxu0 %v3812
        %v3909 = vpop.f32.mrf.mxu0
        %v3910 = vadd.f32 %v3836, %v3909
        %v3911 = vpop.f32.mrf.mxu0
        %3912 = vdwg.mxu0
        %3913 = vst [vmem:[%s762] sm:$0xff] %v3905
        %3914 = vst [vmem:[%s762 + $0x8] sm:$0xff] %v3910
        %s3915 = sand.u32 %s442, 1
        %s3916 = scalar_lea.sflag [#allocation4], %s3915
        %s3917 = sand.u32 %s442, 1
        %s3918 = smul.addr %s3917, 16
        %s3919 = scalar_lea.vmem [#allocation17], %s3918
        %s3920 = sand.u32 %s468, 1
        %s3921 = scalar_lea.sflag [#allocation19], %s3920
        %s3922 = sand.u32 %s468, 1
        %s3923 = smul.addr %s3922, 16
        %s3924 = scalar_lea.vmem [#allocation18], %s3923
        // Predicated region
        $region129: #{tpu_custom_call.1} parent=91 // pred_check
          %p3925 = pneg %p452
        $region130: #{tpu_custom_call.1} parent=91 // pred_check_branch
          %3927 = sbr.rel (%p3925) target = $region132
        $region131: #{tpu_custom_call.1} parent=91 // pred_region
          %s3929 = ssub.s32 256, 256
          %3930 = vsyncadd %s3916, %s3929
          %s3931 = smul.addr %s46, 2
          %s3932 = smul.addr %s3931, 128
          %s3933 = scalar_lea.hbm %s18, %s3932
          %s3934 = sshll.u32 %s3919, 4
          %s3935 = int_to_ptr.vmem [resolvable:$true] %s3934
          %3940 = dma.vmem_to_hbm [thread:$0]  %s3935, 256, %s3933, %s3916, 128, 128, 8
        $region132: #{tpu_custom_call.1} parent=91 // pred_fallthru
          _
        // Predicated region
        $region133: #{tpu_custom_call.1} parent=91 // pred_check
          %p3941 = pneg %p478
        $region134: #{tpu_custom_call.1} parent=91 // pred_check_branch
          %3943 = sbr.rel (%p3941) target = $region136
        $region135: #{tpu_custom_call.1} parent=91 // pred_region
          %s3945 = ssub.s32 256, 256
          %3946 = vsyncadd %s3921, %s3945
          %s3947 = smul.addr %s46, 2
          %s3948 = smul.addr %s3947, 128
          %s3949 = scalar_lea.hbm %s19, %s3948
          %s3950 = sshll.u32 %s3924, 4
          %s3951 = int_to_ptr.vmem [resolvable:$true] %s3950
          %3956 = dma.vmem_to_hbm [thread:$0]  %s3951, 256, %s3949, %s3921, 128, 128, 8
        $region136: #{tpu_custom_call.1} parent=91 // pred_fallthru
          _
      $region92: #{tpu_custom_call.1} parent=5 // pred_fallthru
        _
      %p3957 = scmp.le.s32.totalorder 2, %s41
      // Predicated region
      $region137: #{tpu_custom_call.1} parent=5 // pred_check
        %p3958 = pneg %p3957
      $region138: #{tpu_custom_call.1} parent=5 // pred_check_branch
        %3960 = sbr.rel (%p3958) target = $region140
      $region139: #{tpu_custom_call.1} parent=5 // pred_region
        %s3961 = ssub.s32 %s41, 2
        // Predicated region
        $region141: #{tpu_custom_call.1} parent=139 // pred_check
          %p3962 = pneg %p458
        $region142: #{tpu_custom_call.1} parent=139 // pred_check_branch
          %3964 = sbr.rel (%p3962) target = $region144
        $region143: #{tpu_custom_call.1} parent=139 // pred_region
          %s3965 = sand.u32 %s443, 1
          %s3966 = scalar_lea.sflag [#allocation4], %s3965
          %s3967 = sand.u32 %s443, 1
          %s3968 = smul.addr %s3967, 16
          %s3969 = scalar_lea.vmem [#allocation17], %s3968
          %3970 = dma.done %s3966, 256
        $region144: #{tpu_custom_call.1} parent=139 // pred_fallthru
          _
        // Predicated region
        $region145: #{tpu_custom_call.1} parent=139 // pred_check
          %p3971 = pneg %p484
        $region146: #{tpu_custom_call.1} parent=139 // pred_check_branch
          %3973 = sbr.rel (%p3971) target = $region148
        $region147: #{tpu_custom_call.1} parent=139 // pred_region
          %s3974 = sand.u32 %s469, 1
          %s3975 = scalar_lea.sflag [#allocation19], %s3974
          %s3976 = sand.u32 %s469, 1
          %s3977 = smul.addr %s3976, 16
          %s3978 = scalar_lea.vmem [#allocation18], %s3977
          %3979 = dma.done %s3975, 256
        $region148: #{tpu_custom_call.1} parent=139 // pred_fallthru
          _
      $region140: #{tpu_custom_call.1} parent=5 // pred_fallthru
        _
    $region6: #{tpu_custom_call.1} parent=1 // loop_footer
      %s45 = sadd.s32 1, %s41
    $region7: #{tpu_custom_call.1} parent=1 // loop_footer_branch
      %40 = sbr.rel target = $region3
    $region8: #{tpu_custom_call.1} parent=1 // loop_exit
      _
    %3980 = vsyncpa [#allocation3], 1
    %s3981 = scalar_lea.sflag [#allocation3], 1
    %3982 = vsyncpa %s3981, 1
    %3983 = vsyncpa [#allocation6], 1
    %s3984 = scalar_lea.sflag [#allocation6], 1
    %3985 = vsyncpa %s3984, 1
    %3986 = vsyncpa [#allocation9], 1
    %3987 = vsyncpa [#allocation12], 1
    %3988 = vsyncpa [#allocation15], 1
    %3989 = vsyncpa [#allocation4], 1
    %s3990 = scalar_lea.sflag [#allocation4], 1
    %3991 = vsyncpa %s3990, 1
    %3992 = vsyncpa [#allocation19], 1
    %s3993 = scalar_lea.sflag [#allocation19], 1
    %3994 = vsyncpa %s3993, 1

</llo_original>
